<compile_context>
chip_gen: v7x
topology: tpu7x:2x2x1
jax: 0.10.0
libtpu: 0.0.40
codegen_flags: <defaults>
</compile_context>

<pallas_src>
import jax
import jax.numpy as jnp
from jax.experimental import pallas as pl
from jax.experimental.pallas import tpu as pltpu

NUM_CLASSES = 55
NUM_FEATURES = 1024   # densenet121.classifier.in_features
HIDDEN = 512
OUT_PAD = 128         # classes padded to one full lane group


def _round_up(x, m):
    return ((x + m - 1) // m) * m


def _vmem_budgets():
    """(feat-tile budget bytes, vmem_limit_bytes), generation-aware."""
    try:
        cap = int(pltpu.get_tpu_info().vmem_capacity_bytes)
    except Exception:
        cap = 128 << 20          # v5e / v6e physical VMEM
    if cap <= (64 << 20):        # v7x: 64 MiB per TensorCore
        return 10 << 20, 48 << 20
    return 14 << 20, 96 << 20    # v5e / v6e


def _pick_batch_tile(B, per_image_bytes, budget_bytes):
    """Batch tile: largest sublane-aligned tile under the VMEM budget; never a
    degenerate full-batch block when B exceeds the budget."""
    tb_max = max(1, budget_bytes // per_image_bytes)
    if B >= 16:
        # Guarantee >= 2 grid steps so the "parallel" batch axis can shard across
        # v7x's two TensorCores and the DMA pipeline has something to overlap.
        tb_max = min(tb_max, B // 2)
    if B <= tb_max:
        return B
    if tb_max >= 8:
        aligned = (tb_max // 8) * 8
        # Prefer a sublane-aligned divisor of B (no overhanging last block).
        for tb in range(aligned, 0, -8):
            if B % tb == 0:
                return tb
        # Otherwise take the largest aligned tile; grid = cdiv(B, TB) masks the tail.
        return aligned
    return tb_max


def _make_head_kernel(spatial_axis, inv_hw, matmul_in_bf16):
    def kernel(feat_ref, w1_ref, b1_ref, w2_ref, b2_ref, out_ref):
        # ReLU in the input dtype (bf16 VALU on v6e/v7x); accumulate the spatial sum in
        # f32 -- avoids materializing a whole-tile f32 copy of the streamed block.
        relu = jnp.maximum(feat_ref[...], 0.0)
        pooled = jnp.sum(relu, axis=spatial_axis, dtype=jnp.float32) * inv_hw   # [TB, C]

        # Linear(1024 -> 512) + ReLU  (optionally fed to the MXU in bf16)
        lhs = pooled.astype(jnp.bfloat16) if matmul_in_bf16 else pooled
        h = jnp.dot(lhs, w1_ref[...], preferred_element_type=jnp.float32) + b1_ref[...]
        h = jnp.maximum(h, 0.0)

        # Dropout(0.5): identity in eval/inference mode.

        # Linear(512 -> 55), padded to 128 columns (padded biases = -1e30 -> prob ~ 0)
        logits = jnp.dot(h, w2_ref[...], preferred_element_type=jnp.float32) + b2_ref[...]

        # Softmax(dim=1); reciprocal on the EUP slot.
        m = jnp.max(logits, axis=-1, keepdims=True)
        e = jnp.exp(logits - m)
        denom = jnp.sum(e, axis=-1, keepdims=True)
        out_ref[...] = (e * pl.reciprocal(denom, approx=True)).astype(out_ref.dtype)

    return kernel


def classifier_forward(feat_map, w1, b1, w2, b2, *, data_format="NCHW",
                       matmul_in_bf16=False):
    """feat_map: DenseNet121 backbone output, [B, C, H, W] (NCHW) or [B, H, W, C] (NHWC),
    f32 or bf16. Returns [B, NUM_CLASSES] softmax probabilities (f32)."""
    if data_format == "NCHW":
        B, C, H, W = feat_map.shape
        HW = H * W
        feat = feat_map.reshape(B, C, HW)       # free reshape, no extra HBM pass
        spatial_axis = 2
        # TODO(synk): NCHW puts HW (<128) on lanes -> under-occupied (8,128) tiles and
        #             short per-(b,c) DMA rows; prefer NHWC from the backbone when possible.
        per_image = C * _round_up(HW, 128) * jnp.dtype(feat.dtype).itemsize
        feat_block = None  # set below
    elif data_format == "NHWC":
        B, H, W, C = feat_map.shape
        HW = H * W
        feat = feat_map.reshape(B, HW, C)       # C lane-dense, HW on sublanes
        spatial_axis = 1
        per_image = _round_up(HW, 8) * C * jnp.dtype(feat.dtype).itemsize
    else:
        raise ValueError(f"unknown data_format {data_format!r}")
    assert C == w1.shape[0] == NUM_FEATURES

    tile_budget, vmem_limit = _vmem_budgets()
    TB = _pick_batch_tile(B, per_image, tile_budget)
    grid = (pl.cdiv(B, TB),)
    feat_block = (TB, C, HW) if data_format == "NCHW" else (TB, HW, C)

    # Resident classifier weights (lane-dense padded 55 -> 128 output columns).
    w_dtype = jnp.bfloat16 if matmul_in_bf16 else jnp.float32
    w1_k = w1.astype(w_dtype)
    b1_k = b1.reshape(1, HIDDEN).astype(jnp.float32)
    w2_p = jnp.zeros((HIDDEN, OUT_PAD), jnp.float32).at[:, :NUM_CLASSES].set(
        w2.astype(jnp.float32))
    b2_p = jnp.full((1, OUT_PAD), -1e30, jnp.float32).at[0, :NUM_CLASSES].set(
        b2.astype(jnp.float32))

    itemsize = jnp.dtype(feat.dtype).itemsize
    cost = pl.CostEstimate(
        flops=int(2 * B * C * HW + 2 * B * C * HIDDEN + 2 * B * HIDDEN * OUT_PAD),
        transcendentals=int(B * OUT_PAD),
        bytes_accessed=int(feat.size * itemsize
                           + w1_k.size * jnp.dtype(w_dtype).itemsize
                           + (b1_k.size + w2_p.size + b2_p.size + B * OUT_PAD) * 4),
    )

    kernel = _make_head_kernel(spatial_axis, 1.0 / HW, matmul_in_bf16)

    out = pl.pallas_call(
        kernel,
        out_shape=jax.ShapeDtypeStruct((B, OUT_PAD), jnp.float32),
        grid_spec=pltpu.PrefetchScalarGridSpec(
            num_scalar_prefetch=0,
            grid=grid,
            in_specs=[
                # Streamed, double-buffered feature tiles.
                pl.BlockSpec(feat_block, lambda i: (i, 0, 0)),
                # Weights/biases: constant index_map -> fetched once; single-buffered so
                # their VMEM isn't doubled (frees headroom for bigger feat tiles).
                pl.BlockSpec((C, HIDDEN), lambda i: (0, 0), pipeline_mode=pl.Buffered(1)),
                pl.BlockSpec((1, HIDDEN), lambda i: (0, 0), pipeline_mode=pl.Buffered(1)),
                pl.BlockSpec((HIDDEN, OUT_PAD), lambda i: (0, 0), pipeline_mode=pl.Buffered(1)),
                pl.BlockSpec((1, OUT_PAD), lambda i: (0, 0), pipeline_mode=pl.Buffered(1)),
            ],
            out_specs=pl.BlockSpec((TB, OUT_PAD), lambda i: (i, 0)),
        ),
        compiler_params=pltpu.CompilerParams(
            dimension_semantics=("parallel",),       # batch tiles independent (v7x: 2 TCs)
            vmem_limit_bytes=vmem_limit,
        ),
        cost_estimate=cost,
    )(feat, w1_k, b1_k, w2_p, b2_p)

    return out[:, :NUM_CLASSES]


def _reference(feat_nchw, w1, b1, w2, b2):
    f = jnp.maximum(feat_nchw.astype(jnp.float32), 0.0)
    pooled = jnp.mean(f, axis=(2, 3))
    h = jnp.maximum(pooled @ w1 + b1, 0.0)
    logits = h @ w2 + b2
    return jax.nn.softmax(logits, axis=-1)


def _init_params(key):
    k1, k2, k3, k4 = jax.random.split(key, 4)
    # Deterministic synthetic init (Kaiming-ish uniform, like nn.Linear defaults)
    lim1 = 1.0 / jnp.sqrt(NUM_FEATURES)
    lim2 = 1.0 / jnp.sqrt(HIDDEN)
    w1 = jax.random.uniform(k1, (NUM_FEATURES, HIDDEN), jnp.float32, -lim1, lim1)
    b1 = jax.random.uniform(k2, (HIDDEN,), jnp.float32, -lim1, lim1)
    w2 = jax.random.uniform(k3, (HIDDEN, NUM_CLASSES), jnp.float32, -lim2, lim2)
    b2 = jax.random.uniform(k4, (NUM_CLASSES,), jnp.float32, -lim2, lim2)
    return w1, b1, w2, b2


if __name__ == "__main__":
    key = jax.random.PRNGKey(0)
    kx, kp = jax.random.split(key)

    # Small deterministic example input: DenseNet121 feature map [B, 1024, 4, 4]
    B, H, W = 2, 4, 4
    x = jax.random.normal(kx, (B, NUM_FEATURES, H, W), jnp.float32)
    w1, b1, w2, b2 = _init_params(kp)

    # 1) NCHW f32 path (backbone emits NCHW feature maps).
    out = jax.block_until_ready(classifier_forward(x, w1, b1, w2, b2))
    ref = _reference(x, w1, b1, w2, b2)
    assert out.shape == (B, NUM_CLASSES)
    assert bool(jnp.all(jnp.isfinite(out)))
    assert bool(jnp.allclose(jnp.sum(out, axis=-1), 1.0, atol=1e-2))
    assert bool(jnp.allclose(out, ref, atol=1e-2, rtol=1e-2))

    # 2) Preferred bf16 NHWC path (halves feat HBM traffic, lane-dense channels).
    x_nhwc = jnp.transpose(x, (0, 2, 3, 1)).astype(jnp.bfloat16)
    out_bf16 = jax.block_until_ready(
        classifier_forward(x_nhwc, w1, b1, w2, b2,
                           data_format="NHWC", matmul_in_bf16=True))
    ref_bf16 = _reference(jnp.transpose(x_nhwc.astype(jnp.float32), (0, 3, 1, 2)),
                          w1, b1, w2, b2)
    assert out_bf16.shape == (B, NUM_CLASSES)
    assert bool(jnp.all(jnp.isfinite(out_bf16)))
    assert bool(jnp.allclose(jnp.sum(out_bf16, axis=-1), 1.0, atol=1e-2))
    assert bool(jnp.allclose(out_bf16, ref_bf16, atol=3e-2))

    print("KERNEL_OK")
</pallas_src>

<mosaic_0001>
module attributes {stable_mosaic.version = 11 : i64} {
  func.func @kernel(%arg0: i32, %arg1: memref<2x1024x16xf32, #tpu.memory_space<vmem>>, %arg2: memref<1024x512xf32, #tpu.memory_space<vmem>>, %arg3: memref<1x512xf32, #tpu.memory_space<vmem>>, %arg4: memref<512x128xf32, #tpu.memory_space<vmem>>, %arg5: memref<1x128xf32, #tpu.memory_space<vmem>>, %arg6: memref<2x128xf32, #tpu.memory_space<vmem>>) attributes {dimension_semantics = [#tpu.dimension_semantics<parallel>], iteration_bounds = array<i64: 1>, scalar_prefetch = 0 : i64, scratch_operands = 0 : i64, tpu.core_type = #tpu.core_type<tc>, window_params = [{transform_indices = @transform_0, window_bounds = array<i64: 2, 1024, 16>}, {pipeline_mode = #tpu.pipeline_mode<synchronous>, transform_indices = @transform_1, window_bounds = array<i64: 1024, 512>}, {pipeline_mode = #tpu.pipeline_mode<synchronous>, transform_indices = @transform_2, window_bounds = array<i64: 1, 512>}, {pipeline_mode = #tpu.pipeline_mode<synchronous>, transform_indices = @transform_3, window_bounds = array<i64: 512, 128>}, {pipeline_mode = #tpu.pipeline_mode<synchronous>, transform_indices = @transform_4, window_bounds = array<i64: 1, 128>}, {transform_indices = @transform_5, window_bounds = array<i64: 2, 128>}]} {
    %c0 = arith.constant 0 : index
    %c0_0 = arith.constant 0 : index
    %c0_1 = arith.constant 0 : index
    %0 = vector.load %arg1[%c0, %c0_0, %c0_1] : memref<2x1024x16xf32, #tpu.memory_space<vmem>>, vector<2x1024x16xf32>
    %cst = arith.constant 0.000000e+00 : f32
    %1 = vector.broadcast %cst : f32 to vector<2x1024x16xf32>
    %2 = arith.maximumf %0, %1 : vector<2x1024x16xf32>
    %cst_2 = arith.constant dense<0.000000e+00> : vector<2x1024xf32>
    %3 = vector.multi_reduction <add>, %2, %cst_2 [2] : vector<2x1024x16xf32> to vector<2x1024xf32>
    %cst_3 = arith.constant 6.250000e-02 : f32
    %4 = vector.broadcast %cst_3 : f32 to vector<2x1024xf32>
    %5 = arith.mulf %3, %4 : vector<2x1024xf32>
    %c0_4 = arith.constant 0 : index
    %c0_5 = arith.constant 0 : index
    %6 = vector.load %arg2[%c0_4, %c0_5] : memref<1024x512xf32, #tpu.memory_space<vmem>>, vector<1024x512xf32>
    %cst_6 = arith.constant dense<0.000000e+00> : vector<2x512xf32>
    %7 = tpu.matmul %5, %6, %cst_6 {dimension_numbers = #tpu.dot_dimension_numbers<[1], [0], [0], [1], [0, 0, 1, 1], [], []>} : vector<2x1024xf32>, vector<1024x512xf32>, vector<2x512xf32> -> vector<2x512xf32>
    %c0_7 = arith.constant 0 : index
    %c0_8 = arith.constant 0 : index
    %8 = vector.load %arg3[%c0_7, %c0_8] : memref<1x512xf32, #tpu.memory_space<vmem>>, vector<1x512xf32>
    %9 = vector.broadcast %8 : vector<1x512xf32> to vector<2x512xf32>
    %10 = arith.addf %7, %9 : vector<2x512xf32>
    %cst_9 = arith.constant 0.000000e+00 : f32
    %11 = vector.broadcast %cst_9 : f32 to vector<2x512xf32>
    %12 = arith.maximumf %10, %11 : vector<2x512xf32>
    %c0_10 = arith.constant 0 : index
    %c0_11 = arith.constant 0 : index
    %13 = vector.load %arg4[%c0_10, %c0_11] : memref<512x128xf32, #tpu.memory_space<vmem>>, vector<512x128xf32>
    %cst_12 = arith.constant dense<0.000000e+00> : vector<2x128xf32>
    %14 = tpu.matmul %12, %13, %cst_12 {dimension_numbers = #tpu.dot_dimension_numbers<[1], [0], [0], [1], [0, 0, 1, 1], [], []>} : vector<2x512xf32>, vector<512x128xf32>, vector<2x128xf32> -> vector<2x128xf32>
    %c0_13 = arith.constant 0 : index
    %c0_14 = arith.constant 0 : index
    %15 = vector.load %arg5[%c0_13, %c0_14] : memref<1x128xf32, #tpu.memory_space<vmem>>, vector<1x128xf32>
    %16 = vector.broadcast %15 : vector<1x128xf32> to vector<2x128xf32>
    %17 = arith.addf %14, %16 : vector<2x128xf32>
    %cst_15 = arith.constant dense<0xFF800000> : vector<2xf32>
    %18 = vector.multi_reduction <maximumf>, %17, %cst_15 [1] : vector<2x128xf32> to vector<2xf32>
    %19 = vector.shape_cast %18 : vector<2xf32> to vector<2x1xf32>
    %20 = vector.broadcast %19 : vector<2x1xf32> to vector<2x128xf32>
    %21 = arith.subf %17, %20 : vector<2x128xf32>
    %22 = math.exp %21 : vector<2x128xf32>
    %cst_16 = arith.constant dense<0.000000e+00> : vector<2xf32>
    %23 = vector.multi_reduction <add>, %22, %cst_16 [1] : vector<2x128xf32> to vector<2xf32>
    %24 = vector.shape_cast %23 : vector<2xf32> to vector<2x1xf32>
    %25 = tpu.reciprocal %24 {approx = true} : vector<2x1xf32> -> vector<2x1xf32>
    %26 = vector.broadcast %25 : vector<2x1xf32> to vector<2x128xf32>
    %27 = arith.mulf %22, %26 : vector<2x128xf32>
    %c0_17 = arith.constant 0 : index
    %c0_18 = arith.constant 0 : index
    %28 = vector.load %arg6[%c0_17, %c0_18] : memref<2x128xf32, #tpu.memory_space<vmem>>, vector<2x128xf32>
    tpu.vector_store %arg6[%c0_17, %c0_18], %27 {strides = array<i32>} : memref<2x128xf32, #tpu.memory_space<vmem>>, vector<2x128xf32>,
    return
  }
  func.func @transform_0(%arg0: i32) -> (i32, i32, i32) {
    %c0_i32 = arith.constant 0 : i32
    %c0_i32_0 = arith.constant 0 : i32
    %c0_i32_1 = arith.constant 0 : i32
    return %arg0, %c0_i32, %c0_i32_0 : i32, i32, i32
  }
  func.func @transform_1(%arg0: i32) -> (i32, i32) {
    %c0_i32 = arith.constant 0 : i32
    %c0_i32_0 = arith.constant 0 : i32
    %c0_i32_1 = arith.constant 0 : i32
    return %c0_i32, %c0_i32_0 : i32, i32
  }
  func.func @transform_2(%arg0: i32) -> (i32, i32) {
    %c0_i32 = arith.constant 0 : i32
    %c0_i32_0 = arith.constant 0 : i32
    %c0_i32_1 = arith.constant 0 : i32
    return %c0_i32, %c0_i32_0 : i32, i32
  }
  func.func @transform_3(%arg0: i32) -> (i32, i32) {
    %c0_i32 = arith.constant 0 : i32
    %c0_i32_0 = arith.constant 0 : i32
    %c0_i32_1 = arith.constant 0 : i32
    return %c0_i32, %c0_i32_0 : i32, i32
  }
  func.func @transform_4(%arg0: i32) -> (i32, i32) {
    %c0_i32 = arith.constant 0 : i32
    %c0_i32_0 = arith.constant 0 : i32
    %c0_i32_1 = arith.constant 0 : i32
    return %c0_i32, %c0_i32_0 : i32, i32
  }
  func.func @transform_5(%arg0: i32) -> (i32, i32) {
    %c0_i32 = arith.constant 0 : i32
    %c0_i32_0 = arith.constant 0 : i32
    return %arg0, %c0_i32 : i32, i32
  }
}

</mosaic_0001>

<llo_original>
// kernel: tpu_custom_call.1
$region0: #{tpu_custom_call.1}
  #allocation0 [shape = 'u32[]', space=smem, size = 0x4, offset = 0x4, fixed_abs, tag = 'smem constant byte address 0x4 - core index']
  #allocation1 [shape = 'u32[144,128]{1,0:T(1,128)}', space=vmem, size = 0x12000, scoped, tag = 'internal scratch']
  %s0 = inlined_call_operand.hbm [shape: f32[2,1024,16], index: 0, kind: input, shape index: {}]
  %s1 = inlined_call_operand.hbm [shape: f32[1024,512], index: 1, kind: input, shape index: {}]
  %s2 = inlined_call_operand.hbm [shape: f32[1,512], index: 2, kind: input, shape index: {}]
  %s3 = inlined_call_operand.hbm [shape: f32[512,128], index: 3, kind: input, shape index: {}]
  %s4 = inlined_call_operand.hbm [shape: f32[1,128], index: 4, kind: input, shape index: {}]
  %s5 = inlined_call_operand.hbm [shape: f32[2,128], index: 5, kind: output, shape index: {}]
  %s6 = sld [smem:[#allocation0]]
  $region50: #{tpu_custom_call.1} parent=0
    _
  %s8 = ssub.s32 1, %s6
  %s9 = scalar_select 0, %s8, %s6
  $region1: #{tpu_custom_call.1} parent=0
    #allocation2 [shape = 'u8[1048576]{0}', space=vmem, size = 0x100000, scoped, tag = 'input window, operand 0, single buffered']
    #allocation3 [shape = 's32[1]{0}', space=sflag, size = 0x4, scoped, tag = 'scoped memory for tpu_custom_call.1']
    #allocation4 [shape = 's32[1]{0}', space=sflag, size = 0x4, scoped, tag = 'scoped memory for tpu_custom_call.1']
    #allocation5 [shape = 'u8[2097152]{0}', space=vmem, size = 0x200000, scoped, tag = 'input window, operand 1, single buffered']
    #allocation6 [shape = 's32[1]{0}', space=sflag, size = 0x4, scoped, tag = 'scoped memory for tpu_custom_call.1']
    #allocation7 [shape = 'u8[2048]{0}', space=vmem, size = 0x800, scoped, tag = 'input window, operand 2, single buffered']
    #allocation8 [shape = 'u8[262144]{0}', space=vmem, size = 0x40000, scoped, tag = 'input window, operand 3, single buffered']
    #allocation9 [shape = 's32[1]{0}', space=sflag, size = 0x4, scoped, tag = 'scoped memory for tpu_custom_call.1']
    #allocation10 [shape = 'u8[512]{0}', space=vmem, size = 0x400, scoped, tag = 'input window, operand 4, single buffered']
    #allocation11 [shape = 'u8[1024]{0}', space=vmem, size = 0x400, scoped, tag = 'output window, operand 0, single buffered']
    %10 = vsyncpa [#allocation3], 0
    %11 = vsyncpa [#allocation6], 0
    %12 = vsyncpa [#allocation9], 0
    %13 = vsyncpa [#allocation4], 0
    // Predicated region
    $region2: #{tpu_custom_call.1} parent=1 // pred_check
      _
    $region3: #{tpu_custom_call.1} parent=1 // pred_check_branch
      %15 = sbr.rel (0) target = $region5
    $region4: #{tpu_custom_call.1} parent=1 // pred_region
      %s17 = ssub.s32 32768, 32768
      %18 = vsyncadd [#allocation3], %s17
      %s19 = sshll.u32 [#allocation2], 4
      %s20 = int_to_ptr.vmem [resolvable:$true] %s19
      %25 = dma.hbm_to_vmem [thread:$0]  %s0, 32768, %s20, [#allocation3], 128, 128, 8
    $region5: #{tpu_custom_call.1} parent=1 // pred_fallthru
      _
    // Predicated region
    $region6: #{tpu_custom_call.1} parent=1 // pred_check
      _
    $region7: #{tpu_custom_call.1} parent=1 // pred_check_branch
      %27 = sbr.rel (0) target = $region9
    $region8: #{tpu_custom_call.1} parent=1 // pred_region
      %s29 = ssub.s32 65536, 65536
      %30 = vsyncadd [#allocation6], %s29
      %s31 = sshll.u32 [#allocation5], 4
      %s32 = int_to_ptr.vmem [resolvable:$true] %s31
      %37 = dma.hbm_to_vmem [thread:$0]  %s1, 65536, %s32, [#allocation6], 512, 512, 32
    $region9: #{tpu_custom_call.1} parent=1 // pred_fallthru
      _
    // Predicated region
    $region10: #{tpu_custom_call.1} parent=1 // pred_check
      _
    $region11: #{tpu_custom_call.1} parent=1 // pred_check_branch
      %39 = sbr.rel (0) target = $region13
    $region12: #{tpu_custom_call.1} parent=1 // pred_region
      %s41 = ssub.s32 64, 64
      %42 = vsyncadd [#allocation6], %s41
      %s44 = sshll.u32 [#allocation7], 4
      %s45 = int_to_ptr.vmem [resolvable:$true] %s44
      %47 = dma.hbm_to_vmem [thread:$0]  %s2, 64, %s45, [#allocation6]
    $region13: #{tpu_custom_call.1} parent=1 // pred_fallthru
      _
    // Predicated region
    $region14: #{tpu_custom_call.1} parent=1 // pred_check
      _
    $region15: #{tpu_custom_call.1} parent=1 // pred_check_branch
      %49 = sbr.rel (0) target = $region17
    $region16: #{tpu_custom_call.1} parent=1 // pred_region
      %s51 = ssub.s32 8192, 8192
      %52 = vsyncadd [#allocation9], %s51
      %s53 = sshll.u32 [#allocation8], 4
      %s54 = int_to_ptr.vmem [resolvable:$true] %s53
      %59 = dma.hbm_to_vmem [thread:$0]  %s3, 8192, %s54, [#allocation9], 128, 128, 8
    $region17: #{tpu_custom_call.1} parent=1 // pred_fallthru
      _
    // Predicated region
    $region18: #{tpu_custom_call.1} parent=1 // pred_check
      _
    $region19: #{tpu_custom_call.1} parent=1 // pred_check_branch
      %61 = sbr.rel (0) target = $region21
    $region20: #{tpu_custom_call.1} parent=1 // pred_region
      %s63 = ssub.s32 16, 16
      %64 = vsyncadd [#allocation9], %s63
      %s66 = sshll.u32 [#allocation10], 4
      %s67 = int_to_ptr.vmem [resolvable:$true] %s66
      %69 = dma.hbm_to_vmem [thread:$0]  %s4, 16, %s67, [#allocation9]
    $region21: #{tpu_custom_call.1} parent=1 // pred_fallthru
      _
    // Predicated region
    $region22: #{tpu_custom_call.1} parent=1 // pred_check
      _
    $region23: #{tpu_custom_call.1} parent=1 // pred_check_branch
      %71 = sbr.rel (0) target = $region25
    $region24: #{tpu_custom_call.1} parent=1 // pred_region
      %72 = dma.done [#allocation3], 32768
    $region25: #{tpu_custom_call.1} parent=1 // pred_fallthru
      _
    // Predicated region
    $region26: #{tpu_custom_call.1} parent=1 // pred_check
      _
    $region27: #{tpu_custom_call.1} parent=1 // pred_check_branch
      %74 = sbr.rel (0) target = $region29
    $region28: #{tpu_custom_call.1} parent=1 // pred_region
      %75 = dma.done [#allocation6], 65536
    $region29: #{tpu_custom_call.1} parent=1 // pred_fallthru
      _
    // Predicated region
    $region30: #{tpu_custom_call.1} parent=1 // pred_check
      _
    $region31: #{tpu_custom_call.1} parent=1 // pred_check_branch
      %77 = sbr.rel (0) target = $region33
    $region32: #{tpu_custom_call.1} parent=1 // pred_region
      %78 = dma.done [#allocation6], 64
    $region33: #{tpu_custom_call.1} parent=1 // pred_fallthru
      _
    // Predicated region
    $region34: #{tpu_custom_call.1} parent=1 // pred_check
      _
    $region35: #{tpu_custom_call.1} parent=1 // pred_check_branch
      %80 = sbr.rel (0) target = $region37
    $region36: #{tpu_custom_call.1} parent=1 // pred_region
      %81 = dma.done [#allocation9], 8192
    $region37: #{tpu_custom_call.1} parent=1 // pred_fallthru
      _
    // Predicated region
    $region38: #{tpu_custom_call.1} parent=1 // pred_check
      _
    $region39: #{tpu_custom_call.1} parent=1 // pred_check_branch
      %83 = sbr.rel (0) target = $region41
    $region40: #{tpu_custom_call.1} parent=1 // pred_region
      %84 = dma.done [#allocation9], 16
    $region41: #{tpu_custom_call.1} parent=1 // pred_fallthru
      _
    %v85 = vld [vmem:[#allocation2] sm:$0xff]
    %v86 = vld [vmem:[#allocation2 + $0x8] sm:$0xff]
    %v87 = vld [vmem:[#allocation2 + $0x10] sm:$0xff]
    %v88 = vld [vmem:[#allocation2 + $0x18] sm:$0xff]
    %v89 = vld [vmem:[#allocation2 + $0x20] sm:$0xff]
    %v90 = vld [vmem:[#allocation2 + $0x28] sm:$0xff]
    %v91 = vld [vmem:[#allocation2 + $0x30] sm:$0xff]
    %v92 = vld [vmem:[#allocation2 + $0x38] sm:$0xff]
    %v93 = vld [vmem:[#allocation2 + $0x40] sm:$0xff]
    %v94 = vld [vmem:[#allocation2 + $0x48] sm:$0xff]
    %v95 = vld [vmem:[#allocation2 + $0x50] sm:$0xff]
    %v96 = vld [vmem:[#allocation2 + $0x58] sm:$0xff]
    %v97 = vld [vmem:[#allocation2 + $0x60] sm:$0xff]
    %v98 = vld [vmem:[#allocation2 + $0x68] sm:$0xff]
    %v99 = vld [vmem:[#allocation2 + $0x70] sm:$0xff]
    %v100 = vld [vmem:[#allocation2 + $0x78] sm:$0xff]
    %v101 = vld [vmem:[#allocation2 + $0x80] sm:$0xff]
    %v102 = vld [vmem:[#allocation2 + $0x88] sm:$0xff]
    %v103 = vld [vmem:[#allocation2 + $0x90] sm:$0xff]
    %v104 = vld [vmem:[#allocation2 + $0x98] sm:$0xff]
    %v105 = vld [vmem:[#allocation2 + $0xa0] sm:$0xff]
    %v106 = vld [vmem:[#allocation2 + $0xa8] sm:$0xff]
    %v107 = vld [vmem:[#allocation2 + $0xb0] sm:$0xff]
    %v108 = vld [vmem:[#allocation2 + $0xb8] sm:$0xff]
    %v109 = vld [vmem:[#allocation2 + $0xc0] sm:$0xff]
    %v110 = vld [vmem:[#allocation2 + $0xc8] sm:$0xff]
    %v111 = vld [vmem:[#allocation2 + $0xd0] sm:$0xff]
    %v112 = vld [vmem:[#allocation2 + $0xd8] sm:$0xff]
    %v113 = vld [vmem:[#allocation2 + $0xe0] sm:$0xff]
    %v114 = vld [vmem:[#allocation2 + $0xe8] sm:$0xff]
    %v115 = vld [vmem:[#allocation2 + $0xf0] sm:$0xff]
    %v116 = vld [vmem:[#allocation2 + $0xf8] sm:$0xff]
    %v117 = vld [vmem:[#allocation2 + $0x100] sm:$0xff]
    %v118 = vld [vmem:[#allocation2 + $0x108] sm:$0xff]
    %v119 = vld [vmem:[#allocation2 + $0x110] sm:$0xff]
    %v120 = vld [vmem:[#allocation2 + $0x118] sm:$0xff]
    %v121 = vld [vmem:[#allocation2 + $0x120] sm:$0xff]
    %v122 = vld [vmem:[#allocation2 + $0x128] sm:$0xff]
    %v123 = vld [vmem:[#allocation2 + $0x130] sm:$0xff]
    %v124 = vld [vmem:[#allocation2 + $0x138] sm:$0xff]
    %v125 = vld [vmem:[#allocation2 + $0x140] sm:$0xff]
    %v126 = vld [vmem:[#allocation2 + $0x148] sm:$0xff]
    %v127 = vld [vmem:[#allocation2 + $0x150] sm:$0xff]
    %v128 = vld [vmem:[#allocation2 + $0x158] sm:$0xff]
    %v129 = vld [vmem:[#allocation2 + $0x160] sm:$0xff]
    %v130 = vld [vmem:[#allocation2 + $0x168] sm:$0xff]
    %v131 = vld [vmem:[#allocation2 + $0x170] sm:$0xff]
    %v132 = vld [vmem:[#allocation2 + $0x178] sm:$0xff]
    %v133 = vld [vmem:[#allocation2 + $0x180] sm:$0xff]
    %v134 = vld [vmem:[#allocation2 + $0x188] sm:$0xff]
    %v135 = vld [vmem:[#allocation2 + $0x190] sm:$0xff]
    %v136 = vld [vmem:[#allocation2 + $0x198] sm:$0xff]
    %v137 = vld [vmem:[#allocation2 + $0x1a0] sm:$0xff]
    %v138 = vld [vmem:[#allocation2 + $0x1a8] sm:$0xff]
    %v139 = vld [vmem:[#allocation2 + $0x1b0] sm:$0xff]
    %v140 = vld [vmem:[#allocation2 + $0x1b8] sm:$0xff]
    %v141 = vld [vmem:[#allocation2 + $0x1c0] sm:$0xff]
    %v142 = vld [vmem:[#allocation2 + $0x1c8] sm:$0xff]
    %v143 = vld [vmem:[#allocation2 + $0x1d0] sm:$0xff]
    %v144 = vld [vmem:[#allocation2 + $0x1d8] sm:$0xff]
    %v145 = vld [vmem:[#allocation2 + $0x1e0] sm:$0xff]
    %v146 = vld [vmem:[#allocation2 + $0x1e8] sm:$0xff]
    %v147 = vld [vmem:[#allocation2 + $0x1f0] sm:$0xff]
    %v148 = vld [vmem:[#allocation2 + $0x1f8] sm:$0xff]
    %v149 = vld [vmem:[#allocation2 + $0x200] sm:$0xff]
    %v150 = vld [vmem:[#allocation2 + $0x208] sm:$0xff]
    %v151 = vld [vmem:[#allocation2 + $0x210] sm:$0xff]
    %v152 = vld [vmem:[#allocation2 + $0x218] sm:$0xff]
    %v153 = vld [vmem:[#allocation2 + $0x220] sm:$0xff]
    %v154 = vld [vmem:[#allocation2 + $0x228] sm:$0xff]
    %v155 = vld [vmem:[#allocation2 + $0x230] sm:$0xff]
    %v156 = vld [vmem:[#allocation2 + $0x238] sm:$0xff]
    %v157 = vld [vmem:[#allocation2 + $0x240] sm:$0xff]
    %v158 = vld [vmem:[#allocation2 + $0x248] sm:$0xff]
    %v159 = vld [vmem:[#allocation2 + $0x250] sm:$0xff]
    %v160 = vld [vmem:[#allocation2 + $0x258] sm:$0xff]
    %v161 = vld [vmem:[#allocation2 + $0x260] sm:$0xff]
    %v162 = vld [vmem:[#allocation2 + $0x268] sm:$0xff]
    %v163 = vld [vmem:[#allocation2 + $0x270] sm:$0xff]
    %v164 = vld [vmem:[#allocation2 + $0x278] sm:$0xff]
    %v165 = vld [vmem:[#allocation2 + $0x280] sm:$0xff]
    %v166 = vld [vmem:[#allocation2 + $0x288] sm:$0xff]
    %v167 = vld [vmem:[#allocation2 + $0x290] sm:$0xff]
    %v168 = vld [vmem:[#allocation2 + $0x298] sm:$0xff]
    %v169 = vld [vmem:[#allocation2 + $0x2a0] sm:$0xff]
    %v170 = vld [vmem:[#allocation2 + $0x2a8] sm:$0xff]
    %v171 = vld [vmem:[#allocation2 + $0x2b0] sm:$0xff]
    %v172 = vld [vmem:[#allocation2 + $0x2b8] sm:$0xff]
    %v173 = vld [vmem:[#allocation2 + $0x2c0] sm:$0xff]
    %v174 = vld [vmem:[#allocation2 + $0x2c8] sm:$0xff]
    %v175 = vld [vmem:[#allocation2 + $0x2d0] sm:$0xff]
    %v176 = vld [vmem:[#allocation2 + $0x2d8] sm:$0xff]
    %v177 = vld [vmem:[#allocation2 + $0x2e0] sm:$0xff]
    %v178 = vld [vmem:[#allocation2 + $0x2e8] sm:$0xff]
    %v179 = vld [vmem:[#allocation2 + $0x2f0] sm:$0xff]
    %v180 = vld [vmem:[#allocation2 + $0x2f8] sm:$0xff]
    %v181 = vld [vmem:[#allocation2 + $0x300] sm:$0xff]
    %v182 = vld [vmem:[#allocation2 + $0x308] sm:$0xff]
    %v183 = vld [vmem:[#allocation2 + $0x310] sm:$0xff]
    %v184 = vld [vmem:[#allocation2 + $0x318] sm:$0xff]
    %v185 = vld [vmem:[#allocation2 + $0x320] sm:$0xff]
    %v186 = vld [vmem:[#allocation2 + $0x328] sm:$0xff]
    %v187 = vld [vmem:[#allocation2 + $0x330] sm:$0xff]
    %v188 = vld [vmem:[#allocation2 + $0x338] sm:$0xff]
    %v189 = vld [vmem:[#allocation2 + $0x340] sm:$0xff]
    %v190 = vld [vmem:[#allocation2 + $0x348] sm:$0xff]
    %v191 = vld [vmem:[#allocation2 + $0x350] sm:$0xff]
    %v192 = vld [vmem:[#allocation2 + $0x358] sm:$0xff]
    %v193 = vld [vmem:[#allocation2 + $0x360] sm:$0xff]
    %v194 = vld [vmem:[#allocation2 + $0x368] sm:$0xff]
    %v195 = vld [vmem:[#allocation2 + $0x370] sm:$0xff]
    %v196 = vld [vmem:[#allocation2 + $0x378] sm:$0xff]
    %v197 = vld [vmem:[#allocation2 + $0x380] sm:$0xff]
    %v198 = vld [vmem:[#allocation2 + $0x388] sm:$0xff]
    %v199 = vld [vmem:[#allocation2 + $0x390] sm:$0xff]
    %v200 = vld [vmem:[#allocation2 + $0x398] sm:$0xff]
    %v201 = vld [vmem:[#allocation2 + $0x3a0] sm:$0xff]
    %v202 = vld [vmem:[#allocation2 + $0x3a8] sm:$0xff]
    %v203 = vld [vmem:[#allocation2 + $0x3b0] sm:$0xff]
    %v204 = vld [vmem:[#allocation2 + $0x3b8] sm:$0xff]
    %v205 = vld [vmem:[#allocation2 + $0x3c0] sm:$0xff]
    %v206 = vld [vmem:[#allocation2 + $0x3c8] sm:$0xff]
    %v207 = vld [vmem:[#allocation2 + $0x3d0] sm:$0xff]
    %v208 = vld [vmem:[#allocation2 + $0x3d8] sm:$0xff]
    %v209 = vld [vmem:[#allocation2 + $0x3e0] sm:$0xff]
    %v210 = vld [vmem:[#allocation2 + $0x3e8] sm:$0xff]
    %v211 = vld [vmem:[#allocation2 + $0x3f0] sm:$0xff]
    %v212 = vld [vmem:[#allocation2 + $0x3f8] sm:$0xff]
    %v213 = vld [vmem:[#allocation2 + $0x400] sm:$0xff]
    %v214 = vld [vmem:[#allocation2 + $0x408] sm:$0xff]
    %v215 = vld [vmem:[#allocation2 + $0x410] sm:$0xff]
    %v216 = vld [vmem:[#allocation2 + $0x418] sm:$0xff]
    %v217 = vld [vmem:[#allocation2 + $0x420] sm:$0xff]
    %v218 = vld [vmem:[#allocation2 + $0x428] sm:$0xff]
    %v219 = vld [vmem:[#allocation2 + $0x430] sm:$0xff]
    %v220 = vld [vmem:[#allocation2 + $0x438] sm:$0xff]
    %v221 = vld [vmem:[#allocation2 + $0x440] sm:$0xff]
    %v222 = vld [vmem:[#allocation2 + $0x448] sm:$0xff]
    %v223 = vld [vmem:[#allocation2 + $0x450] sm:$0xff]
    %v224 = vld [vmem:[#allocation2 + $0x458] sm:$0xff]
    %v225 = vld [vmem:[#allocation2 + $0x460] sm:$0xff]
    %v226 = vld [vmem:[#allocation2 + $0x468] sm:$0xff]
    %v227 = vld [vmem:[#allocation2 + $0x470] sm:$0xff]
    %v228 = vld [vmem:[#allocation2 + $0x478] sm:$0xff]
    %v229 = vld [vmem:[#allocation2 + $0x480] sm:$0xff]
    %v230 = vld [vmem:[#allocation2 + $0x488] sm:$0xff]
    %v231 = vld [vmem:[#allocation2 + $0x490] sm:$0xff]
    %v232 = vld [vmem:[#allocation2 + $0x498] sm:$0xff]
    %v233 = vld [vmem:[#allocation2 + $0x4a0] sm:$0xff]
    %v234 = vld [vmem:[#allocation2 + $0x4a8] sm:$0xff]
    %v235 = vld [vmem:[#allocation2 + $0x4b0] sm:$0xff]
    %v236 = vld [vmem:[#allocation2 + $0x4b8] sm:$0xff]
    %v237 = vld [vmem:[#allocation2 + $0x4c0] sm:$0xff]
    %v238 = vld [vmem:[#allocation2 + $0x4c8] sm:$0xff]
    %v239 = vld [vmem:[#allocation2 + $0x4d0] sm:$0xff]
    %v240 = vld [vmem:[#allocation2 + $0x4d8] sm:$0xff]
    %v241 = vld [vmem:[#allocation2 + $0x4e0] sm:$0xff]
    %v242 = vld [vmem:[#allocation2 + $0x4e8] sm:$0xff]
    %v243 = vld [vmem:[#allocation2 + $0x4f0] sm:$0xff]
    %v244 = vld [vmem:[#allocation2 + $0x4f8] sm:$0xff]
    %v245 = vld [vmem:[#allocation2 + $0x500] sm:$0xff]
    %v246 = vld [vmem:[#allocation2 + $0x508] sm:$0xff]
    %v247 = vld [vmem:[#allocation2 + $0x510] sm:$0xff]
    %v248 = vld [vmem:[#allocation2 + $0x518] sm:$0xff]
    %v249 = vld [vmem:[#allocation2 + $0x520] sm:$0xff]
    %v250 = vld [vmem:[#allocation2 + $0x528] sm:$0xff]
    %v251 = vld [vmem:[#allocation2 + $0x530] sm:$0xff]
    %v252 = vld [vmem:[#allocation2 + $0x538] sm:$0xff]
    %v253 = vld [vmem:[#allocation2 + $0x540] sm:$0xff]
    %v254 = vld [vmem:[#allocation2 + $0x548] sm:$0xff]
    %v255 = vld [vmem:[#allocation2 + $0x550] sm:$0xff]
    %v256 = vld [vmem:[#allocation2 + $0x558] sm:$0xff]
    %v257 = vld [vmem:[#allocation2 + $0x560] sm:$0xff]
    %v258 = vld [vmem:[#allocation2 + $0x568] sm:$0xff]
    %v259 = vld [vmem:[#allocation2 + $0x570] sm:$0xff]
    %v260 = vld [vmem:[#allocation2 + $0x578] sm:$0xff]
    %v261 = vld [vmem:[#allocation2 + $0x580] sm:$0xff]
    %v262 = vld [vmem:[#allocation2 + $0x588] sm:$0xff]
    %v263 = vld [vmem:[#allocation2 + $0x590] sm:$0xff]
    %v264 = vld [vmem:[#allocation2 + $0x598] sm:$0xff]
    %v265 = vld [vmem:[#allocation2 + $0x5a0] sm:$0xff]
    %v266 = vld [vmem:[#allocation2 + $0x5a8] sm:$0xff]
    %v267 = vld [vmem:[#allocation2 + $0x5b0] sm:$0xff]
    %v268 = vld [vmem:[#allocation2 + $0x5b8] sm:$0xff]
    %v269 = vld [vmem:[#allocation2 + $0x5c0] sm:$0xff]
    %v270 = vld [vmem:[#allocation2 + $0x5c8] sm:$0xff]
    %v271 = vld [vmem:[#allocation2 + $0x5d0] sm:$0xff]
    %v272 = vld [vmem:[#allocation2 + $0x5d8] sm:$0xff]
    %v273 = vld [vmem:[#allocation2 + $0x5e0] sm:$0xff]
    %v274 = vld [vmem:[#allocation2 + $0x5e8] sm:$0xff]
    %v275 = vld [vmem:[#allocation2 + $0x5f0] sm:$0xff]
    %v276 = vld [vmem:[#allocation2 + $0x5f8] sm:$0xff]
    %v277 = vld [vmem:[#allocation2 + $0x600] sm:$0xff]
    %v278 = vld [vmem:[#allocation2 + $0x608] sm:$0xff]
    %v279 = vld [vmem:[#allocation2 + $0x610] sm:$0xff]
    %v280 = vld [vmem:[#allocation2 + $0x618] sm:$0xff]
    %v281 = vld [vmem:[#allocation2 + $0x620] sm:$0xff]
    %v282 = vld [vmem:[#allocation2 + $0x628] sm:$0xff]
    %v283 = vld [vmem:[#allocation2 + $0x630] sm:$0xff]
    %v284 = vld [vmem:[#allocation2 + $0x638] sm:$0xff]
    %v285 = vld [vmem:[#allocation2 + $0x640] sm:$0xff]
    %v286 = vld [vmem:[#allocation2 + $0x648] sm:$0xff]
    %v287 = vld [vmem:[#allocation2 + $0x650] sm:$0xff]
    %v288 = vld [vmem:[#allocation2 + $0x658] sm:$0xff]
    %v289 = vld [vmem:[#allocation2 + $0x660] sm:$0xff]
    %v290 = vld [vmem:[#allocation2 + $0x668] sm:$0xff]
    %v291 = vld [vmem:[#allocation2 + $0x670] sm:$0xff]
    %v292 = vld [vmem:[#allocation2 + $0x678] sm:$0xff]
    %v293 = vld [vmem:[#allocation2 + $0x680] sm:$0xff]
    %v294 = vld [vmem:[#allocation2 + $0x688] sm:$0xff]
    %v295 = vld [vmem:[#allocation2 + $0x690] sm:$0xff]
    %v296 = vld [vmem:[#allocation2 + $0x698] sm:$0xff]
    %v297 = vld [vmem:[#allocation2 + $0x6a0] sm:$0xff]
    %v298 = vld [vmem:[#allocation2 + $0x6a8] sm:$0xff]
    %v299 = vld [vmem:[#allocation2 + $0x6b0] sm:$0xff]
    %v300 = vld [vmem:[#allocation2 + $0x6b8] sm:$0xff]
    %v301 = vld [vmem:[#allocation2 + $0x6c0] sm:$0xff]
    %v302 = vld [vmem:[#allocation2 + $0x6c8] sm:$0xff]
    %v303 = vld [vmem:[#allocation2 + $0x6d0] sm:$0xff]
    %v304 = vld [vmem:[#allocation2 + $0x6d8] sm:$0xff]
    %v305 = vld [vmem:[#allocation2 + $0x6e0] sm:$0xff]
    %v306 = vld [vmem:[#allocation2 + $0x6e8] sm:$0xff]
    %v307 = vld [vmem:[#allocation2 + $0x6f0] sm:$0xff]
    %v308 = vld [vmem:[#allocation2 + $0x6f8] sm:$0xff]
    %v309 = vld [vmem:[#allocation2 + $0x700] sm:$0xff]
    %v310 = vld [vmem:[#allocation2 + $0x708] sm:$0xff]
    %v311 = vld [vmem:[#allocation2 + $0x710] sm:$0xff]
    %v312 = vld [vmem:[#allocation2 + $0x718] sm:$0xff]
    %v313 = vld [vmem:[#allocation2 + $0x720] sm:$0xff]
    %v314 = vld [vmem:[#allocation2 + $0x728] sm:$0xff]
    %v315 = vld [vmem:[#allocation2 + $0x730] sm:$0xff]
    %v316 = vld [vmem:[#allocation2 + $0x738] sm:$0xff]
    %v317 = vld [vmem:[#allocation2 + $0x740] sm:$0xff]
    %v318 = vld [vmem:[#allocation2 + $0x748] sm:$0xff]
    %v319 = vld [vmem:[#allocation2 + $0x750] sm:$0xff]
    %v320 = vld [vmem:[#allocation2 + $0x758] sm:$0xff]
    %v321 = vld [vmem:[#allocation2 + $0x760] sm:$0xff]
    %v322 = vld [vmem:[#allocation2 + $0x768] sm:$0xff]
    %v323 = vld [vmem:[#allocation2 + $0x770] sm:$0xff]
    %v324 = vld [vmem:[#allocation2 + $0x778] sm:$0xff]
    %v325 = vld [vmem:[#allocation2 + $0x780] sm:$0xff]
    %v326 = vld [vmem:[#allocation2 + $0x788] sm:$0xff]
    %v327 = vld [vmem:[#allocation2 + $0x790] sm:$0xff]
    %v328 = vld [vmem:[#allocation2 + $0x798] sm:$0xff]
    %v329 = vld [vmem:[#allocation2 + $0x7a0] sm:$0xff]
    %v330 = vld [vmem:[#allocation2 + $0x7a8] sm:$0xff]
    %v331 = vld [vmem:[#allocation2 + $0x7b0] sm:$0xff]
    %v332 = vld [vmem:[#allocation2 + $0x7b8] sm:$0xff]
    %v333 = vld [vmem:[#allocation2 + $0x7c0] sm:$0xff]
    %v334 = vld [vmem:[#allocation2 + $0x7c8] sm:$0xff]
    %v335 = vld [vmem:[#allocation2 + $0x7d0] sm:$0xff]
    %v336 = vld [vmem:[#allocation2 + $0x7d8] sm:$0xff]
    %v337 = vld [vmem:[#allocation2 + $0x7e0] sm:$0xff]
    %v338 = vld [vmem:[#allocation2 + $0x7e8] sm:$0xff]
    %v339 = vld [vmem:[#allocation2 + $0x7f0] sm:$0xff]
    %v340 = vld [vmem:[#allocation2 + $0x7f8] sm:$0xff]
    %v341 = vmax.f32 %v85, 0.0
    %v342 = vmax.f32 %v86, 0.0
    %v343 = vmax.f32 %v87, 0.0
    %v344 = vmax.f32 %v88, 0.0
    %v345 = vmax.f32 %v89, 0.0
    %v346 = vmax.f32 %v90, 0.0
    %v347 = vmax.f32 %v91, 0.0
    %v348 = vmax.f32 %v92, 0.0
    %v349 = vmax.f32 %v93, 0.0
    %v350 = vmax.f32 %v94, 0.0
    %v351 = vmax.f32 %v95, 0.0
    %v352 = vmax.f32 %v96, 0.0
    %v353 = vmax.f32 %v97, 0.0
    %v354 = vmax.f32 %v98, 0.0
    %v355 = vmax.f32 %v99, 0.0
    %v356 = vmax.f32 %v100, 0.0
    %v357 = vmax.f32 %v101, 0.0
    %v358 = vmax.f32 %v102, 0.0
    %v359 = vmax.f32 %v103, 0.0
    %v360 = vmax.f32 %v104, 0.0
    %v361 = vmax.f32 %v105, 0.0
    %v362 = vmax.f32 %v106, 0.0
    %v363 = vmax.f32 %v107, 0.0
    %v364 = vmax.f32 %v108, 0.0
    %v365 = vmax.f32 %v109, 0.0
    %v366 = vmax.f32 %v110, 0.0
    %v367 = vmax.f32 %v111, 0.0
    %v368 = vmax.f32 %v112, 0.0
    %v369 = vmax.f32 %v113, 0.0
    %v370 = vmax.f32 %v114, 0.0
    %v371 = vmax.f32 %v115, 0.0
    %v372 = vmax.f32 %v116, 0.0
    %v373 = vmax.f32 %v117, 0.0
    %v374 = vmax.f32 %v118, 0.0
    %v375 = vmax.f32 %v119, 0.0
    %v376 = vmax.f32 %v120, 0.0
    %v377 = vmax.f32 %v121, 0.0
    %v378 = vmax.f32 %v122, 0.0
    %v379 = vmax.f32 %v123, 0.0
    %v380 = vmax.f32 %v124, 0.0
    %v381 = vmax.f32 %v125, 0.0
    %v382 = vmax.f32 %v126, 0.0
    %v383 = vmax.f32 %v127, 0.0
    %v384 = vmax.f32 %v128, 0.0
    %v385 = vmax.f32 %v129, 0.0
    %v386 = vmax.f32 %v130, 0.0
    %v387 = vmax.f32 %v131, 0.0
    %v388 = vmax.f32 %v132, 0.0
    %v389 = vmax.f32 %v133, 0.0
    %v390 = vmax.f32 %v134, 0.0
    %v391 = vmax.f32 %v135, 0.0
    %v392 = vmax.f32 %v136, 0.0
    %v393 = vmax.f32 %v137, 0.0
    %v394 = vmax.f32 %v138, 0.0
    %v395 = vmax.f32 %v139, 0.0
    %v396 = vmax.f32 %v140, 0.0
    %v397 = vmax.f32 %v141, 0.0
    %v398 = vmax.f32 %v142, 0.0
    %v399 = vmax.f32 %v143, 0.0
    %v400 = vmax.f32 %v144, 0.0
    %v401 = vmax.f32 %v145, 0.0
    %v402 = vmax.f32 %v146, 0.0
    %v403 = vmax.f32 %v147, 0.0
    %v404 = vmax.f32 %v148, 0.0
    %v405 = vmax.f32 %v149, 0.0
    %v406 = vmax.f32 %v150, 0.0
    %v407 = vmax.f32 %v151, 0.0
    %v408 = vmax.f32 %v152, 0.0
    %v409 = vmax.f32 %v153, 0.0
    %v410 = vmax.f32 %v154, 0.0
    %v411 = vmax.f32 %v155, 0.0
    %v412 = vmax.f32 %v156, 0.0
    %v413 = vmax.f32 %v157, 0.0
    %v414 = vmax.f32 %v158, 0.0
    %v415 = vmax.f32 %v159, 0.0
    %v416 = vmax.f32 %v160, 0.0
    %v417 = vmax.f32 %v161, 0.0
    %v418 = vmax.f32 %v162, 0.0
    %v419 = vmax.f32 %v163, 0.0
    %v420 = vmax.f32 %v164, 0.0
    %v421 = vmax.f32 %v165, 0.0
    %v422 = vmax.f32 %v166, 0.0
    %v423 = vmax.f32 %v167, 0.0
    %v424 = vmax.f32 %v168, 0.0
    %v425 = vmax.f32 %v169, 0.0
    %v426 = vmax.f32 %v170, 0.0
    %v427 = vmax.f32 %v171, 0.0
    %v428 = vmax.f32 %v172, 0.0
    %v429 = vmax.f32 %v173, 0.0
    %v430 = vmax.f32 %v174, 0.0
    %v431 = vmax.f32 %v175, 0.0
    %v432 = vmax.f32 %v176, 0.0
    %v433 = vmax.f32 %v177, 0.0
    %v434 = vmax.f32 %v178, 0.0
    %v435 = vmax.f32 %v179, 0.0
    %v436 = vmax.f32 %v180, 0.0
    %v437 = vmax.f32 %v181, 0.0
    %v438 = vmax.f32 %v182, 0.0
    %v439 = vmax.f32 %v183, 0.0
    %v440 = vmax.f32 %v184, 0.0
    %v441 = vmax.f32 %v185, 0.0
    %v442 = vmax.f32 %v186, 0.0
    %v443 = vmax.f32 %v187, 0.0
    %v444 = vmax.f32 %v188, 0.0
    %v445 = vmax.f32 %v189, 0.0
    %v446 = vmax.f32 %v190, 0.0
    %v447 = vmax.f32 %v191, 0.0
    %v448 = vmax.f32 %v192, 0.0
    %v449 = vmax.f32 %v193, 0.0
    %v450 = vmax.f32 %v194, 0.0
    %v451 = vmax.f32 %v195, 0.0
    %v452 = vmax.f32 %v196, 0.0
    %v453 = vmax.f32 %v197, 0.0
    %v454 = vmax.f32 %v198, 0.0
    %v455 = vmax.f32 %v199, 0.0
    %v456 = vmax.f32 %v200, 0.0
    %v457 = vmax.f32 %v201, 0.0
    %v458 = vmax.f32 %v202, 0.0
    %v459 = vmax.f32 %v203, 0.0
    %v460 = vmax.f32 %v204, 0.0
    %v461 = vmax.f32 %v205, 0.0
    %v462 = vmax.f32 %v206, 0.0
    %v463 = vmax.f32 %v207, 0.0
    %v464 = vmax.f32 %v208, 0.0
    %v465 = vmax.f32 %v209, 0.0
    %v466 = vmax.f32 %v210, 0.0
    %v467 = vmax.f32 %v211, 0.0
    %v468 = vmax.f32 %v212, 0.0
    %v469 = vmax.f32 %v213, 0.0
    %v470 = vmax.f32 %v214, 0.0
    %v471 = vmax.f32 %v215, 0.0
    %v472 = vmax.f32 %v216, 0.0
    %v473 = vmax.f32 %v217, 0.0
    %v474 = vmax.f32 %v218, 0.0
    %v475 = vmax.f32 %v219, 0.0
    %v476 = vmax.f32 %v220, 0.0
    %v477 = vmax.f32 %v221, 0.0
    %v478 = vmax.f32 %v222, 0.0
    %v479 = vmax.f32 %v223, 0.0
    %v480 = vmax.f32 %v224, 0.0
    %v481 = vmax.f32 %v225, 0.0
    %v482 = vmax.f32 %v226, 0.0
    %v483 = vmax.f32 %v227, 0.0
    %v484 = vmax.f32 %v228, 0.0
    %v485 = vmax.f32 %v229, 0.0
    %v486 = vmax.f32 %v230, 0.0
    %v487 = vmax.f32 %v231, 0.0
    %v488 = vmax.f32 %v232, 0.0
    %v489 = vmax.f32 %v233, 0.0
    %v490 = vmax.f32 %v234, 0.0
    %v491 = vmax.f32 %v235, 0.0
    %v492 = vmax.f32 %v236, 0.0
    %v493 = vmax.f32 %v237, 0.0
    %v494 = vmax.f32 %v238, 0.0
    %v495 = vmax.f32 %v239, 0.0
    %v496 = vmax.f32 %v240, 0.0
    %v497 = vmax.f32 %v241, 0.0
    %v498 = vmax.f32 %v242, 0.0
    %v499 = vmax.f32 %v243, 0.0
    %v500 = vmax.f32 %v244, 0.0
    %v501 = vmax.f32 %v245, 0.0
    %v502 = vmax.f32 %v246, 0.0
    %v503 = vmax.f32 %v247, 0.0
    %v504 = vmax.f32 %v248, 0.0
    %v505 = vmax.f32 %v249, 0.0
    %v506 = vmax.f32 %v250, 0.0
    %v507 = vmax.f32 %v251, 0.0
    %v508 = vmax.f32 %v252, 0.0
    %v509 = vmax.f32 %v253, 0.0
    %v510 = vmax.f32 %v254, 0.0
    %v511 = vmax.f32 %v255, 0.0
    %v512 = vmax.f32 %v256, 0.0
    %v513 = vmax.f32 %v257, 0.0
    %v514 = vmax.f32 %v258, 0.0
    %v515 = vmax.f32 %v259, 0.0
    %v516 = vmax.f32 %v260, 0.0
    %v517 = vmax.f32 %v261, 0.0
    %v518 = vmax.f32 %v262, 0.0
    %v519 = vmax.f32 %v263, 0.0
    %v520 = vmax.f32 %v264, 0.0
    %v521 = vmax.f32 %v265, 0.0
    %v522 = vmax.f32 %v266, 0.0
    %v523 = vmax.f32 %v267, 0.0
    %v524 = vmax.f32 %v268, 0.0
    %v525 = vmax.f32 %v269, 0.0
    %v526 = vmax.f32 %v270, 0.0
    %v527 = vmax.f32 %v271, 0.0
    %v528 = vmax.f32 %v272, 0.0
    %v529 = vmax.f32 %v273, 0.0
    %v530 = vmax.f32 %v274, 0.0
    %v531 = vmax.f32 %v275, 0.0
    %v532 = vmax.f32 %v276, 0.0
    %v533 = vmax.f32 %v277, 0.0
    %v534 = vmax.f32 %v278, 0.0
    %v535 = vmax.f32 %v279, 0.0
    %v536 = vmax.f32 %v280, 0.0
    %v537 = vmax.f32 %v281, 0.0
    %v538 = vmax.f32 %v282, 0.0
    %v539 = vmax.f32 %v283, 0.0
    %v540 = vmax.f32 %v284, 0.0
    %v541 = vmax.f32 %v285, 0.0
    %v542 = vmax.f32 %v286, 0.0
    %v543 = vmax.f32 %v287, 0.0
    %v544 = vmax.f32 %v288, 0.0
    %v545 = vmax.f32 %v289, 0.0
    %v546 = vmax.f32 %v290, 0.0
    %v547 = vmax.f32 %v291, 0.0
    %v548 = vmax.f32 %v292, 0.0
    %v549 = vmax.f32 %v293, 0.0
    %v550 = vmax.f32 %v294, 0.0
    %v551 = vmax.f32 %v295, 0.0
    %v552 = vmax.f32 %v296, 0.0
    %v553 = vmax.f32 %v297, 0.0
    %v554 = vmax.f32 %v298, 0.0
    %v555 = vmax.f32 %v299, 0.0
    %v556 = vmax.f32 %v300, 0.0
    %v557 = vmax.f32 %v301, 0.0
    %v558 = vmax.f32 %v302, 0.0
    %v559 = vmax.f32 %v303, 0.0
    %v560 = vmax.f32 %v304, 0.0
    %v561 = vmax.f32 %v305, 0.0
    %v562 = vmax.f32 %v306, 0.0
    %v563 = vmax.f32 %v307, 0.0
    %v564 = vmax.f32 %v308, 0.0
    %v565 = vmax.f32 %v309, 0.0
    %v566 = vmax.f32 %v310, 0.0
    %v567 = vmax.f32 %v311, 0.0
    %v568 = vmax.f32 %v312, 0.0
    %v569 = vmax.f32 %v313, 0.0
    %v570 = vmax.f32 %v314, 0.0
    %v571 = vmax.f32 %v315, 0.0
    %v572 = vmax.f32 %v316, 0.0
    %v573 = vmax.f32 %v317, 0.0
    %v574 = vmax.f32 %v318, 0.0
    %v575 = vmax.f32 %v319, 0.0
    %v576 = vmax.f32 %v320, 0.0
    %v577 = vmax.f32 %v321, 0.0
    %v578 = vmax.f32 %v322, 0.0
    %v579 = vmax.f32 %v323, 0.0
    %v580 = vmax.f32 %v324, 0.0
    %v581 = vmax.f32 %v325, 0.0
    %v582 = vmax.f32 %v326, 0.0
    %v583 = vmax.f32 %v327, 0.0
    %v584 = vmax.f32 %v328, 0.0
    %v585 = vmax.f32 %v329, 0.0
    %v586 = vmax.f32 %v330, 0.0
    %v587 = vmax.f32 %v331, 0.0
    %v588 = vmax.f32 %v332, 0.0
    %v589 = vmax.f32 %v333, 0.0
    %v590 = vmax.f32 %v334, 0.0
    %v591 = vmax.f32 %v335, 0.0
    %v592 = vmax.f32 %v336, 0.0
    %v593 = vmax.f32 %v337, 0.0
    %v594 = vmax.f32 %v338, 0.0
    %v595 = vmax.f32 %v339, 0.0
    %v596 = vmax.f32 %v340, 0.0
    %vm597 = vcmask 130048
    %v598 = vsel %vm597, %v341, 0.0
    %599 = vadd.xlane.f32.xlu0 %v598
    %v600 = vpop.xlane.xlu0 %599
    %v601 = vsel %vm597, %v342, 0.0
    %602 = vadd.xlane.f32.xlu0 %v601
    %v603 = vpop.xlane.xlu0 %602
    %v604 = vsel %vm597, %v343, 0.0
    %605 = vadd.xlane.f32.xlu0 %v604
    %v606 = vpop.xlane.xlu0 %605
    %v607 = vsel %vm597, %v344, 0.0
    %608 = vadd.xlane.f32.xlu0 %v607
    %v609 = vpop.xlane.xlu0 %608
    %v610 = vsel %vm597, %v345, 0.0
    %611 = vadd.xlane.f32.xlu0 %v610
    %v612 = vpop.xlane.xlu0 %611
    %v613 = vsel %vm597, %v346, 0.0
    %614 = vadd.xlane.f32.xlu0 %v613
    %v615 = vpop.xlane.xlu0 %614
    %v616 = vsel %vm597, %v347, 0.0
    %617 = vadd.xlane.f32.xlu0 %v616
    %v618 = vpop.xlane.xlu0 %617
    %v619 = vsel %vm597, %v348, 0.0
    %620 = vadd.xlane.f32.xlu0 %v619
    %v621 = vpop.xlane.xlu0 %620
    %v622 = vsel %vm597, %v349, 0.0
    %623 = vadd.xlane.f32.xlu0 %v622
    %v624 = vpop.xlane.xlu0 %623
    %v625 = vsel %vm597, %v350, 0.0
    %626 = vadd.xlane.f32.xlu0 %v625
    %v627 = vpop.xlane.xlu0 %626
    %v628 = vsel %vm597, %v351, 0.0
    %629 = vadd.xlane.f32.xlu0 %v628
    %v630 = vpop.xlane.xlu0 %629
    %v631 = vsel %vm597, %v352, 0.0
    %632 = vadd.xlane.f32.xlu0 %v631
    %v633 = vpop.xlane.xlu0 %632
    %v634 = vsel %vm597, %v353, 0.0
    %635 = vadd.xlane.f32.xlu0 %v634
    %v636 = vpop.xlane.xlu0 %635
    %v637 = vsel %vm597, %v354, 0.0
    %638 = vadd.xlane.f32.xlu0 %v637
    %v639 = vpop.xlane.xlu0 %638
    %v640 = vsel %vm597, %v355, 0.0
    %641 = vadd.xlane.f32.xlu0 %v640
    %v642 = vpop.xlane.xlu0 %641
    %v643 = vsel %vm597, %v356, 0.0
    %644 = vadd.xlane.f32.xlu0 %v643
    %v645 = vpop.xlane.xlu0 %644
    %v646 = vsel %vm597, %v357, 0.0
    %647 = vadd.xlane.f32.xlu0 %v646
    %v648 = vpop.xlane.xlu0 %647
    %v649 = vsel %vm597, %v358, 0.0
    %650 = vadd.xlane.f32.xlu0 %v649
    %v651 = vpop.xlane.xlu0 %650
    %v652 = vsel %vm597, %v359, 0.0
    %653 = vadd.xlane.f32.xlu0 %v652
    %v654 = vpop.xlane.xlu0 %653
    %v655 = vsel %vm597, %v360, 0.0
    %656 = vadd.xlane.f32.xlu0 %v655
    %v657 = vpop.xlane.xlu0 %656
    %v658 = vsel %vm597, %v361, 0.0
    %659 = vadd.xlane.f32.xlu0 %v658
    %v660 = vpop.xlane.xlu0 %659
    %v661 = vsel %vm597, %v362, 0.0
    %662 = vadd.xlane.f32.xlu0 %v661
    %v663 = vpop.xlane.xlu0 %662
    %v664 = vsel %vm597, %v363, 0.0
    %665 = vadd.xlane.f32.xlu0 %v664
    %v666 = vpop.xlane.xlu0 %665
    %v667 = vsel %vm597, %v364, 0.0
    %668 = vadd.xlane.f32.xlu0 %v667
    %v669 = vpop.xlane.xlu0 %668
    %v670 = vsel %vm597, %v365, 0.0
    %671 = vadd.xlane.f32.xlu0 %v670
    %v672 = vpop.xlane.xlu0 %671
    %v673 = vsel %vm597, %v366, 0.0
    %674 = vadd.xlane.f32.xlu0 %v673
    %v675 = vpop.xlane.xlu0 %674
    %v676 = vsel %vm597, %v367, 0.0
    %677 = vadd.xlane.f32.xlu0 %v676
    %v678 = vpop.xlane.xlu0 %677
    %v679 = vsel %vm597, %v368, 0.0
    %680 = vadd.xlane.f32.xlu0 %v679
    %v681 = vpop.xlane.xlu0 %680
    %v682 = vsel %vm597, %v369, 0.0
    %683 = vadd.xlane.f32.xlu0 %v682
    %v684 = vpop.xlane.xlu0 %683
    %v685 = vsel %vm597, %v370, 0.0
    %686 = vadd.xlane.f32.xlu0 %v685
    %v687 = vpop.xlane.xlu0 %686
    %v688 = vsel %vm597, %v371, 0.0
    %689 = vadd.xlane.f32.xlu0 %v688
    %v690 = vpop.xlane.xlu0 %689
    %v691 = vsel %vm597, %v372, 0.0
    %692 = vadd.xlane.f32.xlu0 %v691
    %v693 = vpop.xlane.xlu0 %692
    %v694 = vsel %vm597, %v373, 0.0
    %695 = vadd.xlane.f32.xlu0 %v694
    %v696 = vpop.xlane.xlu0 %695
    %v697 = vsel %vm597, %v374, 0.0
    %698 = vadd.xlane.f32.xlu0 %v697
    %v699 = vpop.xlane.xlu0 %698
    %v700 = vsel %vm597, %v375, 0.0
    %701 = vadd.xlane.f32.xlu0 %v700
    %v702 = vpop.xlane.xlu0 %701
    %v703 = vsel %vm597, %v376, 0.0
    %704 = vadd.xlane.f32.xlu0 %v703
    %v705 = vpop.xlane.xlu0 %704
    %v706 = vsel %vm597, %v377, 0.0
    %707 = vadd.xlane.f32.xlu0 %v706
    %v708 = vpop.xlane.xlu0 %707
    %v709 = vsel %vm597, %v378, 0.0
    %710 = vadd.xlane.f32.xlu0 %v709
    %v711 = vpop.xlane.xlu0 %710
    %v712 = vsel %vm597, %v379, 0.0
    %713 = vadd.xlane.f32.xlu0 %v712
    %v714 = vpop.xlane.xlu0 %713
    %v715 = vsel %vm597, %v380, 0.0
    %716 = vadd.xlane.f32.xlu0 %v715
    %v717 = vpop.xlane.xlu0 %716
    %v718 = vsel %vm597, %v381, 0.0
    %719 = vadd.xlane.f32.xlu0 %v718
    %v720 = vpop.xlane.xlu0 %719
    %v721 = vsel %vm597, %v382, 0.0
    %722 = vadd.xlane.f32.xlu0 %v721
    %v723 = vpop.xlane.xlu0 %722
    %v724 = vsel %vm597, %v383, 0.0
    %725 = vadd.xlane.f32.xlu0 %v724
    %v726 = vpop.xlane.xlu0 %725
    %v727 = vsel %vm597, %v384, 0.0
    %728 = vadd.xlane.f32.xlu0 %v727
    %v729 = vpop.xlane.xlu0 %728
    %v730 = vsel %vm597, %v385, 0.0
    %731 = vadd.xlane.f32.xlu0 %v730
    %v732 = vpop.xlane.xlu0 %731
    %v733 = vsel %vm597, %v386, 0.0
    %734 = vadd.xlane.f32.xlu0 %v733
    %v735 = vpop.xlane.xlu0 %734
    %v736 = vsel %vm597, %v387, 0.0
    %737 = vadd.xlane.f32.xlu0 %v736
    %v738 = vpop.xlane.xlu0 %737
    %v739 = vsel %vm597, %v388, 0.0
    %740 = vadd.xlane.f32.xlu0 %v739
    %v741 = vpop.xlane.xlu0 %740
    %v742 = vsel %vm597, %v389, 0.0
    %743 = vadd.xlane.f32.xlu0 %v742
    %v744 = vpop.xlane.xlu0 %743
    %v745 = vsel %vm597, %v390, 0.0
    %746 = vadd.xlane.f32.xlu0 %v745
    %v747 = vpop.xlane.xlu0 %746
    %v748 = vsel %vm597, %v391, 0.0
    %749 = vadd.xlane.f32.xlu0 %v748
    %v750 = vpop.xlane.xlu0 %749
    %v751 = vsel %vm597, %v392, 0.0
    %752 = vadd.xlane.f32.xlu0 %v751
    %v753 = vpop.xlane.xlu0 %752
    %v754 = vsel %vm597, %v393, 0.0
    %755 = vadd.xlane.f32.xlu0 %v754
    %v756 = vpop.xlane.xlu0 %755
    %v757 = vsel %vm597, %v394, 0.0
    %758 = vadd.xlane.f32.xlu0 %v757
    %v759 = vpop.xlane.xlu0 %758
    %v760 = vsel %vm597, %v395, 0.0
    %761 = vadd.xlane.f32.xlu0 %v760
    %v762 = vpop.xlane.xlu0 %761
    %v763 = vsel %vm597, %v396, 0.0
    %764 = vadd.xlane.f32.xlu0 %v763
    %v765 = vpop.xlane.xlu0 %764
    %v766 = vsel %vm597, %v397, 0.0
    %767 = vadd.xlane.f32.xlu0 %v766
    %v768 = vpop.xlane.xlu0 %767
    %v769 = vsel %vm597, %v398, 0.0
    %770 = vadd.xlane.f32.xlu0 %v769
    %v771 = vpop.xlane.xlu0 %770
    %v772 = vsel %vm597, %v399, 0.0
    %773 = vadd.xlane.f32.xlu0 %v772
    %v774 = vpop.xlane.xlu0 %773
    %v775 = vsel %vm597, %v400, 0.0
    %776 = vadd.xlane.f32.xlu0 %v775
    %v777 = vpop.xlane.xlu0 %776
    %v778 = vsel %vm597, %v401, 0.0
    %779 = vadd.xlane.f32.xlu0 %v778
    %v780 = vpop.xlane.xlu0 %779
    %v781 = vsel %vm597, %v402, 0.0
    %782 = vadd.xlane.f32.xlu0 %v781
    %v783 = vpop.xlane.xlu0 %782
    %v784 = vsel %vm597, %v403, 0.0
    %785 = vadd.xlane.f32.xlu0 %v784
    %v786 = vpop.xlane.xlu0 %785
    %v787 = vsel %vm597, %v404, 0.0
    %788 = vadd.xlane.f32.xlu0 %v787
    %v789 = vpop.xlane.xlu0 %788
    %v790 = vsel %vm597, %v405, 0.0
    %791 = vadd.xlane.f32.xlu0 %v790
    %v792 = vpop.xlane.xlu0 %791
    %v793 = vsel %vm597, %v406, 0.0
    %794 = vadd.xlane.f32.xlu0 %v793
    %v795 = vpop.xlane.xlu0 %794
    %v796 = vsel %vm597, %v407, 0.0
    %797 = vadd.xlane.f32.xlu0 %v796
    %v798 = vpop.xlane.xlu0 %797
    %v799 = vsel %vm597, %v408, 0.0
    %800 = vadd.xlane.f32.xlu0 %v799
    %v801 = vpop.xlane.xlu0 %800
    %v802 = vsel %vm597, %v409, 0.0
    %803 = vadd.xlane.f32.xlu0 %v802
    %v804 = vpop.xlane.xlu0 %803
    %v805 = vsel %vm597, %v410, 0.0
    %806 = vadd.xlane.f32.xlu0 %v805
    %v807 = vpop.xlane.xlu0 %806
    %v808 = vsel %vm597, %v411, 0.0
    %809 = vadd.xlane.f32.xlu0 %v808
    %v810 = vpop.xlane.xlu0 %809
    %v811 = vsel %vm597, %v412, 0.0
    %812 = vadd.xlane.f32.xlu0 %v811
    %v813 = vpop.xlane.xlu0 %812
    %v814 = vsel %vm597, %v413, 0.0
    %815 = vadd.xlane.f32.xlu0 %v814
    %v816 = vpop.xlane.xlu0 %815
    %v817 = vsel %vm597, %v414, 0.0
    %818 = vadd.xlane.f32.xlu0 %v817
    %v819 = vpop.xlane.xlu0 %818
    %v820 = vsel %vm597, %v415, 0.0
    %821 = vadd.xlane.f32.xlu0 %v820
    %v822 = vpop.xlane.xlu0 %821
    %v823 = vsel %vm597, %v416, 0.0
    %824 = vadd.xlane.f32.xlu0 %v823
    %v825 = vpop.xlane.xlu0 %824
    %v826 = vsel %vm597, %v417, 0.0
    %827 = vadd.xlane.f32.xlu0 %v826
    %v828 = vpop.xlane.xlu0 %827
    %v829 = vsel %vm597, %v418, 0.0
    %830 = vadd.xlane.f32.xlu0 %v829
    %v831 = vpop.xlane.xlu0 %830
    %v832 = vsel %vm597, %v419, 0.0
    %833 = vadd.xlane.f32.xlu0 %v832
    %v834 = vpop.xlane.xlu0 %833
    %v835 = vsel %vm597, %v420, 0.0
    %836 = vadd.xlane.f32.xlu0 %v835
    %v837 = vpop.xlane.xlu0 %836
    %v838 = vsel %vm597, %v421, 0.0
    %839 = vadd.xlane.f32.xlu0 %v838
    %v840 = vpop.xlane.xlu0 %839
    %v841 = vsel %vm597, %v422, 0.0
    %842 = vadd.xlane.f32.xlu0 %v841
    %v843 = vpop.xlane.xlu0 %842
    %v844 = vsel %vm597, %v423, 0.0
    %845 = vadd.xlane.f32.xlu0 %v844
    %v846 = vpop.xlane.xlu0 %845
    %v847 = vsel %vm597, %v424, 0.0
    %848 = vadd.xlane.f32.xlu0 %v847
    %v849 = vpop.xlane.xlu0 %848
    %v850 = vsel %vm597, %v425, 0.0
    %851 = vadd.xlane.f32.xlu0 %v850
    %v852 = vpop.xlane.xlu0 %851
    %v853 = vsel %vm597, %v426, 0.0
    %854 = vadd.xlane.f32.xlu0 %v853
    %v855 = vpop.xlane.xlu0 %854
    %v856 = vsel %vm597, %v427, 0.0
    %857 = vadd.xlane.f32.xlu0 %v856
    %v858 = vpop.xlane.xlu0 %857
    %v859 = vsel %vm597, %v428, 0.0
    %860 = vadd.xlane.f32.xlu0 %v859
    %v861 = vpop.xlane.xlu0 %860
    %v862 = vsel %vm597, %v429, 0.0
    %863 = vadd.xlane.f32.xlu0 %v862
    %v864 = vpop.xlane.xlu0 %863
    %v865 = vsel %vm597, %v430, 0.0
    %866 = vadd.xlane.f32.xlu0 %v865
    %v867 = vpop.xlane.xlu0 %866
    %v868 = vsel %vm597, %v431, 0.0
    %869 = vadd.xlane.f32.xlu0 %v868
    %v870 = vpop.xlane.xlu0 %869
    %v871 = vsel %vm597, %v432, 0.0
    %872 = vadd.xlane.f32.xlu0 %v871
    %v873 = vpop.xlane.xlu0 %872
    %v874 = vsel %vm597, %v433, 0.0
    %875 = vadd.xlane.f32.xlu0 %v874
    %v876 = vpop.xlane.xlu0 %875
    %v877 = vsel %vm597, %v434, 0.0
    %878 = vadd.xlane.f32.xlu0 %v877
    %v879 = vpop.xlane.xlu0 %878
    %v880 = vsel %vm597, %v435, 0.0
    %881 = vadd.xlane.f32.xlu0 %v880
    %v882 = vpop.xlane.xlu0 %881
    %v883 = vsel %vm597, %v436, 0.0
    %884 = vadd.xlane.f32.xlu0 %v883
    %v885 = vpop.xlane.xlu0 %884
    %v886 = vsel %vm597, %v437, 0.0
    %887 = vadd.xlane.f32.xlu0 %v886
    %v888 = vpop.xlane.xlu0 %887
    %v889 = vsel %vm597, %v438, 0.0
    %890 = vadd.xlane.f32.xlu0 %v889
    %v891 = vpop.xlane.xlu0 %890
    %v892 = vsel %vm597, %v439, 0.0
    %893 = vadd.xlane.f32.xlu0 %v892
    %v894 = vpop.xlane.xlu0 %893
    %v895 = vsel %vm597, %v440, 0.0
    %896 = vadd.xlane.f32.xlu0 %v895
    %v897 = vpop.xlane.xlu0 %896
    %v898 = vsel %vm597, %v441, 0.0
    %899 = vadd.xlane.f32.xlu0 %v898
    %v900 = vpop.xlane.xlu0 %899
    %v901 = vsel %vm597, %v442, 0.0
    %902 = vadd.xlane.f32.xlu0 %v901
    %v903 = vpop.xlane.xlu0 %902
    %v904 = vsel %vm597, %v443, 0.0
    %905 = vadd.xlane.f32.xlu0 %v904
    %v906 = vpop.xlane.xlu0 %905
    %v907 = vsel %vm597, %v444, 0.0
    %908 = vadd.xlane.f32.xlu0 %v907
    %v909 = vpop.xlane.xlu0 %908
    %v910 = vsel %vm597, %v445, 0.0
    %911 = vadd.xlane.f32.xlu0 %v910
    %v912 = vpop.xlane.xlu0 %911
    %v913 = vsel %vm597, %v446, 0.0
    %914 = vadd.xlane.f32.xlu0 %v913
    %v915 = vpop.xlane.xlu0 %914
    %v916 = vsel %vm597, %v447, 0.0
    %917 = vadd.xlane.f32.xlu0 %v916
    %v918 = vpop.xlane.xlu0 %917
    %v919 = vsel %vm597, %v448, 0.0
    %920 = vadd.xlane.f32.xlu0 %v919
    %v921 = vpop.xlane.xlu0 %920
    %v922 = vsel %vm597, %v449, 0.0
    %923 = vadd.xlane.f32.xlu0 %v922
    %v924 = vpop.xlane.xlu0 %923
    %v925 = vsel %vm597, %v450, 0.0
    %926 = vadd.xlane.f32.xlu0 %v925
    %v927 = vpop.xlane.xlu0 %926
    %v928 = vsel %vm597, %v451, 0.0
    %929 = vadd.xlane.f32.xlu0 %v928
    %v930 = vpop.xlane.xlu0 %929
    %v931 = vsel %vm597, %v452, 0.0
    %932 = vadd.xlane.f32.xlu0 %v931
    %v933 = vpop.xlane.xlu0 %932
    %v934 = vsel %vm597, %v453, 0.0
    %935 = vadd.xlane.f32.xlu0 %v934
    %v936 = vpop.xlane.xlu0 %935
    %v937 = vsel %vm597, %v454, 0.0
    %938 = vadd.xlane.f32.xlu0 %v937
    %v939 = vpop.xlane.xlu0 %938
    %v940 = vsel %vm597, %v455, 0.0
    %941 = vadd.xlane.f32.xlu0 %v940
    %v942 = vpop.xlane.xlu0 %941
    %v943 = vsel %vm597, %v456, 0.0
    %944 = vadd.xlane.f32.xlu0 %v943
    %v945 = vpop.xlane.xlu0 %944
    %v946 = vsel %vm597, %v457, 0.0
    %947 = vadd.xlane.f32.xlu0 %v946
    %v948 = vpop.xlane.xlu0 %947
    %v949 = vsel %vm597, %v458, 0.0
    %950 = vadd.xlane.f32.xlu0 %v949
    %v951 = vpop.xlane.xlu0 %950
    %v952 = vsel %vm597, %v459, 0.0
    %953 = vadd.xlane.f32.xlu0 %v952
    %v954 = vpop.xlane.xlu0 %953
    %v955 = vsel %vm597, %v460, 0.0
    %956 = vadd.xlane.f32.xlu0 %v955
    %v957 = vpop.xlane.xlu0 %956
    %v958 = vsel %vm597, %v461, 0.0
    %959 = vadd.xlane.f32.xlu0 %v958
    %v960 = vpop.xlane.xlu0 %959
    %v961 = vsel %vm597, %v462, 0.0
    %962 = vadd.xlane.f32.xlu0 %v961
    %v963 = vpop.xlane.xlu0 %962
    %v964 = vsel %vm597, %v463, 0.0
    %965 = vadd.xlane.f32.xlu0 %v964
    %v966 = vpop.xlane.xlu0 %965
    %v967 = vsel %vm597, %v464, 0.0
    %968 = vadd.xlane.f32.xlu0 %v967
    %v969 = vpop.xlane.xlu0 %968
    %v970 = vsel %vm597, %v465, 0.0
    %971 = vadd.xlane.f32.xlu0 %v970
    %v972 = vpop.xlane.xlu0 %971
    %v973 = vsel %vm597, %v466, 0.0
    %974 = vadd.xlane.f32.xlu0 %v973
    %v975 = vpop.xlane.xlu0 %974
    %v976 = vsel %vm597, %v467, 0.0
    %977 = vadd.xlane.f32.xlu0 %v976
    %v978 = vpop.xlane.xlu0 %977
    %v979 = vsel %vm597, %v468, 0.0
    %980 = vadd.xlane.f32.xlu0 %v979
    %v981 = vpop.xlane.xlu0 %980
    %v982 = vsel %vm597, %v469, 0.0
    %983 = vadd.xlane.f32.xlu0 %v982
    %v984 = vpop.xlane.xlu0 %983
    %v985 = vsel %vm597, %v470, 0.0
    %986 = vadd.xlane.f32.xlu0 %v985
    %v987 = vpop.xlane.xlu0 %986
    %v988 = vsel %vm597, %v471, 0.0
    %989 = vadd.xlane.f32.xlu0 %v988
    %v990 = vpop.xlane.xlu0 %989
    %v991 = vsel %vm597, %v472, 0.0
    %992 = vadd.xlane.f32.xlu0 %v991
    %v993 = vpop.xlane.xlu0 %992
    %v994 = vsel %vm597, %v473, 0.0
    %995 = vadd.xlane.f32.xlu0 %v994
    %v996 = vpop.xlane.xlu0 %995
    %v997 = vsel %vm597, %v474, 0.0
    %998 = vadd.xlane.f32.xlu0 %v997
    %v999 = vpop.xlane.xlu0 %998
    %v1000 = vsel %vm597, %v475, 0.0
    %1001 = vadd.xlane.f32.xlu0 %v1000
    %v1002 = vpop.xlane.xlu0 %1001
    %v1003 = vsel %vm597, %v476, 0.0
    %1004 = vadd.xlane.f32.xlu0 %v1003
    %v1005 = vpop.xlane.xlu0 %1004
    %v1006 = vsel %vm597, %v477, 0.0
    %1007 = vadd.xlane.f32.xlu0 %v1006
    %v1008 = vpop.xlane.xlu0 %1007
    %v1009 = vsel %vm597, %v478, 0.0
    %1010 = vadd.xlane.f32.xlu0 %v1009
    %v1011 = vpop.xlane.xlu0 %1010
    %v1012 = vsel %vm597, %v479, 0.0
    %1013 = vadd.xlane.f32.xlu0 %v1012
    %v1014 = vpop.xlane.xlu0 %1013
    %v1015 = vsel %vm597, %v480, 0.0
    %1016 = vadd.xlane.f32.xlu0 %v1015
    %v1017 = vpop.xlane.xlu0 %1016
    %v1018 = vsel %vm597, %v481, 0.0
    %1019 = vadd.xlane.f32.xlu0 %v1018
    %v1020 = vpop.xlane.xlu0 %1019
    %v1021 = vsel %vm597, %v482, 0.0
    %1022 = vadd.xlane.f32.xlu0 %v1021
    %v1023 = vpop.xlane.xlu0 %1022
    %v1024 = vsel %vm597, %v483, 0.0
    %1025 = vadd.xlane.f32.xlu0 %v1024
    %v1026 = vpop.xlane.xlu0 %1025
    %v1027 = vsel %vm597, %v484, 0.0
    %1028 = vadd.xlane.f32.xlu0 %v1027
    %v1029 = vpop.xlane.xlu0 %1028
    %v1030 = vsel %vm597, %v485, 0.0
    %1031 = vadd.xlane.f32.xlu0 %v1030
    %v1032 = vpop.xlane.xlu0 %1031
    %v1033 = vsel %vm597, %v486, 0.0
    %1034 = vadd.xlane.f32.xlu0 %v1033
    %v1035 = vpop.xlane.xlu0 %1034
    %v1036 = vsel %vm597, %v487, 0.0
    %1037 = vadd.xlane.f32.xlu0 %v1036
    %v1038 = vpop.xlane.xlu0 %1037
    %v1039 = vsel %vm597, %v488, 0.0
    %1040 = vadd.xlane.f32.xlu0 %v1039
    %v1041 = vpop.xlane.xlu0 %1040
    %v1042 = vsel %vm597, %v489, 0.0
    %1043 = vadd.xlane.f32.xlu0 %v1042
    %v1044 = vpop.xlane.xlu0 %1043
    %v1045 = vsel %vm597, %v490, 0.0
    %1046 = vadd.xlane.f32.xlu0 %v1045
    %v1047 = vpop.xlane.xlu0 %1046
    %v1048 = vsel %vm597, %v491, 0.0
    %1049 = vadd.xlane.f32.xlu0 %v1048
    %v1050 = vpop.xlane.xlu0 %1049
    %v1051 = vsel %vm597, %v492, 0.0
    %1052 = vadd.xlane.f32.xlu0 %v1051
    %v1053 = vpop.xlane.xlu0 %1052
    %v1054 = vsel %vm597, %v493, 0.0
    %1055 = vadd.xlane.f32.xlu0 %v1054
    %v1056 = vpop.xlane.xlu0 %1055
    %v1057 = vsel %vm597, %v494, 0.0
    %1058 = vadd.xlane.f32.xlu0 %v1057
    %v1059 = vpop.xlane.xlu0 %1058
    %v1060 = vsel %vm597, %v495, 0.0
    %1061 = vadd.xlane.f32.xlu0 %v1060
    %v1062 = vpop.xlane.xlu0 %1061
    %v1063 = vsel %vm597, %v496, 0.0
    %1064 = vadd.xlane.f32.xlu0 %v1063
    %v1065 = vpop.xlane.xlu0 %1064
    %v1066 = vsel %vm597, %v497, 0.0
    %1067 = vadd.xlane.f32.xlu0 %v1066
    %v1068 = vpop.xlane.xlu0 %1067
    %v1069 = vsel %vm597, %v498, 0.0
    %1070 = vadd.xlane.f32.xlu0 %v1069
    %v1071 = vpop.xlane.xlu0 %1070
    %v1072 = vsel %vm597, %v499, 0.0
    %1073 = vadd.xlane.f32.xlu0 %v1072
    %v1074 = vpop.xlane.xlu0 %1073
    %v1075 = vsel %vm597, %v500, 0.0
    %1076 = vadd.xlane.f32.xlu0 %v1075
    %v1077 = vpop.xlane.xlu0 %1076
    %v1078 = vsel %vm597, %v501, 0.0
    %1079 = vadd.xlane.f32.xlu0 %v1078
    %v1080 = vpop.xlane.xlu0 %1079
    %v1081 = vsel %vm597, %v502, 0.0
    %1082 = vadd.xlane.f32.xlu0 %v1081
    %v1083 = vpop.xlane.xlu0 %1082
    %v1084 = vsel %vm597, %v503, 0.0
    %1085 = vadd.xlane.f32.xlu0 %v1084
    %v1086 = vpop.xlane.xlu0 %1085
    %v1087 = vsel %vm597, %v504, 0.0
    %1088 = vadd.xlane.f32.xlu0 %v1087
    %v1089 = vpop.xlane.xlu0 %1088
    %v1090 = vsel %vm597, %v505, 0.0
    %1091 = vadd.xlane.f32.xlu0 %v1090
    %v1092 = vpop.xlane.xlu0 %1091
    %v1093 = vsel %vm597, %v506, 0.0
    %1094 = vadd.xlane.f32.xlu0 %v1093
    %v1095 = vpop.xlane.xlu0 %1094
    %v1096 = vsel %vm597, %v507, 0.0
    %1097 = vadd.xlane.f32.xlu0 %v1096
    %v1098 = vpop.xlane.xlu0 %1097
    %v1099 = vsel %vm597, %v508, 0.0
    %1100 = vadd.xlane.f32.xlu0 %v1099
    %v1101 = vpop.xlane.xlu0 %1100
    %v1102 = vsel %vm597, %v509, 0.0
    %1103 = vadd.xlane.f32.xlu0 %v1102
    %v1104 = vpop.xlane.xlu0 %1103
    %v1105 = vsel %vm597, %v510, 0.0
    %1106 = vadd.xlane.f32.xlu0 %v1105
    %v1107 = vpop.xlane.xlu0 %1106
    %v1108 = vsel %vm597, %v511, 0.0
    %1109 = vadd.xlane.f32.xlu0 %v1108
    %v1110 = vpop.xlane.xlu0 %1109
    %v1111 = vsel %vm597, %v512, 0.0
    %1112 = vadd.xlane.f32.xlu0 %v1111
    %v1113 = vpop.xlane.xlu0 %1112
    %v1114 = vsel %vm597, %v513, 0.0
    %1115 = vadd.xlane.f32.xlu0 %v1114
    %v1116 = vpop.xlane.xlu0 %1115
    %v1117 = vsel %vm597, %v514, 0.0
    %1118 = vadd.xlane.f32.xlu0 %v1117
    %v1119 = vpop.xlane.xlu0 %1118
    %v1120 = vsel %vm597, %v515, 0.0
    %1121 = vadd.xlane.f32.xlu0 %v1120
    %v1122 = vpop.xlane.xlu0 %1121
    %v1123 = vsel %vm597, %v516, 0.0
    %1124 = vadd.xlane.f32.xlu0 %v1123
    %v1125 = vpop.xlane.xlu0 %1124
    %v1126 = vsel %vm597, %v517, 0.0
    %1127 = vadd.xlane.f32.xlu0 %v1126
    %v1128 = vpop.xlane.xlu0 %1127
    %v1129 = vsel %vm597, %v518, 0.0
    %1130 = vadd.xlane.f32.xlu0 %v1129
    %v1131 = vpop.xlane.xlu0 %1130
    %v1132 = vsel %vm597, %v519, 0.0
    %1133 = vadd.xlane.f32.xlu0 %v1132
    %v1134 = vpop.xlane.xlu0 %1133
    %v1135 = vsel %vm597, %v520, 0.0
    %1136 = vadd.xlane.f32.xlu0 %v1135
    %v1137 = vpop.xlane.xlu0 %1136
    %v1138 = vsel %vm597, %v521, 0.0
    %1139 = vadd.xlane.f32.xlu0 %v1138
    %v1140 = vpop.xlane.xlu0 %1139
    %v1141 = vsel %vm597, %v522, 0.0
    %1142 = vadd.xlane.f32.xlu0 %v1141
    %v1143 = vpop.xlane.xlu0 %1142
    %v1144 = vsel %vm597, %v523, 0.0
    %1145 = vadd.xlane.f32.xlu0 %v1144
    %v1146 = vpop.xlane.xlu0 %1145
    %v1147 = vsel %vm597, %v524, 0.0
    %1148 = vadd.xlane.f32.xlu0 %v1147
    %v1149 = vpop.xlane.xlu0 %1148
    %v1150 = vsel %vm597, %v525, 0.0
    %1151 = vadd.xlane.f32.xlu0 %v1150
    %v1152 = vpop.xlane.xlu0 %1151
    %v1153 = vsel %vm597, %v526, 0.0
    %1154 = vadd.xlane.f32.xlu0 %v1153
    %v1155 = vpop.xlane.xlu0 %1154
    %v1156 = vsel %vm597, %v527, 0.0
    %1157 = vadd.xlane.f32.xlu0 %v1156
    %v1158 = vpop.xlane.xlu0 %1157
    %v1159 = vsel %vm597, %v528, 0.0
    %1160 = vadd.xlane.f32.xlu0 %v1159
    %v1161 = vpop.xlane.xlu0 %1160
    %v1162 = vsel %vm597, %v529, 0.0
    %1163 = vadd.xlane.f32.xlu0 %v1162
    %v1164 = vpop.xlane.xlu0 %1163
    %v1165 = vsel %vm597, %v530, 0.0
    %1166 = vadd.xlane.f32.xlu0 %v1165
    %v1167 = vpop.xlane.xlu0 %1166
    %v1168 = vsel %vm597, %v531, 0.0
    %1169 = vadd.xlane.f32.xlu0 %v1168
    %v1170 = vpop.xlane.xlu0 %1169
    %v1171 = vsel %vm597, %v532, 0.0
    %1172 = vadd.xlane.f32.xlu0 %v1171
    %v1173 = vpop.xlane.xlu0 %1172
    %v1174 = vsel %vm597, %v533, 0.0
    %1175 = vadd.xlane.f32.xlu0 %v1174
    %v1176 = vpop.xlane.xlu0 %1175
    %v1177 = vsel %vm597, %v534, 0.0
    %1178 = vadd.xlane.f32.xlu0 %v1177
    %v1179 = vpop.xlane.xlu0 %1178
    %v1180 = vsel %vm597, %v535, 0.0
    %1181 = vadd.xlane.f32.xlu0 %v1180
    %v1182 = vpop.xlane.xlu0 %1181
    %v1183 = vsel %vm597, %v536, 0.0
    %1184 = vadd.xlane.f32.xlu0 %v1183
    %v1185 = vpop.xlane.xlu0 %1184
    %v1186 = vsel %vm597, %v537, 0.0
    %1187 = vadd.xlane.f32.xlu0 %v1186
    %v1188 = vpop.xlane.xlu0 %1187
    %v1189 = vsel %vm597, %v538, 0.0
    %1190 = vadd.xlane.f32.xlu0 %v1189
    %v1191 = vpop.xlane.xlu0 %1190
    %v1192 = vsel %vm597, %v539, 0.0
    %1193 = vadd.xlane.f32.xlu0 %v1192
    %v1194 = vpop.xlane.xlu0 %1193
    %v1195 = vsel %vm597, %v540, 0.0
    %1196 = vadd.xlane.f32.xlu0 %v1195
    %v1197 = vpop.xlane.xlu0 %1196
    %v1198 = vsel %vm597, %v541, 0.0
    %1199 = vadd.xlane.f32.xlu0 %v1198
    %v1200 = vpop.xlane.xlu0 %1199
    %v1201 = vsel %vm597, %v542, 0.0
    %1202 = vadd.xlane.f32.xlu0 %v1201
    %v1203 = vpop.xlane.xlu0 %1202
    %v1204 = vsel %vm597, %v543, 0.0
    %1205 = vadd.xlane.f32.xlu0 %v1204
    %v1206 = vpop.xlane.xlu0 %1205
    %v1207 = vsel %vm597, %v544, 0.0
    %1208 = vadd.xlane.f32.xlu0 %v1207
    %v1209 = vpop.xlane.xlu0 %1208
    %v1210 = vsel %vm597, %v545, 0.0
    %1211 = vadd.xlane.f32.xlu0 %v1210
    %v1212 = vpop.xlane.xlu0 %1211
    %v1213 = vsel %vm597, %v546, 0.0
    %1214 = vadd.xlane.f32.xlu0 %v1213
    %v1215 = vpop.xlane.xlu0 %1214
    %v1216 = vsel %vm597, %v547, 0.0
    %1217 = vadd.xlane.f32.xlu0 %v1216
    %v1218 = vpop.xlane.xlu0 %1217
    %v1219 = vsel %vm597, %v548, 0.0
    %1220 = vadd.xlane.f32.xlu0 %v1219
    %v1221 = vpop.xlane.xlu0 %1220
    %v1222 = vsel %vm597, %v549, 0.0
    %1223 = vadd.xlane.f32.xlu0 %v1222
    %v1224 = vpop.xlane.xlu0 %1223
    %v1225 = vsel %vm597, %v550, 0.0
    %1226 = vadd.xlane.f32.xlu0 %v1225
    %v1227 = vpop.xlane.xlu0 %1226
    %v1228 = vsel %vm597, %v551, 0.0
    %1229 = vadd.xlane.f32.xlu0 %v1228
    %v1230 = vpop.xlane.xlu0 %1229
    %v1231 = vsel %vm597, %v552, 0.0
    %1232 = vadd.xlane.f32.xlu0 %v1231
    %v1233 = vpop.xlane.xlu0 %1232
    %v1234 = vsel %vm597, %v553, 0.0
    %1235 = vadd.xlane.f32.xlu0 %v1234
    %v1236 = vpop.xlane.xlu0 %1235
    %v1237 = vsel %vm597, %v554, 0.0
    %1238 = vadd.xlane.f32.xlu0 %v1237
    %v1239 = vpop.xlane.xlu0 %1238
    %v1240 = vsel %vm597, %v555, 0.0
    %1241 = vadd.xlane.f32.xlu0 %v1240
    %v1242 = vpop.xlane.xlu0 %1241
    %v1243 = vsel %vm597, %v556, 0.0
    %1244 = vadd.xlane.f32.xlu0 %v1243
    %v1245 = vpop.xlane.xlu0 %1244
    %v1246 = vsel %vm597, %v557, 0.0
    %1247 = vadd.xlane.f32.xlu0 %v1246
    %v1248 = vpop.xlane.xlu0 %1247
    %v1249 = vsel %vm597, %v558, 0.0
    %1250 = vadd.xlane.f32.xlu0 %v1249
    %v1251 = vpop.xlane.xlu0 %1250
    %v1252 = vsel %vm597, %v559, 0.0
    %1253 = vadd.xlane.f32.xlu0 %v1252
    %v1254 = vpop.xlane.xlu0 %1253
    %v1255 = vsel %vm597, %v560, 0.0
    %1256 = vadd.xlane.f32.xlu0 %v1255
    %v1257 = vpop.xlane.xlu0 %1256
    %v1258 = vsel %vm597, %v561, 0.0
    %1259 = vadd.xlane.f32.xlu0 %v1258
    %v1260 = vpop.xlane.xlu0 %1259
    %v1261 = vsel %vm597, %v562, 0.0
    %1262 = vadd.xlane.f32.xlu0 %v1261
    %v1263 = vpop.xlane.xlu0 %1262
    %v1264 = vsel %vm597, %v563, 0.0
    %1265 = vadd.xlane.f32.xlu0 %v1264
    %v1266 = vpop.xlane.xlu0 %1265
    %v1267 = vsel %vm597, %v564, 0.0
    %1268 = vadd.xlane.f32.xlu0 %v1267
    %v1269 = vpop.xlane.xlu0 %1268
    %v1270 = vsel %vm597, %v565, 0.0
    %1271 = vadd.xlane.f32.xlu0 %v1270
    %v1272 = vpop.xlane.xlu0 %1271
    %v1273 = vsel %vm597, %v566, 0.0
    %1274 = vadd.xlane.f32.xlu0 %v1273
    %v1275 = vpop.xlane.xlu0 %1274
    %v1276 = vsel %vm597, %v567, 0.0
    %1277 = vadd.xlane.f32.xlu0 %v1276
    %v1278 = vpop.xlane.xlu0 %1277
    %v1279 = vsel %vm597, %v568, 0.0
    %1280 = vadd.xlane.f32.xlu0 %v1279
    %v1281 = vpop.xlane.xlu0 %1280
    %v1282 = vsel %vm597, %v569, 0.0
    %1283 = vadd.xlane.f32.xlu0 %v1282
    %v1284 = vpop.xlane.xlu0 %1283
    %v1285 = vsel %vm597, %v570, 0.0
    %1286 = vadd.xlane.f32.xlu0 %v1285
    %v1287 = vpop.xlane.xlu0 %1286
    %v1288 = vsel %vm597, %v571, 0.0
    %1289 = vadd.xlane.f32.xlu0 %v1288
    %v1290 = vpop.xlane.xlu0 %1289
    %v1291 = vsel %vm597, %v572, 0.0
    %1292 = vadd.xlane.f32.xlu0 %v1291
    %v1293 = vpop.xlane.xlu0 %1292
    %v1294 = vsel %vm597, %v573, 0.0
    %1295 = vadd.xlane.f32.xlu0 %v1294
    %v1296 = vpop.xlane.xlu0 %1295
    %v1297 = vsel %vm597, %v574, 0.0
    %1298 = vadd.xlane.f32.xlu0 %v1297
    %v1299 = vpop.xlane.xlu0 %1298
    %v1300 = vsel %vm597, %v575, 0.0
    %1301 = vadd.xlane.f32.xlu0 %v1300
    %v1302 = vpop.xlane.xlu0 %1301
    %v1303 = vsel %vm597, %v576, 0.0
    %1304 = vadd.xlane.f32.xlu0 %v1303
    %v1305 = vpop.xlane.xlu0 %1304
    %v1306 = vsel %vm597, %v577, 0.0
    %1307 = vadd.xlane.f32.xlu0 %v1306
    %v1308 = vpop.xlane.xlu0 %1307
    %v1309 = vsel %vm597, %v578, 0.0
    %1310 = vadd.xlane.f32.xlu0 %v1309
    %v1311 = vpop.xlane.xlu0 %1310
    %v1312 = vsel %vm597, %v579, 0.0
    %1313 = vadd.xlane.f32.xlu0 %v1312
    %v1314 = vpop.xlane.xlu0 %1313
    %v1315 = vsel %vm597, %v580, 0.0
    %1316 = vadd.xlane.f32.xlu0 %v1315
    %v1317 = vpop.xlane.xlu0 %1316
    %v1318 = vsel %vm597, %v581, 0.0
    %1319 = vadd.xlane.f32.xlu0 %v1318
    %v1320 = vpop.xlane.xlu0 %1319
    %v1321 = vsel %vm597, %v582, 0.0
    %1322 = vadd.xlane.f32.xlu0 %v1321
    %v1323 = vpop.xlane.xlu0 %1322
    %v1324 = vsel %vm597, %v583, 0.0
    %1325 = vadd.xlane.f32.xlu0 %v1324
    %v1326 = vpop.xlane.xlu0 %1325
    %v1327 = vsel %vm597, %v584, 0.0
    %1328 = vadd.xlane.f32.xlu0 %v1327
    %v1329 = vpop.xlane.xlu0 %1328
    %v1330 = vsel %vm597, %v585, 0.0
    %1331 = vadd.xlane.f32.xlu0 %v1330
    %v1332 = vpop.xlane.xlu0 %1331
    %v1333 = vsel %vm597, %v586, 0.0
    %1334 = vadd.xlane.f32.xlu0 %v1333
    %v1335 = vpop.xlane.xlu0 %1334
    %v1336 = vsel %vm597, %v587, 0.0
    %1337 = vadd.xlane.f32.xlu0 %v1336
    %v1338 = vpop.xlane.xlu0 %1337
    %v1339 = vsel %vm597, %v588, 0.0
    %1340 = vadd.xlane.f32.xlu0 %v1339
    %v1341 = vpop.xlane.xlu0 %1340
    %v1342 = vsel %vm597, %v589, 0.0
    %1343 = vadd.xlane.f32.xlu0 %v1342
    %v1344 = vpop.xlane.xlu0 %1343
    %v1345 = vsel %vm597, %v590, 0.0
    %1346 = vadd.xlane.f32.xlu0 %v1345
    %v1347 = vpop.xlane.xlu0 %1346
    %v1348 = vsel %vm597, %v591, 0.0
    %1349 = vadd.xlane.f32.xlu0 %v1348
    %v1350 = vpop.xlane.xlu0 %1349
    %v1351 = vsel %vm597, %v592, 0.0
    %1352 = vadd.xlane.f32.xlu0 %v1351
    %v1353 = vpop.xlane.xlu0 %1352
    %v1354 = vsel %vm597, %v593, 0.0
    %1355 = vadd.xlane.f32.xlu0 %v1354
    %v1356 = vpop.xlane.xlu0 %1355
    %v1357 = vsel %vm597, %v594, 0.0
    %1358 = vadd.xlane.f32.xlu0 %v1357
    %v1359 = vpop.xlane.xlu0 %1358
    %v1360 = vsel %vm597, %v595, 0.0
    %1361 = vadd.xlane.f32.xlu0 %v1360
    %v1362 = vpop.xlane.xlu0 %1361
    %v1363 = vsel %vm597, %v596, 0.0
    %1364 = vadd.xlane.f32.xlu0 %v1363
    %v1365 = vpop.xlane.xlu0 %1364
    %v1366 = vmul.f32 %v600, 0.0625
    %v1367 = vmul.f32 %v603, 0.0625
    %v1368 = vmul.f32 %v606, 0.0625
    %v1369 = vmul.f32 %v609, 0.0625
    %v1370 = vmul.f32 %v612, 0.0625
    %v1371 = vmul.f32 %v615, 0.0625
    %v1372 = vmul.f32 %v618, 0.0625
    %v1373 = vmul.f32 %v621, 0.0625
    %v1374 = vmul.f32 %v624, 0.0625
    %v1375 = vmul.f32 %v627, 0.0625
    %v1376 = vmul.f32 %v630, 0.0625
    %v1377 = vmul.f32 %v633, 0.0625
    %v1378 = vmul.f32 %v636, 0.0625
    %v1379 = vmul.f32 %v639, 0.0625
    %v1380 = vmul.f32 %v642, 0.0625
    %v1381 = vmul.f32 %v645, 0.0625
    %v1382 = vmul.f32 %v648, 0.0625
    %v1383 = vmul.f32 %v651, 0.0625
    %v1384 = vmul.f32 %v654, 0.0625
    %v1385 = vmul.f32 %v657, 0.0625
    %v1386 = vmul.f32 %v660, 0.0625
    %v1387 = vmul.f32 %v663, 0.0625
    %v1388 = vmul.f32 %v666, 0.0625
    %v1389 = vmul.f32 %v669, 0.0625
    %v1390 = vmul.f32 %v672, 0.0625
    %v1391 = vmul.f32 %v675, 0.0625
    %v1392 = vmul.f32 %v678, 0.0625
    %v1393 = vmul.f32 %v681, 0.0625
    %v1394 = vmul.f32 %v684, 0.0625
    %v1395 = vmul.f32 %v687, 0.0625
    %v1396 = vmul.f32 %v690, 0.0625
    %v1397 = vmul.f32 %v693, 0.0625
    %v1398 = vmul.f32 %v696, 0.0625
    %v1399 = vmul.f32 %v699, 0.0625
    %v1400 = vmul.f32 %v702, 0.0625
    %v1401 = vmul.f32 %v705, 0.0625
    %v1402 = vmul.f32 %v708, 0.0625
    %v1403 = vmul.f32 %v711, 0.0625
    %v1404 = vmul.f32 %v714, 0.0625
    %v1405 = vmul.f32 %v717, 0.0625
    %v1406 = vmul.f32 %v720, 0.0625
    %v1407 = vmul.f32 %v723, 0.0625
    %v1408 = vmul.f32 %v726, 0.0625
    %v1409 = vmul.f32 %v729, 0.0625
    %v1410 = vmul.f32 %v732, 0.0625
    %v1411 = vmul.f32 %v735, 0.0625
    %v1412 = vmul.f32 %v738, 0.0625
    %v1413 = vmul.f32 %v741, 0.0625
    %v1414 = vmul.f32 %v744, 0.0625
    %v1415 = vmul.f32 %v747, 0.0625
    %v1416 = vmul.f32 %v750, 0.0625
    %v1417 = vmul.f32 %v753, 0.0625
    %v1418 = vmul.f32 %v756, 0.0625
    %v1419 = vmul.f32 %v759, 0.0625
    %v1420 = vmul.f32 %v762, 0.0625
    %v1421 = vmul.f32 %v765, 0.0625
    %v1422 = vmul.f32 %v768, 0.0625
    %v1423 = vmul.f32 %v771, 0.0625
    %v1424 = vmul.f32 %v774, 0.0625
    %v1425 = vmul.f32 %v777, 0.0625
    %v1426 = vmul.f32 %v780, 0.0625
    %v1427 = vmul.f32 %v783, 0.0625
    %v1428 = vmul.f32 %v786, 0.0625
    %v1429 = vmul.f32 %v789, 0.0625
    %v1430 = vmul.f32 %v792, 0.0625
    %v1431 = vmul.f32 %v795, 0.0625
    %v1432 = vmul.f32 %v798, 0.0625
    %v1433 = vmul.f32 %v801, 0.0625
    %v1434 = vmul.f32 %v804, 0.0625
    %v1435 = vmul.f32 %v807, 0.0625
    %v1436 = vmul.f32 %v810, 0.0625
    %v1437 = vmul.f32 %v813, 0.0625
    %v1438 = vmul.f32 %v816, 0.0625
    %v1439 = vmul.f32 %v819, 0.0625
    %v1440 = vmul.f32 %v822, 0.0625
    %v1441 = vmul.f32 %v825, 0.0625
    %v1442 = vmul.f32 %v828, 0.0625
    %v1443 = vmul.f32 %v831, 0.0625
    %v1444 = vmul.f32 %v834, 0.0625
    %v1445 = vmul.f32 %v837, 0.0625
    %v1446 = vmul.f32 %v840, 0.0625
    %v1447 = vmul.f32 %v843, 0.0625
    %v1448 = vmul.f32 %v846, 0.0625
    %v1449 = vmul.f32 %v849, 0.0625
    %v1450 = vmul.f32 %v852, 0.0625
    %v1451 = vmul.f32 %v855, 0.0625
    %v1452 = vmul.f32 %v858, 0.0625
    %v1453 = vmul.f32 %v861, 0.0625
    %v1454 = vmul.f32 %v864, 0.0625
    %v1455 = vmul.f32 %v867, 0.0625
    %v1456 = vmul.f32 %v870, 0.0625
    %v1457 = vmul.f32 %v873, 0.0625
    %v1458 = vmul.f32 %v876, 0.0625
    %v1459 = vmul.f32 %v879, 0.0625
    %v1460 = vmul.f32 %v882, 0.0625
    %v1461 = vmul.f32 %v885, 0.0625
    %v1462 = vmul.f32 %v888, 0.0625
    %v1463 = vmul.f32 %v891, 0.0625
    %v1464 = vmul.f32 %v894, 0.0625
    %v1465 = vmul.f32 %v897, 0.0625
    %v1466 = vmul.f32 %v900, 0.0625
    %v1467 = vmul.f32 %v903, 0.0625
    %v1468 = vmul.f32 %v906, 0.0625
    %v1469 = vmul.f32 %v909, 0.0625
    %v1470 = vmul.f32 %v912, 0.0625
    %v1471 = vmul.f32 %v915, 0.0625
    %v1472 = vmul.f32 %v918, 0.0625
    %v1473 = vmul.f32 %v921, 0.0625
    %v1474 = vmul.f32 %v924, 0.0625
    %v1475 = vmul.f32 %v927, 0.0625
    %v1476 = vmul.f32 %v930, 0.0625
    %v1477 = vmul.f32 %v933, 0.0625
    %v1478 = vmul.f32 %v936, 0.0625
    %v1479 = vmul.f32 %v939, 0.0625
    %v1480 = vmul.f32 %v942, 0.0625
    %v1481 = vmul.f32 %v945, 0.0625
    %v1482 = vmul.f32 %v948, 0.0625
    %v1483 = vmul.f32 %v951, 0.0625
    %v1484 = vmul.f32 %v954, 0.0625
    %v1485 = vmul.f32 %v957, 0.0625
    %v1486 = vmul.f32 %v960, 0.0625
    %v1487 = vmul.f32 %v963, 0.0625
    %v1488 = vmul.f32 %v966, 0.0625
    %v1489 = vmul.f32 %v969, 0.0625
    %v1490 = vmul.f32 %v972, 0.0625
    %v1491 = vmul.f32 %v975, 0.0625
    %v1492 = vmul.f32 %v978, 0.0625
    %v1493 = vmul.f32 %v981, 0.0625
    %v1494 = vmul.f32 %v984, 0.0625
    %v1495 = vmul.f32 %v987, 0.0625
    %v1496 = vmul.f32 %v990, 0.0625
    %v1497 = vmul.f32 %v993, 0.0625
    %v1498 = vmul.f32 %v996, 0.0625
    %v1499 = vmul.f32 %v999, 0.0625
    %v1500 = vmul.f32 %v1002, 0.0625
    %v1501 = vmul.f32 %v1005, 0.0625
    %v1502 = vmul.f32 %v1008, 0.0625
    %v1503 = vmul.f32 %v1011, 0.0625
    %v1504 = vmul.f32 %v1014, 0.0625
    %v1505 = vmul.f32 %v1017, 0.0625
    %v1506 = vmul.f32 %v1020, 0.0625
    %v1507 = vmul.f32 %v1023, 0.0625
    %v1508 = vmul.f32 %v1026, 0.0625
    %v1509 = vmul.f32 %v1029, 0.0625
    %v1510 = vmul.f32 %v1032, 0.0625
    %v1511 = vmul.f32 %v1035, 0.0625
    %v1512 = vmul.f32 %v1038, 0.0625
    %v1513 = vmul.f32 %v1041, 0.0625
    %v1514 = vmul.f32 %v1044, 0.0625
    %v1515 = vmul.f32 %v1047, 0.0625
    %v1516 = vmul.f32 %v1050, 0.0625
    %v1517 = vmul.f32 %v1053, 0.0625
    %v1518 = vmul.f32 %v1056, 0.0625
    %v1519 = vmul.f32 %v1059, 0.0625
    %v1520 = vmul.f32 %v1062, 0.0625
    %v1521 = vmul.f32 %v1065, 0.0625
    %v1522 = vmul.f32 %v1068, 0.0625
    %v1523 = vmul.f32 %v1071, 0.0625
    %v1524 = vmul.f32 %v1074, 0.0625
    %v1525 = vmul.f32 %v1077, 0.0625
    %v1526 = vmul.f32 %v1080, 0.0625
    %v1527 = vmul.f32 %v1083, 0.0625
    %v1528 = vmul.f32 %v1086, 0.0625
    %v1529 = vmul.f32 %v1089, 0.0625
    %v1530 = vmul.f32 %v1092, 0.0625
    %v1531 = vmul.f32 %v1095, 0.0625
    %v1532 = vmul.f32 %v1098, 0.0625
    %v1533 = vmul.f32 %v1101, 0.0625
    %v1534 = vmul.f32 %v1104, 0.0625
    %v1535 = vmul.f32 %v1107, 0.0625
    %v1536 = vmul.f32 %v1110, 0.0625
    %v1537 = vmul.f32 %v1113, 0.0625
    %v1538 = vmul.f32 %v1116, 0.0625
    %v1539 = vmul.f32 %v1119, 0.0625
    %v1540 = vmul.f32 %v1122, 0.0625
    %v1541 = vmul.f32 %v1125, 0.0625
    %v1542 = vmul.f32 %v1128, 0.0625
    %v1543 = vmul.f32 %v1131, 0.0625
    %v1544 = vmul.f32 %v1134, 0.0625
    %v1545 = vmul.f32 %v1137, 0.0625
    %v1546 = vmul.f32 %v1140, 0.0625
    %v1547 = vmul.f32 %v1143, 0.0625
    %v1548 = vmul.f32 %v1146, 0.0625
    %v1549 = vmul.f32 %v1149, 0.0625
    %v1550 = vmul.f32 %v1152, 0.0625
    %v1551 = vmul.f32 %v1155, 0.0625
    %v1552 = vmul.f32 %v1158, 0.0625
    %v1553 = vmul.f32 %v1161, 0.0625
    %v1554 = vmul.f32 %v1164, 0.0625
    %v1555 = vmul.f32 %v1167, 0.0625
    %v1556 = vmul.f32 %v1170, 0.0625
    %v1557 = vmul.f32 %v1173, 0.0625
    %v1558 = vmul.f32 %v1176, 0.0625
    %v1559 = vmul.f32 %v1179, 0.0625
    %v1560 = vmul.f32 %v1182, 0.0625
    %v1561 = vmul.f32 %v1185, 0.0625
    %v1562 = vmul.f32 %v1188, 0.0625
    %v1563 = vmul.f32 %v1191, 0.0625
    %v1564 = vmul.f32 %v1194, 0.0625
    %v1565 = vmul.f32 %v1197, 0.0625
    %v1566 = vmul.f32 %v1200, 0.0625
    %v1567 = vmul.f32 %v1203, 0.0625
    %v1568 = vmul.f32 %v1206, 0.0625
    %v1569 = vmul.f32 %v1209, 0.0625
    %v1570 = vmul.f32 %v1212, 0.0625
    %v1571 = vmul.f32 %v1215, 0.0625
    %v1572 = vmul.f32 %v1218, 0.0625
    %v1573 = vmul.f32 %v1221, 0.0625
    %v1574 = vmul.f32 %v1224, 0.0625
    %v1575 = vmul.f32 %v1227, 0.0625
    %v1576 = vmul.f32 %v1230, 0.0625
    %v1577 = vmul.f32 %v1233, 0.0625
    %v1578 = vmul.f32 %v1236, 0.0625
    %v1579 = vmul.f32 %v1239, 0.0625
    %v1580 = vmul.f32 %v1242, 0.0625
    %v1581 = vmul.f32 %v1245, 0.0625
    %v1582 = vmul.f32 %v1248, 0.0625
    %v1583 = vmul.f32 %v1251, 0.0625
    %v1584 = vmul.f32 %v1254, 0.0625
    %v1585 = vmul.f32 %v1257, 0.0625
    %v1586 = vmul.f32 %v1260, 0.0625
    %v1587 = vmul.f32 %v1263, 0.0625
    %v1588 = vmul.f32 %v1266, 0.0625
    %v1589 = vmul.f32 %v1269, 0.0625
    %v1590 = vmul.f32 %v1272, 0.0625
    %v1591 = vmul.f32 %v1275, 0.0625
    %v1592 = vmul.f32 %v1278, 0.0625
    %v1593 = vmul.f32 %v1281, 0.0625
    %v1594 = vmul.f32 %v1284, 0.0625
    %v1595 = vmul.f32 %v1287, 0.0625
    %v1596 = vmul.f32 %v1290, 0.0625
    %v1597 = vmul.f32 %v1293, 0.0625
    %v1598 = vmul.f32 %v1296, 0.0625
    %v1599 = vmul.f32 %v1299, 0.0625
    %v1600 = vmul.f32 %v1302, 0.0625
    %v1601 = vmul.f32 %v1305, 0.0625
    %v1602 = vmul.f32 %v1308, 0.0625
    %v1603 = vmul.f32 %v1311, 0.0625
    %v1604 = vmul.f32 %v1314, 0.0625
    %v1605 = vmul.f32 %v1317, 0.0625
    %v1606 = vmul.f32 %v1320, 0.0625
    %v1607 = vmul.f32 %v1323, 0.0625
    %v1608 = vmul.f32 %v1326, 0.0625
    %v1609 = vmul.f32 %v1329, 0.0625
    %v1610 = vmul.f32 %v1332, 0.0625
    %v1611 = vmul.f32 %v1335, 0.0625
    %v1612 = vmul.f32 %v1338, 0.0625
    %v1613 = vmul.f32 %v1341, 0.0625
    %v1614 = vmul.f32 %v1344, 0.0625
    %v1615 = vmul.f32 %v1347, 0.0625
    %v1616 = vmul.f32 %v1350, 0.0625
    %v1617 = vmul.f32 %v1353, 0.0625
    %v1618 = vmul.f32 %v1356, 0.0625
    %v1619 = vmul.f32 %v1359, 0.0625
    %v1620 = vmul.f32 %v1362, 0.0625
    %v1621 = vmul.f32 %v1365, 0.0625
    %v1622 = vld [vmem:[#allocation5] sm:$0xff]
    %v1623 = vld [vmem:[#allocation5 + $0x8] sm:$0xff]
    %v1624 = vld [vmem:[#allocation5 + $0x10] sm:$0xff]
    %v1625 = vld [vmem:[#allocation5 + $0x18] sm:$0xff]
    %v1626 = vld [vmem:[#allocation5 + $0x20] sm:$0xff]
    %v1627 = vld [vmem:[#allocation5 + $0x28] sm:$0xff]
    %v1628 = vld [vmem:[#allocation5 + $0x30] sm:$0xff]
    %v1629 = vld [vmem:[#allocation5 + $0x38] sm:$0xff]
    %v1630 = vld [vmem:[#allocation5 + $0x40] sm:$0xff]
    %v1631 = vld [vmem:[#allocation5 + $0x48] sm:$0xff]
    %v1632 = vld [vmem:[#allocation5 + $0x50] sm:$0xff]
    %v1633 = vld [vmem:[#allocation5 + $0x58] sm:$0xff]
    %v1634 = vld [vmem:[#allocation5 + $0x60] sm:$0xff]
    %v1635 = vld [vmem:[#allocation5 + $0x68] sm:$0xff]
    %v1636 = vld [vmem:[#allocation5 + $0x70] sm:$0xff]
    %v1637 = vld [vmem:[#allocation5 + $0x78] sm:$0xff]
    %v1638 = vld [vmem:[#allocation5 + $0x80] sm:$0xff]
    %v1639 = vld [vmem:[#allocation5 + $0x88] sm:$0xff]
    %v1640 = vld [vmem:[#allocation5 + $0x90] sm:$0xff]
    %v1641 = vld [vmem:[#allocation5 + $0x98] sm:$0xff]
    %v1642 = vld [vmem:[#allocation5 + $0xa0] sm:$0xff]
    %v1643 = vld [vmem:[#allocation5 + $0xa8] sm:$0xff]
    %v1644 = vld [vmem:[#allocation5 + $0xb0] sm:$0xff]
    %v1645 = vld [vmem:[#allocation5 + $0xb8] sm:$0xff]
    %v1646 = vld [vmem:[#allocation5 + $0xc0] sm:$0xff]
    %v1647 = vld [vmem:[#allocation5 + $0xc8] sm:$0xff]
    %v1648 = vld [vmem:[#allocation5 + $0xd0] sm:$0xff]
    %v1649 = vld [vmem:[#allocation5 + $0xd8] sm:$0xff]
    %v1650 = vld [vmem:[#allocation5 + $0xe0] sm:$0xff]
    %v1651 = vld [vmem:[#allocation5 + $0xe8] sm:$0xff]
    %v1652 = vld [vmem:[#allocation5 + $0xf0] sm:$0xff]
    %v1653 = vld [vmem:[#allocation5 + $0xf8] sm:$0xff]
    %v1654 = vld [vmem:[#allocation5 + $0x100] sm:$0xff]
    %v1655 = vld [vmem:[#allocation5 + $0x108] sm:$0xff]
    %v1656 = vld [vmem:[#allocation5 + $0x110] sm:$0xff]
    %v1657 = vld [vmem:[#allocation5 + $0x118] sm:$0xff]
    %v1658 = vld [vmem:[#allocation5 + $0x120] sm:$0xff]
    %v1659 = vld [vmem:[#allocation5 + $0x128] sm:$0xff]
    %v1660 = vld [vmem:[#allocation5 + $0x130] sm:$0xff]
    %v1661 = vld [vmem:[#allocation5 + $0x138] sm:$0xff]
    %v1662 = vld [vmem:[#allocation5 + $0x140] sm:$0xff]
    %v1663 = vld [vmem:[#allocation5 + $0x148] sm:$0xff]
    %v1664 = vld [vmem:[#allocation5 + $0x150] sm:$0xff]
    %v1665 = vld [vmem:[#allocation5 + $0x158] sm:$0xff]
    %v1666 = vld [vmem:[#allocation5 + $0x160] sm:$0xff]
    %v1667 = vld [vmem:[#allocation5 + $0x168] sm:$0xff]
    %v1668 = vld [vmem:[#allocation5 + $0x170] sm:$0xff]
    %v1669 = vld [vmem:[#allocation5 + $0x178] sm:$0xff]
    %v1670 = vld [vmem:[#allocation5 + $0x180] sm:$0xff]
    %v1671 = vld [vmem:[#allocation5 + $0x188] sm:$0xff]
    %v1672 = vld [vmem:[#allocation5 + $0x190] sm:$0xff]
    %v1673 = vld [vmem:[#allocation5 + $0x198] sm:$0xff]
    %v1674 = vld [vmem:[#allocation5 + $0x1a0] sm:$0xff]
    %v1675 = vld [vmem:[#allocation5 + $0x1a8] sm:$0xff]
    %v1676 = vld [vmem:[#allocation5 + $0x1b0] sm:$0xff]
    %v1677 = vld [vmem:[#allocation5 + $0x1b8] sm:$0xff]
    %v1678 = vld [vmem:[#allocation5 + $0x1c0] sm:$0xff]
    %v1679 = vld [vmem:[#allocation5 + $0x1c8] sm:$0xff]
    %v1680 = vld [vmem:[#allocation5 + $0x1d0] sm:$0xff]
    %v1681 = vld [vmem:[#allocation5 + $0x1d8] sm:$0xff]
    %v1682 = vld [vmem:[#allocation5 + $0x1e0] sm:$0xff]
    %v1683 = vld [vmem:[#allocation5 + $0x1e8] sm:$0xff]
    %v1684 = vld [vmem:[#allocation5 + $0x1f0] sm:$0xff]
    %v1685 = vld [vmem:[#allocation5 + $0x1f8] sm:$0xff]
    %v1686 = vld [vmem:[#allocation5 + $0x200] sm:$0xff]
    %v1687 = vld [vmem:[#allocation5 + $0x208] sm:$0xff]
    %v1688 = vld [vmem:[#allocation5 + $0x210] sm:$0xff]
    %v1689 = vld [vmem:[#allocation5 + $0x218] sm:$0xff]
    %v1690 = vld [vmem:[#allocation5 + $0x220] sm:$0xff]
    %v1691 = vld [vmem:[#allocation5 + $0x228] sm:$0xff]
    %v1692 = vld [vmem:[#allocation5 + $0x230] sm:$0xff]
    %v1693 = vld [vmem:[#allocation5 + $0x238] sm:$0xff]
    %v1694 = vld [vmem:[#allocation5 + $0x240] sm:$0xff]
    %v1695 = vld [vmem:[#allocation5 + $0x248] sm:$0xff]
    %v1696 = vld [vmem:[#allocation5 + $0x250] sm:$0xff]
    %v1697 = vld [vmem:[#allocation5 + $0x258] sm:$0xff]
    %v1698 = vld [vmem:[#allocation5 + $0x260] sm:$0xff]
    %v1699 = vld [vmem:[#allocation5 + $0x268] sm:$0xff]
    %v1700 = vld [vmem:[#allocation5 + $0x270] sm:$0xff]
    %v1701 = vld [vmem:[#allocation5 + $0x278] sm:$0xff]
    %v1702 = vld [vmem:[#allocation5 + $0x280] sm:$0xff]
    %v1703 = vld [vmem:[#allocation5 + $0x288] sm:$0xff]
    %v1704 = vld [vmem:[#allocation5 + $0x290] sm:$0xff]
    %v1705 = vld [vmem:[#allocation5 + $0x298] sm:$0xff]
    %v1706 = vld [vmem:[#allocation5 + $0x2a0] sm:$0xff]
    %v1707 = vld [vmem:[#allocation5 + $0x2a8] sm:$0xff]
    %v1708 = vld [vmem:[#allocation5 + $0x2b0] sm:$0xff]
    %v1709 = vld [vmem:[#allocation5 + $0x2b8] sm:$0xff]
    %v1710 = vld [vmem:[#allocation5 + $0x2c0] sm:$0xff]
    %v1711 = vld [vmem:[#allocation5 + $0x2c8] sm:$0xff]
    %v1712 = vld [vmem:[#allocation5 + $0x2d0] sm:$0xff]
    %v1713 = vld [vmem:[#allocation5 + $0x2d8] sm:$0xff]
    %v1714 = vld [vmem:[#allocation5 + $0x2e0] sm:$0xff]
    %v1715 = vld [vmem:[#allocation5 + $0x2e8] sm:$0xff]
    %v1716 = vld [vmem:[#allocation5 + $0x2f0] sm:$0xff]
    %v1717 = vld [vmem:[#allocation5 + $0x2f8] sm:$0xff]
    %v1718 = vld [vmem:[#allocation5 + $0x300] sm:$0xff]
    %v1719 = vld [vmem:[#allocation5 + $0x308] sm:$0xff]
    %v1720 = vld [vmem:[#allocation5 + $0x310] sm:$0xff]
    %v1721 = vld [vmem:[#allocation5 + $0x318] sm:$0xff]
    %v1722 = vld [vmem:[#allocation5 + $0x320] sm:$0xff]
    %v1723 = vld [vmem:[#allocation5 + $0x328] sm:$0xff]
    %v1724 = vld [vmem:[#allocation5 + $0x330] sm:$0xff]
    %v1725 = vld [vmem:[#allocation5 + $0x338] sm:$0xff]
    %v1726 = vld [vmem:[#allocation5 + $0x340] sm:$0xff]
    %v1727 = vld [vmem:[#allocation5 + $0x348] sm:$0xff]
    %v1728 = vld [vmem:[#allocation5 + $0x350] sm:$0xff]
    %v1729 = vld [vmem:[#allocation5 + $0x358] sm:$0xff]
    %v1730 = vld [vmem:[#allocation5 + $0x360] sm:$0xff]
    %v1731 = vld [vmem:[#allocation5 + $0x368] sm:$0xff]
    %v1732 = vld [vmem:[#allocation5 + $0x370] sm:$0xff]
    %v1733 = vld [vmem:[#allocation5 + $0x378] sm:$0xff]
    %v1734 = vld [vmem:[#allocation5 + $0x380] sm:$0xff]
    %v1735 = vld [vmem:[#allocation5 + $0x388] sm:$0xff]
    %v1736 = vld [vmem:[#allocation5 + $0x390] sm:$0xff]
    %v1737 = vld [vmem:[#allocation5 + $0x398] sm:$0xff]
    %v1738 = vld [vmem:[#allocation5 + $0x3a0] sm:$0xff]
    %v1739 = vld [vmem:[#allocation5 + $0x3a8] sm:$0xff]
    %v1740 = vld [vmem:[#allocation5 + $0x3b0] sm:$0xff]
    %v1741 = vld [vmem:[#allocation5 + $0x3b8] sm:$0xff]
    %v1742 = vld [vmem:[#allocation5 + $0x3c0] sm:$0xff]
    %v1743 = vld [vmem:[#allocation5 + $0x3c8] sm:$0xff]
    %v1744 = vld [vmem:[#allocation5 + $0x3d0] sm:$0xff]
    %v1745 = vld [vmem:[#allocation5 + $0x3d8] sm:$0xff]
    %v1746 = vld [vmem:[#allocation5 + $0x3e0] sm:$0xff]
    %v1747 = vld [vmem:[#allocation5 + $0x3e8] sm:$0xff]
    %v1748 = vld [vmem:[#allocation5 + $0x3f0] sm:$0xff]
    %v1749 = vld [vmem:[#allocation5 + $0x3f8] sm:$0xff]
    %v1750 = vld [vmem:[#allocation5 + $0x400] sm:$0xff]
    %v1751 = vld [vmem:[#allocation5 + $0x408] sm:$0xff]
    %v1752 = vld [vmem:[#allocation5 + $0x410] sm:$0xff]
    %v1753 = vld [vmem:[#allocation5 + $0x418] sm:$0xff]
    %v1754 = vld [vmem:[#allocation5 + $0x420] sm:$0xff]
    %v1755 = vld [vmem:[#allocation5 + $0x428] sm:$0xff]
    %v1756 = vld [vmem:[#allocation5 + $0x430] sm:$0xff]
    %v1757 = vld [vmem:[#allocation5 + $0x438] sm:$0xff]
    %v1758 = vld [vmem:[#allocation5 + $0x440] sm:$0xff]
    %v1759 = vld [vmem:[#allocation5 + $0x448] sm:$0xff]
    %v1760 = vld [vmem:[#allocation5 + $0x450] sm:$0xff]
    %v1761 = vld [vmem:[#allocation5 + $0x458] sm:$0xff]
    %v1762 = vld [vmem:[#allocation5 + $0x460] sm:$0xff]
    %v1763 = vld [vmem:[#allocation5 + $0x468] sm:$0xff]
    %v1764 = vld [vmem:[#allocation5 + $0x470] sm:$0xff]
    %v1765 = vld [vmem:[#allocation5 + $0x478] sm:$0xff]
    %v1766 = vld [vmem:[#allocation5 + $0x480] sm:$0xff]
    %v1767 = vld [vmem:[#allocation5 + $0x488] sm:$0xff]
    %v1768 = vld [vmem:[#allocation5 + $0x490] sm:$0xff]
    %v1769 = vld [vmem:[#allocation5 + $0x498] sm:$0xff]
    %v1770 = vld [vmem:[#allocation5 + $0x4a0] sm:$0xff]
    %v1771 = vld [vmem:[#allocation5 + $0x4a8] sm:$0xff]
    %v1772 = vld [vmem:[#allocation5 + $0x4b0] sm:$0xff]
    %v1773 = vld [vmem:[#allocation5 + $0x4b8] sm:$0xff]
    %v1774 = vld [vmem:[#allocation5 + $0x4c0] sm:$0xff]
    %v1775 = vld [vmem:[#allocation5 + $0x4c8] sm:$0xff]
    %v1776 = vld [vmem:[#allocation5 + $0x4d0] sm:$0xff]
    %v1777 = vld [vmem:[#allocation5 + $0x4d8] sm:$0xff]
    %v1778 = vld [vmem:[#allocation5 + $0x4e0] sm:$0xff]
    %v1779 = vld [vmem:[#allocation5 + $0x4e8] sm:$0xff]
    %v1780 = vld [vmem:[#allocation5 + $0x4f0] sm:$0xff]
    %v1781 = vld [vmem:[#allocation5 + $0x4f8] sm:$0xff]
    %v1782 = vld [vmem:[#allocation5 + $0x500] sm:$0xff]
    %v1783 = vld [vmem:[#allocation5 + $0x508] sm:$0xff]
    %v1784 = vld [vmem:[#allocation5 + $0x510] sm:$0xff]
    %v1785 = vld [vmem:[#allocation5 + $0x518] sm:$0xff]
    %v1786 = vld [vmem:[#allocation5 + $0x520] sm:$0xff]
    %v1787 = vld [vmem:[#allocation5 + $0x528] sm:$0xff]
    %v1788 = vld [vmem:[#allocation5 + $0x530] sm:$0xff]
    %v1789 = vld [vmem:[#allocation5 + $0x538] sm:$0xff]
    %v1790 = vld [vmem:[#allocation5 + $0x540] sm:$0xff]
    %v1791 = vld [vmem:[#allocation5 + $0x548] sm:$0xff]
    %v1792 = vld [vmem:[#allocation5 + $0x550] sm:$0xff]
    %v1793 = vld [vmem:[#allocation5 + $0x558] sm:$0xff]
    %v1794 = vld [vmem:[#allocation5 + $0x560] sm:$0xff]
    %v1795 = vld [vmem:[#allocation5 + $0x568] sm:$0xff]
    %v1796 = vld [vmem:[#allocation5 + $0x570] sm:$0xff]
    %v1797 = vld [vmem:[#allocation5 + $0x578] sm:$0xff]
    %v1798 = vld [vmem:[#allocation5 + $0x580] sm:$0xff]
    %v1799 = vld [vmem:[#allocation5 + $0x588] sm:$0xff]
    %v1800 = vld [vmem:[#allocation5 + $0x590] sm:$0xff]
    %v1801 = vld [vmem:[#allocation5 + $0x598] sm:$0xff]
    %v1802 = vld [vmem:[#allocation5 + $0x5a0] sm:$0xff]
    %v1803 = vld [vmem:[#allocation5 + $0x5a8] sm:$0xff]
    %v1804 = vld [vmem:[#allocation5 + $0x5b0] sm:$0xff]
    %v1805 = vld [vmem:[#allocation5 + $0x5b8] sm:$0xff]
    %v1806 = vld [vmem:[#allocation5 + $0x5c0] sm:$0xff]
    %v1807 = vld [vmem:[#allocation5 + $0x5c8] sm:$0xff]
    %v1808 = vld [vmem:[#allocation5 + $0x5d0] sm:$0xff]
    %v1809 = vld [vmem:[#allocation5 + $0x5d8] sm:$0xff]
    %v1810 = vld [vmem:[#allocation5 + $0x5e0] sm:$0xff]
    %v1811 = vld [vmem:[#allocation5 + $0x5e8] sm:$0xff]
    %v1812 = vld [vmem:[#allocation5 + $0x5f0] sm:$0xff]
    %v1813 = vld [vmem:[#allocation5 + $0x5f8] sm:$0xff]
    %v1814 = vld [vmem:[#allocation5 + $0x600] sm:$0xff]
    %v1815 = vld [vmem:[#allocation5 + $0x608] sm:$0xff]
    %v1816 = vld [vmem:[#allocation5 + $0x610] sm:$0xff]
    %v1817 = vld [vmem:[#allocation5 + $0x618] sm:$0xff]
    %v1818 = vld [vmem:[#allocation5 + $0x620] sm:$0xff]
    %v1819 = vld [vmem:[#allocation5 + $0x628] sm:$0xff]
    %v1820 = vld [vmem:[#allocation5 + $0x630] sm:$0xff]
    %v1821 = vld [vmem:[#allocation5 + $0x638] sm:$0xff]
    %v1822 = vld [vmem:[#allocation5 + $0x640] sm:$0xff]
    %v1823 = vld [vmem:[#allocation5 + $0x648] sm:$0xff]
    %v1824 = vld [vmem:[#allocation5 + $0x650] sm:$0xff]
    %v1825 = vld [vmem:[#allocation5 + $0x658] sm:$0xff]
    %v1826 = vld [vmem:[#allocation5 + $0x660] sm:$0xff]
    %v1827 = vld [vmem:[#allocation5 + $0x668] sm:$0xff]
    %v1828 = vld [vmem:[#allocation5 + $0x670] sm:$0xff]
    %v1829 = vld [vmem:[#allocation5 + $0x678] sm:$0xff]
    %v1830 = vld [vmem:[#allocation5 + $0x680] sm:$0xff]
    %v1831 = vld [vmem:[#allocation5 + $0x688] sm:$0xff]
    %v1832 = vld [vmem:[#allocation5 + $0x690] sm:$0xff]
    %v1833 = vld [vmem:[#allocation5 + $0x698] sm:$0xff]
    %v1834 = vld [vmem:[#allocation5 + $0x6a0] sm:$0xff]
    %v1835 = vld [vmem:[#allocation5 + $0x6a8] sm:$0xff]
    %v1836 = vld [vmem:[#allocation5 + $0x6b0] sm:$0xff]
    %v1837 = vld [vmem:[#allocation5 + $0x6b8] sm:$0xff]
    %v1838 = vld [vmem:[#allocation5 + $0x6c0] sm:$0xff]
    %v1839 = vld [vmem:[#allocation5 + $0x6c8] sm:$0xff]
    %v1840 = vld [vmem:[#allocation5 + $0x6d0] sm:$0xff]
    %v1841 = vld [vmem:[#allocation5 + $0x6d8] sm:$0xff]
    %v1842 = vld [vmem:[#allocation5 + $0x6e0] sm:$0xff]
    %v1843 = vld [vmem:[#allocation5 + $0x6e8] sm:$0xff]
    %v1844 = vld [vmem:[#allocation5 + $0x6f0] sm:$0xff]
    %v1845 = vld [vmem:[#allocation5 + $0x6f8] sm:$0xff]
    %v1846 = vld [vmem:[#allocation5 + $0x700] sm:$0xff]
    %v1847 = vld [vmem:[#allocation5 + $0x708] sm:$0xff]
    %v1848 = vld [vmem:[#allocation5 + $0x710] sm:$0xff]
    %v1849 = vld [vmem:[#allocation5 + $0x718] sm:$0xff]
    %v1850 = vld [vmem:[#allocation5 + $0x720] sm:$0xff]
    %v1851 = vld [vmem:[#allocation5 + $0x728] sm:$0xff]
    %v1852 = vld [vmem:[#allocation5 + $0x730] sm:$0xff]
    %v1853 = vld [vmem:[#allocation5 + $0x738] sm:$0xff]
    %v1854 = vld [vmem:[#allocation5 + $0x740] sm:$0xff]
    %v1855 = vld [vmem:[#allocation5 + $0x748] sm:$0xff]
    %v1856 = vld [vmem:[#allocation5 + $0x750] sm:$0xff]
    %v1857 = vld [vmem:[#allocation5 + $0x758] sm:$0xff]
    %v1858 = vld [vmem:[#allocation5 + $0x760] sm:$0xff]
    %v1859 = vld [vmem:[#allocation5 + $0x768] sm:$0xff]
    %v1860 = vld [vmem:[#allocation5 + $0x770] sm:$0xff]
    %v1861 = vld [vmem:[#allocation5 + $0x778] sm:$0xff]
    %v1862 = vld [vmem:[#allocation5 + $0x780] sm:$0xff]
    %v1863 = vld [vmem:[#allocation5 + $0x788] sm:$0xff]
    %v1864 = vld [vmem:[#allocation5 + $0x790] sm:$0xff]
    %v1865 = vld [vmem:[#allocation5 + $0x798] sm:$0xff]
    %v1866 = vld [vmem:[#allocation5 + $0x7a0] sm:$0xff]
    %v1867 = vld [vmem:[#allocation5 + $0x7a8] sm:$0xff]
    %v1868 = vld [vmem:[#allocation5 + $0x7b0] sm:$0xff]
    %v1869 = vld [vmem:[#allocation5 + $0x7b8] sm:$0xff]
    %v1870 = vld [vmem:[#allocation5 + $0x7c0] sm:$0xff]
    %v1871 = vld [vmem:[#allocation5 + $0x7c8] sm:$0xff]
    %v1872 = vld [vmem:[#allocation5 + $0x7d0] sm:$0xff]
    %v1873 = vld [vmem:[#allocation5 + $0x7d8] sm:$0xff]
    %v1874 = vld [vmem:[#allocation5 + $0x7e0] sm:$0xff]
    %v1875 = vld [vmem:[#allocation5 + $0x7e8] sm:$0xff]
    %v1876 = vld [vmem:[#allocation5 + $0x7f0] sm:$0xff]
    %v1877 = vld [vmem:[#allocation5 + $0x7f8] sm:$0xff]
    %v1878 = vld [vmem:[#allocation5 + $0x800] sm:$0xff]
    %v1879 = vld [vmem:[#allocation5 + $0x808] sm:$0xff]
    %v1880 = vld [vmem:[#allocation5 + $0x810] sm:$0xff]
    %v1881 = vld [vmem:[#allocation5 + $0x818] sm:$0xff]
    %v1882 = vld [vmem:[#allocation5 + $0x820] sm:$0xff]
    %v1883 = vld [vmem:[#allocation5 + $0x828] sm:$0xff]
    %v1884 = vld [vmem:[#allocation5 + $0x830] sm:$0xff]
    %v1885 = vld [vmem:[#allocation5 + $0x838] sm:$0xff]
    %v1886 = vld [vmem:[#allocation5 + $0x840] sm:$0xff]
    %v1887 = vld [vmem:[#allocation5 + $0x848] sm:$0xff]
    %v1888 = vld [vmem:[#allocation5 + $0x850] sm:$0xff]
    %v1889 = vld [vmem:[#allocation5 + $0x858] sm:$0xff]
    %v1890 = vld [vmem:[#allocation5 + $0x860] sm:$0xff]
    %v1891 = vld [vmem:[#allocation5 + $0x868] sm:$0xff]
    %v1892 = vld [vmem:[#allocation5 + $0x870] sm:$0xff]
    %v1893 = vld [vmem:[#allocation5 + $0x878] sm:$0xff]
    %v1894 = vld [vmem:[#allocation5 + $0x880] sm:$0xff]
    %v1895 = vld [vmem:[#allocation5 + $0x888] sm:$0xff]
    %v1896 = vld [vmem:[#allocation5 + $0x890] sm:$0xff]
    %v1897 = vld [vmem:[#allocation5 + $0x898] sm:$0xff]
    %v1898 = vld [vmem:[#allocation5 + $0x8a0] sm:$0xff]
    %v1899 = vld [vmem:[#allocation5 + $0x8a8] sm:$0xff]
    %v1900 = vld [vmem:[#allocation5 + $0x8b0] sm:$0xff]
    %v1901 = vld [vmem:[#allocation5 + $0x8b8] sm:$0xff]
    %v1902 = vld [vmem:[#allocation5 + $0x8c0] sm:$0xff]
    %v1903 = vld [vmem:[#allocation5 + $0x8c8] sm:$0xff]
    %v1904 = vld [vmem:[#allocation5 + $0x8d0] sm:$0xff]
    %v1905 = vld [vmem:[#allocation5 + $0x8d8] sm:$0xff]
    %v1906 = vld [vmem:[#allocation5 + $0x8e0] sm:$0xff]
    %v1907 = vld [vmem:[#allocation5 + $0x8e8] sm:$0xff]
    %v1908 = vld [vmem:[#allocation5 + $0x8f0] sm:$0xff]
    %v1909 = vld [vmem:[#allocation5 + $0x8f8] sm:$0xff]
    %v1910 = vld [vmem:[#allocation5 + $0x900] sm:$0xff]
    %v1911 = vld [vmem:[#allocation5 + $0x908] sm:$0xff]
    %v1912 = vld [vmem:[#allocation5 + $0x910] sm:$0xff]
    %v1913 = vld [vmem:[#allocation5 + $0x918] sm:$0xff]
    %v1914 = vld [vmem:[#allocation5 + $0x920] sm:$0xff]
    %v1915 = vld [vmem:[#allocation5 + $0x928] sm:$0xff]
    %v1916 = vld [vmem:[#allocation5 + $0x930] sm:$0xff]
    %v1917 = vld [vmem:[#allocation5 + $0x938] sm:$0xff]
    %v1918 = vld [vmem:[#allocation5 + $0x940] sm:$0xff]
    %v1919 = vld [vmem:[#allocation5 + $0x948] sm:$0xff]
    %v1920 = vld [vmem:[#allocation5 + $0x950] sm:$0xff]
    %v1921 = vld [vmem:[#allocation5 + $0x958] sm:$0xff]
    %v1922 = vld [vmem:[#allocation5 + $0x960] sm:$0xff]
    %v1923 = vld [vmem:[#allocation5 + $0x968] sm:$0xff]
    %v1924 = vld [vmem:[#allocation5 + $0x970] sm:$0xff]
    %v1925 = vld [vmem:[#allocation5 + $0x978] sm:$0xff]
    %v1926 = vld [vmem:[#allocation5 + $0x980] sm:$0xff]
    %v1927 = vld [vmem:[#allocation5 + $0x988] sm:$0xff]
    %v1928 = vld [vmem:[#allocation5 + $0x990] sm:$0xff]
    %v1929 = vld [vmem:[#allocation5 + $0x998] sm:$0xff]
    %v1930 = vld [vmem:[#allocation5 + $0x9a0] sm:$0xff]
    %v1931 = vld [vmem:[#allocation5 + $0x9a8] sm:$0xff]
    %v1932 = vld [vmem:[#allocation5 + $0x9b0] sm:$0xff]
    %v1933 = vld [vmem:[#allocation5 + $0x9b8] sm:$0xff]
    %v1934 = vld [vmem:[#allocation5 + $0x9c0] sm:$0xff]
    %v1935 = vld [vmem:[#allocation5 + $0x9c8] sm:$0xff]
    %v1936 = vld [vmem:[#allocation5 + $0x9d0] sm:$0xff]
    %v1937 = vld [vmem:[#allocation5 + $0x9d8] sm:$0xff]
    %v1938 = vld [vmem:[#allocation5 + $0x9e0] sm:$0xff]
    %v1939 = vld [vmem:[#allocation5 + $0x9e8] sm:$0xff]
    %v1940 = vld [vmem:[#allocation5 + $0x9f0] sm:$0xff]
    %v1941 = vld [vmem:[#allocation5 + $0x9f8] sm:$0xff]
    %v1942 = vld [vmem:[#allocation5 + $0xa00] sm:$0xff]
    %v1943 = vld [vmem:[#allocation5 + $0xa08] sm:$0xff]
    %v1944 = vld [vmem:[#allocation5 + $0xa10] sm:$0xff]
    %v1945 = vld [vmem:[#allocation5 + $0xa18] sm:$0xff]
    %v1946 = vld [vmem:[#allocation5 + $0xa20] sm:$0xff]
    %v1947 = vld [vmem:[#allocation5 + $0xa28] sm:$0xff]
    %v1948 = vld [vmem:[#allocation5 + $0xa30] sm:$0xff]
    %v1949 = vld [vmem:[#allocation5 + $0xa38] sm:$0xff]
    %v1950 = vld [vmem:[#allocation5 + $0xa40] sm:$0xff]
    %v1951 = vld [vmem:[#allocation5 + $0xa48] sm:$0xff]
    %v1952 = vld [vmem:[#allocation5 + $0xa50] sm:$0xff]
    %v1953 = vld [vmem:[#allocation5 + $0xa58] sm:$0xff]
    %v1954 = vld [vmem:[#allocation5 + $0xa60] sm:$0xff]
    %v1955 = vld [vmem:[#allocation5 + $0xa68] sm:$0xff]
    %v1956 = vld [vmem:[#allocation5 + $0xa70] sm:$0xff]
    %v1957 = vld [vmem:[#allocation5 + $0xa78] sm:$0xff]
    %v1958 = vld [vmem:[#allocation5 + $0xa80] sm:$0xff]
    %v1959 = vld [vmem:[#allocation5 + $0xa88] sm:$0xff]
    %v1960 = vld [vmem:[#allocation5 + $0xa90] sm:$0xff]
    %v1961 = vld [vmem:[#allocation5 + $0xa98] sm:$0xff]
    %v1962 = vld [vmem:[#allocation5 + $0xaa0] sm:$0xff]
    %v1963 = vld [vmem:[#allocation5 + $0xaa8] sm:$0xff]
    %v1964 = vld [vmem:[#allocation5 + $0xab0] sm:$0xff]
    %v1965 = vld [vmem:[#allocation5 + $0xab8] sm:$0xff]
    %v1966 = vld [vmem:[#allocation5 + $0xac0] sm:$0xff]
    %v1967 = vld [vmem:[#allocation5 + $0xac8] sm:$0xff]
    %v1968 = vld [vmem:[#allocation5 + $0xad0] sm:$0xff]
    %v1969 = vld [vmem:[#allocation5 + $0xad8] sm:$0xff]
    %v1970 = vld [vmem:[#allocation5 + $0xae0] sm:$0xff]
    %v1971 = vld [vmem:[#allocation5 + $0xae8] sm:$0xff]
    %v1972 = vld [vmem:[#allocation5 + $0xaf0] sm:$0xff]
    %v1973 = vld [vmem:[#allocation5 + $0xaf8] sm:$0xff]
    %v1974 = vld [vmem:[#allocation5 + $0xb00] sm:$0xff]
    %v1975 = vld [vmem:[#allocation5 + $0xb08] sm:$0xff]
    %v1976 = vld [vmem:[#allocation5 + $0xb10] sm:$0xff]
    %v1977 = vld [vmem:[#allocation5 + $0xb18] sm:$0xff]
    %v1978 = vld [vmem:[#allocation5 + $0xb20] sm:$0xff]
    %v1979 = vld [vmem:[#allocation5 + $0xb28] sm:$0xff]
    %v1980 = vld [vmem:[#allocation5 + $0xb30] sm:$0xff]
    %v1981 = vld [vmem:[#allocation5 + $0xb38] sm:$0xff]
    %v1982 = vld [vmem:[#allocation5 + $0xb40] sm:$0xff]
    %v1983 = vld [vmem:[#allocation5 + $0xb48] sm:$0xff]
    %v1984 = vld [vmem:[#allocation5 + $0xb50] sm:$0xff]
    %v1985 = vld [vmem:[#allocation5 + $0xb58] sm:$0xff]
    %v1986 = vld [vmem:[#allocation5 + $0xb60] sm:$0xff]
    %v1987 = vld [vmem:[#allocation5 + $0xb68] sm:$0xff]
    %v1988 = vld [vmem:[#allocation5 + $0xb70] sm:$0xff]
    %v1989 = vld [vmem:[#allocation5 + $0xb78] sm:$0xff]
    %v1990 = vld [vmem:[#allocation5 + $0xb80] sm:$0xff]
    %v1991 = vld [vmem:[#allocation5 + $0xb88] sm:$0xff]
    %v1992 = vld [vmem:[#allocation5 + $0xb90] sm:$0xff]
    %v1993 = vld [vmem:[#allocation5 + $0xb98] sm:$0xff]
    %v1994 = vld [vmem:[#allocation5 + $0xba0] sm:$0xff]
    %v1995 = vld [vmem:[#allocation5 + $0xba8] sm:$0xff]
    %v1996 = vld [vmem:[#allocation5 + $0xbb0] sm:$0xff]
    %v1997 = vld [vmem:[#allocation5 + $0xbb8] sm:$0xff]
    %v1998 = vld [vmem:[#allocation5 + $0xbc0] sm:$0xff]
    %v1999 = vld [vmem:[#allocation5 + $0xbc8] sm:$0xff]
    %v2000 = vld [vmem:[#allocation5 + $0xbd0] sm:$0xff]
    %v2001 = vld [vmem:[#allocation5 + $0xbd8] sm:$0xff]
    %v2002 = vld [vmem:[#allocation5 + $0xbe0] sm:$0xff]
    %v2003 = vld [vmem:[#allocation5 + $0xbe8] sm:$0xff]
    %v2004 = vld [vmem:[#allocation5 + $0xbf0] sm:$0xff]
    %v2005 = vld [vmem:[#allocation5 + $0xbf8] sm:$0xff]
    %v2006 = vld [vmem:[#allocation5 + $0xc00] sm:$0xff]
    %v2007 = vld [vmem:[#allocation5 + $0xc08] sm:$0xff]
    %v2008 = vld [vmem:[#allocation5 + $0xc10] sm:$0xff]
    %v2009 = vld [vmem:[#allocation5 + $0xc18] sm:$0xff]
    %v2010 = vld [vmem:[#allocation5 + $0xc20] sm:$0xff]
    %v2011 = vld [vmem:[#allocation5 + $0xc28] sm:$0xff]
    %v2012 = vld [vmem:[#allocation5 + $0xc30] sm:$0xff]
    %v2013 = vld [vmem:[#allocation5 + $0xc38] sm:$0xff]
    %v2014 = vld [vmem:[#allocation5 + $0xc40] sm:$0xff]
    %v2015 = vld [vmem:[#allocation5 + $0xc48] sm:$0xff]
    %v2016 = vld [vmem:[#allocation5 + $0xc50] sm:$0xff]
    %v2017 = vld [vmem:[#allocation5 + $0xc58] sm:$0xff]
    %v2018 = vld [vmem:[#allocation5 + $0xc60] sm:$0xff]
    %v2019 = vld [vmem:[#allocation5 + $0xc68] sm:$0xff]
    %v2020 = vld [vmem:[#allocation5 + $0xc70] sm:$0xff]
    %v2021 = vld [vmem:[#allocation5 + $0xc78] sm:$0xff]
    %v2022 = vld [vmem:[#allocation5 + $0xc80] sm:$0xff]
    %v2023 = vld [vmem:[#allocation5 + $0xc88] sm:$0xff]
    %v2024 = vld [vmem:[#allocation5 + $0xc90] sm:$0xff]
    %v2025 = vld [vmem:[#allocation5 + $0xc98] sm:$0xff]
    %v2026 = vld [vmem:[#allocation5 + $0xca0] sm:$0xff]
    %v2027 = vld [vmem:[#allocation5 + $0xca8] sm:$0xff]
    %v2028 = vld [vmem:[#allocation5 + $0xcb0] sm:$0xff]
    %v2029 = vld [vmem:[#allocation5 + $0xcb8] sm:$0xff]
    %v2030 = vld [vmem:[#allocation5 + $0xcc0] sm:$0xff]
    %v2031 = vld [vmem:[#allocation5 + $0xcc8] sm:$0xff]
    %v2032 = vld [vmem:[#allocation5 + $0xcd0] sm:$0xff]
    %v2033 = vld [vmem:[#allocation5 + $0xcd8] sm:$0xff]
    %v2034 = vld [vmem:[#allocation5 + $0xce0] sm:$0xff]
    %v2035 = vld [vmem:[#allocation5 + $0xce8] sm:$0xff]
    %v2036 = vld [vmem:[#allocation5 + $0xcf0] sm:$0xff]
    %v2037 = vld [vmem:[#allocation5 + $0xcf8] sm:$0xff]
    %v2038 = vld [vmem:[#allocation5 + $0xd00] sm:$0xff]
    %v2039 = vld [vmem:[#allocation5 + $0xd08] sm:$0xff]
    %v2040 = vld [vmem:[#allocation5 + $0xd10] sm:$0xff]
    %v2041 = vld [vmem:[#allocation5 + $0xd18] sm:$0xff]
    %v2042 = vld [vmem:[#allocation5 + $0xd20] sm:$0xff]
    %v2043 = vld [vmem:[#allocation5 + $0xd28] sm:$0xff]
    %v2044 = vld [vmem:[#allocation5 + $0xd30] sm:$0xff]
    %v2045 = vld [vmem:[#allocation5 + $0xd38] sm:$0xff]
    %v2046 = vld [vmem:[#allocation5 + $0xd40] sm:$0xff]
    %v2047 = vld [vmem:[#allocation5 + $0xd48] sm:$0xff]
    %v2048 = vld [vmem:[#allocation5 + $0xd50] sm:$0xff]
    %v2049 = vld [vmem:[#allocation5 + $0xd58] sm:$0xff]
    %v2050 = vld [vmem:[#allocation5 + $0xd60] sm:$0xff]
    %v2051 = vld [vmem:[#allocation5 + $0xd68] sm:$0xff]
    %v2052 = vld [vmem:[#allocation5 + $0xd70] sm:$0xff]
    %v2053 = vld [vmem:[#allocation5 + $0xd78] sm:$0xff]
    %v2054 = vld [vmem:[#allocation5 + $0xd80] sm:$0xff]
    %v2055 = vld [vmem:[#allocation5 + $0xd88] sm:$0xff]
    %v2056 = vld [vmem:[#allocation5 + $0xd90] sm:$0xff]
    %v2057 = vld [vmem:[#allocation5 + $0xd98] sm:$0xff]
    %v2058 = vld [vmem:[#allocation5 + $0xda0] sm:$0xff]
    %v2059 = vld [vmem:[#allocation5 + $0xda8] sm:$0xff]
    %v2060 = vld [vmem:[#allocation5 + $0xdb0] sm:$0xff]
    %v2061 = vld [vmem:[#allocation5 + $0xdb8] sm:$0xff]
    %v2062 = vld [vmem:[#allocation5 + $0xdc0] sm:$0xff]
    %v2063 = vld [vmem:[#allocation5 + $0xdc8] sm:$0xff]
    %v2064 = vld [vmem:[#allocation5 + $0xdd0] sm:$0xff]
    %v2065 = vld [vmem:[#allocation5 + $0xdd8] sm:$0xff]
    %v2066 = vld [vmem:[#allocation5 + $0xde0] sm:$0xff]
    %v2067 = vld [vmem:[#allocation5 + $0xde8] sm:$0xff]
    %v2068 = vld [vmem:[#allocation5 + $0xdf0] sm:$0xff]
    %v2069 = vld [vmem:[#allocation5 + $0xdf8] sm:$0xff]
    %v2070 = vld [vmem:[#allocation5 + $0xe00] sm:$0xff]
    %v2071 = vld [vmem:[#allocation5 + $0xe08] sm:$0xff]
    %v2072 = vld [vmem:[#allocation5 + $0xe10] sm:$0xff]
    %v2073 = vld [vmem:[#allocation5 + $0xe18] sm:$0xff]
    %v2074 = vld [vmem:[#allocation5 + $0xe20] sm:$0xff]
    %v2075 = vld [vmem:[#allocation5 + $0xe28] sm:$0xff]
    %v2076 = vld [vmem:[#allocation5 + $0xe30] sm:$0xff]
    %v2077 = vld [vmem:[#allocation5 + $0xe38] sm:$0xff]
    %v2078 = vld [vmem:[#allocation5 + $0xe40] sm:$0xff]
    %v2079 = vld [vmem:[#allocation5 + $0xe48] sm:$0xff]
    %v2080 = vld [vmem:[#allocation5 + $0xe50] sm:$0xff]
    %v2081 = vld [vmem:[#allocation5 + $0xe58] sm:$0xff]
    %v2082 = vld [vmem:[#allocation5 + $0xe60] sm:$0xff]
    %v2083 = vld [vmem:[#allocation5 + $0xe68] sm:$0xff]
    %v2084 = vld [vmem:[#allocation5 + $0xe70] sm:$0xff]
    %v2085 = vld [vmem:[#allocation5 + $0xe78] sm:$0xff]
    %v2086 = vld [vmem:[#allocation5 + $0xe80] sm:$0xff]
    %v2087 = vld [vmem:[#allocation5 + $0xe88] sm:$0xff]
    %v2088 = vld [vmem:[#allocation5 + $0xe90] sm:$0xff]
    %v2089 = vld [vmem:[#allocation5 + $0xe98] sm:$0xff]
    %v2090 = vld [vmem:[#allocation5 + $0xea0] sm:$0xff]
    %v2091 = vld [vmem:[#allocation5 + $0xea8] sm:$0xff]
    %v2092 = vld [vmem:[#allocation5 + $0xeb0] sm:$0xff]
    %v2093 = vld [vmem:[#allocation5 + $0xeb8] sm:$0xff]
    %v2094 = vld [vmem:[#allocation5 + $0xec0] sm:$0xff]
    %v2095 = vld [vmem:[#allocation5 + $0xec8] sm:$0xff]
    %v2096 = vld [vmem:[#allocation5 + $0xed0] sm:$0xff]
    %v2097 = vld [vmem:[#allocation5 + $0xed8] sm:$0xff]
    %v2098 = vld [vmem:[#allocation5 + $0xee0] sm:$0xff]
    %v2099 = vld [vmem:[#allocation5 + $0xee8] sm:$0xff]
    %v2100 = vld [vmem:[#allocation5 + $0xef0] sm:$0xff]
    %v2101 = vld [vmem:[#allocation5 + $0xef8] sm:$0xff]
    %v2102 = vld [vmem:[#allocation5 + $0xf00] sm:$0xff]
    %v2103 = vld [vmem:[#allocation5 + $0xf08] sm:$0xff]
    %v2104 = vld [vmem:[#allocation5 + $0xf10] sm:$0xff]
    %v2105 = vld [vmem:[#allocation5 + $0xf18] sm:$0xff]
    %v2106 = vld [vmem:[#allocation5 + $0xf20] sm:$0xff]
    %v2107 = vld [vmem:[#allocation5 + $0xf28] sm:$0xff]
    %v2108 = vld [vmem:[#allocation5 + $0xf30] sm:$0xff]
    %v2109 = vld [vmem:[#allocation5 + $0xf38] sm:$0xff]
    %v2110 = vld [vmem:[#allocation5 + $0xf40] sm:$0xff]
    %v2111 = vld [vmem:[#allocation5 + $0xf48] sm:$0xff]
    %v2112 = vld [vmem:[#allocation5 + $0xf50] sm:$0xff]
    %v2113 = vld [vmem:[#allocation5 + $0xf58] sm:$0xff]
    %v2114 = vld [vmem:[#allocation5 + $0xf60] sm:$0xff]
    %v2115 = vld [vmem:[#allocation5 + $0xf68] sm:$0xff]
    %v2116 = vld [vmem:[#allocation5 + $0xf70] sm:$0xff]
    %v2117 = vld [vmem:[#allocation5 + $0xf78] sm:$0xff]
    %v2118 = vld [vmem:[#allocation5 + $0xf80] sm:$0xff]
    %v2119 = vld [vmem:[#allocation5 + $0xf88] sm:$0xff]
    %v2120 = vld [vmem:[#allocation5 + $0xf90] sm:$0xff]
    %v2121 = vld [vmem:[#allocation5 + $0xf98] sm:$0xff]
    %v2122 = vld [vmem:[#allocation5 + $0xfa0] sm:$0xff]
    %v2123 = vld [vmem:[#allocation5 + $0xfa8] sm:$0xff]
    %v2124 = vld [vmem:[#allocation5 + $0xfb0] sm:$0xff]
    %v2125 = vld [vmem:[#allocation5 + $0xfb8] sm:$0xff]
    %v2126 = vld [vmem:[#allocation5 + $0xfc0] sm:$0xff]
    %v2127 = vld [vmem:[#allocation5 + $0xfc8] sm:$0xff]
    %v2128 = vld [vmem:[#allocation5 + $0xfd0] sm:$0xff]
    %v2129 = vld [vmem:[#allocation5 + $0xfd8] sm:$0xff]
    %v2130 = vld [vmem:[#allocation5 + $0xfe0] sm:$0xff]
    %v2131 = vld [vmem:[#allocation5 + $0xfe8] sm:$0xff]
    %v2132 = vld [vmem:[#allocation5 + $0xff0] sm:$0xff]
    %v2133 = vld [vmem:[#allocation5 + $0xff8] sm:$0xff]
    %v2134 = vld [vmem:[#allocation7] sm:$0xf]
    %v2136 = vlaneseq
    %v2137 = vshrl.u32 %v2136, 7
    %v2138 = vsub.s32 0, %v2137
    %v2139 = vrot.slane %v2134, %v2138
    %v2140 = vlaneseq
    %v2141 = vshrl.u32 %v2140, 7
    %v2142 = vsub.s32 1, %v2141
    %v2143 = vrot.slane %v2134, %v2142
    %v2144 = vlaneseq
    %v2145 = vshrl.u32 %v2144, 7
    %v2146 = vsub.s32 2, %v2145
    %v2147 = vrot.slane %v2134, %v2146
    %v2148 = vlaneseq
    %v2149 = vshrl.u32 %v2148, 7
    %v2150 = vsub.s32 3, %v2149
    %v2151 = vrot.slane %v2134, %v2150
    %v2412 = vlaneseq
    %v2413 = vand.u32 %v2412, 127
    %v2414 = vlaneseq
    %v2415 = vshrl.u32 %v2414, 7
    %v2416 = vsub.s32 %v2413, %v2415
    %v2417 = vrot.slane %v1366, %v2416
    %v2418 = vadd.s32 %v2413, 4294967288
    %v2419 = vlaneseq
    %v2420 = vshrl.u32 %v2419, 7
    %v2421 = vsub.s32 %v2418, %v2420
    %v2422 = vrot.slane %v1367, %v2421
    %vm2423 = vcmask 130112
    %v2424 = vsel %vm2423, %v2422, %v2417
    %v2425 = vadd.s32 %v2413, 4294967280
    %v2426 = vlaneseq
    %v2427 = vshrl.u32 %v2426, 7
    %v2428 = vsub.s32 %v2425, %v2427
    %v2429 = vrot.slane %v1368, %v2428
    %vm2430 = vcmask 195712
    %v2431 = vsel %vm2430, %v2429, %v2424
    %v2432 = vadd.s32 %v2413, 4294967272
    %v2433 = vlaneseq
    %v2434 = vshrl.u32 %v2433, 7
    %v2435 = vsub.s32 %v2432, %v2434
    %v2436 = vrot.slane %v1369, %v2435
    %vm2437 = vcmask 261312
    %v2438 = vsel %vm2437, %v2436, %v2431
    %v2439 = vadd.s32 %v2413, 4294967264
    %v2440 = vlaneseq
    %v2441 = vshrl.u32 %v2440, 7
    %v2442 = vsub.s32 %v2439, %v2441
    %v2443 = vrot.slane %v1370, %v2442
    %vm2444 = vcmask 326912
    %v2445 = vsel %vm2444, %v2443, %v2438
    %v2446 = vadd.s32 %v2413, 4294967256
    %v2447 = vlaneseq
    %v2448 = vshrl.u32 %v2447, 7
    %v2449 = vsub.s32 %v2446, %v2448
    %v2450 = vrot.slane %v1371, %v2449
    %vm2451 = vcmask 392512
    %v2452 = vsel %vm2451, %v2450, %v2445
    %v2453 = vadd.s32 %v2413, 4294967248
    %v2454 = vlaneseq
    %v2455 = vshrl.u32 %v2454, 7
    %v2456 = vsub.s32 %v2453, %v2455
    %v2457 = vrot.slane %v1372, %v2456
    %vm2458 = vcmask 458112
    %v2459 = vsel %vm2458, %v2457, %v2452
    %v2460 = vadd.s32 %v2413, 4294967240
    %v2461 = vlaneseq
    %v2462 = vshrl.u32 %v2461, 7
    %v2463 = vsub.s32 %v2460, %v2462
    %v2464 = vrot.slane %v1373, %v2463
    %vm2465 = vcmask 523712
    %v2466 = vsel %vm2465, %v2464, %v2459
    %v2467 = vadd.s32 %v2413, 4294967232
    %v2468 = vlaneseq
    %v2469 = vshrl.u32 %v2468, 7
    %v2470 = vsub.s32 %v2467, %v2469
    %v2471 = vrot.slane %v1374, %v2470
    %vm2472 = vcmask 589312
    %v2473 = vsel %vm2472, %v2471, %v2466
    %v2474 = vadd.s32 %v2413, 4294967224
    %v2475 = vlaneseq
    %v2476 = vshrl.u32 %v2475, 7
    %v2477 = vsub.s32 %v2474, %v2476
    %v2478 = vrot.slane %v1375, %v2477
    %vm2479 = vcmask 654912
    %v2480 = vsel %vm2479, %v2478, %v2473
    %v2481 = vadd.s32 %v2413, 4294967216
    %v2482 = vlaneseq
    %v2483 = vshrl.u32 %v2482, 7
    %v2484 = vsub.s32 %v2481, %v2483
    %v2485 = vrot.slane %v1376, %v2484
    %vm2486 = vcmask 720512
    %v2487 = vsel %vm2486, %v2485, %v2480
    %v2488 = vadd.s32 %v2413, 4294967208
    %v2489 = vlaneseq
    %v2490 = vshrl.u32 %v2489, 7
    %v2491 = vsub.s32 %v2488, %v2490
    %v2492 = vrot.slane %v1377, %v2491
    %vm2493 = vcmask 786112
    %v2494 = vsel %vm2493, %v2492, %v2487
    %v2495 = vadd.s32 %v2413, 4294967200
    %v2496 = vlaneseq
    %v2497 = vshrl.u32 %v2496, 7
    %v2498 = vsub.s32 %v2495, %v2497
    %v2499 = vrot.slane %v1378, %v2498
    %vm2500 = vcmask 851712
    %v2501 = vsel %vm2500, %v2499, %v2494
    %v2502 = vadd.s32 %v2413, 4294967192
    %v2503 = vlaneseq
    %v2504 = vshrl.u32 %v2503, 7
    %v2505 = vsub.s32 %v2502, %v2504
    %v2506 = vrot.slane %v1379, %v2505
    %vm2507 = vcmask 917312
    %v2508 = vsel %vm2507, %v2506, %v2501
    %v2509 = vadd.s32 %v2413, 4294967184
    %v2510 = vlaneseq
    %v2511 = vshrl.u32 %v2510, 7
    %v2512 = vsub.s32 %v2509, %v2511
    %v2513 = vrot.slane %v1380, %v2512
    %vm2514 = vcmask 982912
    %v2515 = vsel %vm2514, %v2513, %v2508
    %v2516 = vadd.s32 %v2413, 4294967176
    %v2517 = vlaneseq
    %v2518 = vshrl.u32 %v2517, 7
    %v2519 = vsub.s32 %v2516, %v2518
    %v2520 = vrot.slane %v1381, %v2519
    %vm2521 = vcmask 1048512
    %v2522 = vsel %vm2521, %v2520, %v2515
    %v2523 = vlaneseq
    %v2524 = vshrl.u32 %v2523, 7
    %v2525 = vsub.s32 %v2413, %v2524
    %v2526 = vrot.slane %v1382, %v2525
    %v2527 = vlaneseq
    %v2528 = vshrl.u32 %v2527, 7
    %v2529 = vsub.s32 %v2418, %v2528
    %v2530 = vrot.slane %v1383, %v2529
    %v2531 = vsel %vm2423, %v2530, %v2526
    %v2532 = vlaneseq
    %v2533 = vshrl.u32 %v2532, 7
    %v2534 = vsub.s32 %v2425, %v2533
    %v2535 = vrot.slane %v1384, %v2534
    %v2536 = vsel %vm2430, %v2535, %v2531
    %v2537 = vlaneseq
    %v2538 = vshrl.u32 %v2537, 7
    %v2539 = vsub.s32 %v2432, %v2538
    %v2540 = vrot.slane %v1385, %v2539
    %v2541 = vsel %vm2437, %v2540, %v2536
    %v2542 = vlaneseq
    %v2543 = vshrl.u32 %v2542, 7
    %v2544 = vsub.s32 %v2439, %v2543
    %v2545 = vrot.slane %v1386, %v2544
    %v2546 = vsel %vm2444, %v2545, %v2541
    %v2547 = vlaneseq
    %v2548 = vshrl.u32 %v2547, 7
    %v2549 = vsub.s32 %v2446, %v2548
    %v2550 = vrot.slane %v1387, %v2549
    %v2551 = vsel %vm2451, %v2550, %v2546
    %v2552 = vlaneseq
    %v2553 = vshrl.u32 %v2552, 7
    %v2554 = vsub.s32 %v2453, %v2553
    %v2555 = vrot.slane %v1388, %v2554
    %v2556 = vsel %vm2458, %v2555, %v2551
    %v2557 = vlaneseq
    %v2558 = vshrl.u32 %v2557, 7
    %v2559 = vsub.s32 %v2460, %v2558
    %v2560 = vrot.slane %v1389, %v2559
    %v2561 = vsel %vm2465, %v2560, %v2556
    %v2562 = vlaneseq
    %v2563 = vshrl.u32 %v2562, 7
    %v2564 = vsub.s32 %v2467, %v2563
    %v2565 = vrot.slane %v1390, %v2564
    %v2566 = vsel %vm2472, %v2565, %v2561
    %v2567 = vlaneseq
    %v2568 = vshrl.u32 %v2567, 7
    %v2569 = vsub.s32 %v2474, %v2568
    %v2570 = vrot.slane %v1391, %v2569
    %v2571 = vsel %vm2479, %v2570, %v2566
    %v2572 = vlaneseq
    %v2573 = vshrl.u32 %v2572, 7
    %v2574 = vsub.s32 %v2481, %v2573
    %v2575 = vrot.slane %v1392, %v2574
    %v2576 = vsel %vm2486, %v2575, %v2571
    %v2577 = vlaneseq
    %v2578 = vshrl.u32 %v2577, 7
    %v2579 = vsub.s32 %v2488, %v2578
    %v2580 = vrot.slane %v1393, %v2579
    %v2581 = vsel %vm2493, %v2580, %v2576
    %v2582 = vlaneseq
    %v2583 = vshrl.u32 %v2582, 7
    %v2584 = vsub.s32 %v2495, %v2583
    %v2585 = vrot.slane %v1394, %v2584
    %v2586 = vsel %vm2500, %v2585, %v2581
    %v2587 = vlaneseq
    %v2588 = vshrl.u32 %v2587, 7
    %v2589 = vsub.s32 %v2502, %v2588
    %v2590 = vrot.slane %v1395, %v2589
    %v2591 = vsel %vm2507, %v2590, %v2586
    %v2592 = vlaneseq
    %v2593 = vshrl.u32 %v2592, 7
    %v2594 = vsub.s32 %v2509, %v2593
    %v2595 = vrot.slane %v1396, %v2594
    %v2596 = vsel %vm2514, %v2595, %v2591
    %v2597 = vlaneseq
    %v2598 = vshrl.u32 %v2597, 7
    %v2599 = vsub.s32 %v2516, %v2598
    %v2600 = vrot.slane %v1397, %v2599
    %v2601 = vsel %vm2521, %v2600, %v2596
    %v2602 = vlaneseq
    %v2603 = vshrl.u32 %v2602, 7
    %v2604 = vsub.s32 %v2413, %v2603
    %v2605 = vrot.slane %v1398, %v2604
    %v2606 = vlaneseq
    %v2607 = vshrl.u32 %v2606, 7
    %v2608 = vsub.s32 %v2418, %v2607
    %v2609 = vrot.slane %v1399, %v2608
    %v2610 = vsel %vm2423, %v2609, %v2605
    %v2611 = vlaneseq
    %v2612 = vshrl.u32 %v2611, 7
    %v2613 = vsub.s32 %v2425, %v2612
    %v2614 = vrot.slane %v1400, %v2613
    %v2615 = vsel %vm2430, %v2614, %v2610
    %v2616 = vlaneseq
    %v2617 = vshrl.u32 %v2616, 7
    %v2618 = vsub.s32 %v2432, %v2617
    %v2619 = vrot.slane %v1401, %v2618
    %v2620 = vsel %vm2437, %v2619, %v2615
    %v2621 = vlaneseq
    %v2622 = vshrl.u32 %v2621, 7
    %v2623 = vsub.s32 %v2439, %v2622
    %v2624 = vrot.slane %v1402, %v2623
    %v2625 = vsel %vm2444, %v2624, %v2620
    %v2626 = vlaneseq
    %v2627 = vshrl.u32 %v2626, 7
    %v2628 = vsub.s32 %v2446, %v2627
    %v2629 = vrot.slane %v1403, %v2628
    %v2630 = vsel %vm2451, %v2629, %v2625
    %v2631 = vlaneseq
    %v2632 = vshrl.u32 %v2631, 7
    %v2633 = vsub.s32 %v2453, %v2632
    %v2634 = vrot.slane %v1404, %v2633
    %v2635 = vsel %vm2458, %v2634, %v2630
    %v2636 = vlaneseq
    %v2637 = vshrl.u32 %v2636, 7
    %v2638 = vsub.s32 %v2460, %v2637
    %v2639 = vrot.slane %v1405, %v2638
    %v2640 = vsel %vm2465, %v2639, %v2635
    %v2641 = vlaneseq
    %v2642 = vshrl.u32 %v2641, 7
    %v2643 = vsub.s32 %v2467, %v2642
    %v2644 = vrot.slane %v1406, %v2643
    %v2645 = vsel %vm2472, %v2644, %v2640
    %v2646 = vlaneseq
    %v2647 = vshrl.u32 %v2646, 7
    %v2648 = vsub.s32 %v2474, %v2647
    %v2649 = vrot.slane %v1407, %v2648
    %v2650 = vsel %vm2479, %v2649, %v2645
    %v2651 = vlaneseq
    %v2652 = vshrl.u32 %v2651, 7
    %v2653 = vsub.s32 %v2481, %v2652
    %v2654 = vrot.slane %v1408, %v2653
    %v2655 = vsel %vm2486, %v2654, %v2650
    %v2656 = vlaneseq
    %v2657 = vshrl.u32 %v2656, 7
    %v2658 = vsub.s32 %v2488, %v2657
    %v2659 = vrot.slane %v1409, %v2658
    %v2660 = vsel %vm2493, %v2659, %v2655
    %v2661 = vlaneseq
    %v2662 = vshrl.u32 %v2661, 7
    %v2663 = vsub.s32 %v2495, %v2662
    %v2664 = vrot.slane %v1410, %v2663
    %v2665 = vsel %vm2500, %v2664, %v2660
    %v2666 = vlaneseq
    %v2667 = vshrl.u32 %v2666, 7
    %v2668 = vsub.s32 %v2502, %v2667
    %v2669 = vrot.slane %v1411, %v2668
    %v2670 = vsel %vm2507, %v2669, %v2665
    %v2671 = vlaneseq
    %v2672 = vshrl.u32 %v2671, 7
    %v2673 = vsub.s32 %v2509, %v2672
    %v2674 = vrot.slane %v1412, %v2673
    %v2675 = vsel %vm2514, %v2674, %v2670
    %v2676 = vlaneseq
    %v2677 = vshrl.u32 %v2676, 7
    %v2678 = vsub.s32 %v2516, %v2677
    %v2679 = vrot.slane %v1413, %v2678
    %v2680 = vsel %vm2521, %v2679, %v2675
    %v2681 = vlaneseq
    %v2682 = vshrl.u32 %v2681, 7
    %v2683 = vsub.s32 %v2413, %v2682
    %v2684 = vrot.slane %v1414, %v2683
    %v2685 = vlaneseq
    %v2686 = vshrl.u32 %v2685, 7
    %v2687 = vsub.s32 %v2418, %v2686
    %v2688 = vrot.slane %v1415, %v2687
    %v2689 = vsel %vm2423, %v2688, %v2684
    %v2690 = vlaneseq
    %v2691 = vshrl.u32 %v2690, 7
    %v2692 = vsub.s32 %v2425, %v2691
    %v2693 = vrot.slane %v1416, %v2692
    %v2694 = vsel %vm2430, %v2693, %v2689
    %v2695 = vlaneseq
    %v2696 = vshrl.u32 %v2695, 7
    %v2697 = vsub.s32 %v2432, %v2696
    %v2698 = vrot.slane %v1417, %v2697
    %v2699 = vsel %vm2437, %v2698, %v2694
    %v2700 = vlaneseq
    %v2701 = vshrl.u32 %v2700, 7
    %v2702 = vsub.s32 %v2439, %v2701
    %v2703 = vrot.slane %v1418, %v2702
    %v2704 = vsel %vm2444, %v2703, %v2699
    %v2705 = vlaneseq
    %v2706 = vshrl.u32 %v2705, 7
    %v2707 = vsub.s32 %v2446, %v2706
    %v2708 = vrot.slane %v1419, %v2707
    %v2709 = vsel %vm2451, %v2708, %v2704
    %v2710 = vlaneseq
    %v2711 = vshrl.u32 %v2710, 7
    %v2712 = vsub.s32 %v2453, %v2711
    %v2713 = vrot.slane %v1420, %v2712
    %v2714 = vsel %vm2458, %v2713, %v2709
    %v2715 = vlaneseq
    %v2716 = vshrl.u32 %v2715, 7
    %v2717 = vsub.s32 %v2460, %v2716
    %v2718 = vrot.slane %v1421, %v2717
    %v2719 = vsel %vm2465, %v2718, %v2714
    %v2720 = vlaneseq
    %v2721 = vshrl.u32 %v2720, 7
    %v2722 = vsub.s32 %v2467, %v2721
    %v2723 = vrot.slane %v1422, %v2722
    %v2724 = vsel %vm2472, %v2723, %v2719
    %v2725 = vlaneseq
    %v2726 = vshrl.u32 %v2725, 7
    %v2727 = vsub.s32 %v2474, %v2726
    %v2728 = vrot.slane %v1423, %v2727
    %v2729 = vsel %vm2479, %v2728, %v2724
    %v2730 = vlaneseq
    %v2731 = vshrl.u32 %v2730, 7
    %v2732 = vsub.s32 %v2481, %v2731
    %v2733 = vrot.slane %v1424, %v2732
    %v2734 = vsel %vm2486, %v2733, %v2729
    %v2735 = vlaneseq
    %v2736 = vshrl.u32 %v2735, 7
    %v2737 = vsub.s32 %v2488, %v2736
    %v2738 = vrot.slane %v1425, %v2737
    %v2739 = vsel %vm2493, %v2738, %v2734
    %v2740 = vlaneseq
    %v2741 = vshrl.u32 %v2740, 7
    %v2742 = vsub.s32 %v2495, %v2741
    %v2743 = vrot.slane %v1426, %v2742
    %v2744 = vsel %vm2500, %v2743, %v2739
    %v2745 = vlaneseq
    %v2746 = vshrl.u32 %v2745, 7
    %v2747 = vsub.s32 %v2502, %v2746
    %v2748 = vrot.slane %v1427, %v2747
    %v2749 = vsel %vm2507, %v2748, %v2744
    %v2750 = vlaneseq
    %v2751 = vshrl.u32 %v2750, 7
    %v2752 = vsub.s32 %v2509, %v2751
    %v2753 = vrot.slane %v1428, %v2752
    %v2754 = vsel %vm2514, %v2753, %v2749
    %v2755 = vlaneseq
    %v2756 = vshrl.u32 %v2755, 7
    %v2757 = vsub.s32 %v2516, %v2756
    %v2758 = vrot.slane %v1429, %v2757
    %v2759 = vsel %vm2521, %v2758, %v2754
    %v2760 = vlaneseq
    %v2761 = vshrl.u32 %v2760, 7
    %v2762 = vsub.s32 %v2413, %v2761
    %v2763 = vrot.slane %v1430, %v2762
    %v2764 = vlaneseq
    %v2765 = vshrl.u32 %v2764, 7
    %v2766 = vsub.s32 %v2418, %v2765
    %v2767 = vrot.slane %v1431, %v2766
    %v2768 = vsel %vm2423, %v2767, %v2763
    %v2769 = vlaneseq
    %v2770 = vshrl.u32 %v2769, 7
    %v2771 = vsub.s32 %v2425, %v2770
    %v2772 = vrot.slane %v1432, %v2771
    %v2773 = vsel %vm2430, %v2772, %v2768
    %v2774 = vlaneseq
    %v2775 = vshrl.u32 %v2774, 7
    %v2776 = vsub.s32 %v2432, %v2775
    %v2777 = vrot.slane %v1433, %v2776
    %v2778 = vsel %vm2437, %v2777, %v2773
    %v2779 = vlaneseq
    %v2780 = vshrl.u32 %v2779, 7
    %v2781 = vsub.s32 %v2439, %v2780
    %v2782 = vrot.slane %v1434, %v2781
    %v2783 = vsel %vm2444, %v2782, %v2778
    %v2784 = vlaneseq
    %v2785 = vshrl.u32 %v2784, 7
    %v2786 = vsub.s32 %v2446, %v2785
    %v2787 = vrot.slane %v1435, %v2786
    %v2788 = vsel %vm2451, %v2787, %v2783
    %v2789 = vlaneseq
    %v2790 = vshrl.u32 %v2789, 7
    %v2791 = vsub.s32 %v2453, %v2790
    %v2792 = vrot.slane %v1436, %v2791
    %v2793 = vsel %vm2458, %v2792, %v2788
    %v2794 = vlaneseq
    %v2795 = vshrl.u32 %v2794, 7
    %v2796 = vsub.s32 %v2460, %v2795
    %v2797 = vrot.slane %v1437, %v2796
    %v2798 = vsel %vm2465, %v2797, %v2793
    %v2799 = vlaneseq
    %v2800 = vshrl.u32 %v2799, 7
    %v2801 = vsub.s32 %v2467, %v2800
    %v2802 = vrot.slane %v1438, %v2801
    %v2803 = vsel %vm2472, %v2802, %v2798
    %v2804 = vlaneseq
    %v2805 = vshrl.u32 %v2804, 7
    %v2806 = vsub.s32 %v2474, %v2805
    %v2807 = vrot.slane %v1439, %v2806
    %v2808 = vsel %vm2479, %v2807, %v2803
    %v2809 = vlaneseq
    %v2810 = vshrl.u32 %v2809, 7
    %v2811 = vsub.s32 %v2481, %v2810
    %v2812 = vrot.slane %v1440, %v2811
    %v2813 = vsel %vm2486, %v2812, %v2808
    %v2814 = vlaneseq
    %v2815 = vshrl.u32 %v2814, 7
    %v2816 = vsub.s32 %v2488, %v2815
    %v2817 = vrot.slane %v1441, %v2816
    %v2818 = vsel %vm2493, %v2817, %v2813
    %v2819 = vlaneseq
    %v2820 = vshrl.u32 %v2819, 7
    %v2821 = vsub.s32 %v2495, %v2820
    %v2822 = vrot.slane %v1442, %v2821
    %v2823 = vsel %vm2500, %v2822, %v2818
    %v2824 = vlaneseq
    %v2825 = vshrl.u32 %v2824, 7
    %v2826 = vsub.s32 %v2502, %v2825
    %v2827 = vrot.slane %v1443, %v2826
    %v2828 = vsel %vm2507, %v2827, %v2823
    %v2829 = vlaneseq
    %v2830 = vshrl.u32 %v2829, 7
    %v2831 = vsub.s32 %v2509, %v2830
    %v2832 = vrot.slane %v1444, %v2831
    %v2833 = vsel %vm2514, %v2832, %v2828
    %v2834 = vlaneseq
    %v2835 = vshrl.u32 %v2834, 7
    %v2836 = vsub.s32 %v2516, %v2835
    %v2837 = vrot.slane %v1445, %v2836
    %v2838 = vsel %vm2521, %v2837, %v2833
    %v2839 = vlaneseq
    %v2840 = vshrl.u32 %v2839, 7
    %v2841 = vsub.s32 %v2413, %v2840
    %v2842 = vrot.slane %v1446, %v2841
    %v2843 = vlaneseq
    %v2844 = vshrl.u32 %v2843, 7
    %v2845 = vsub.s32 %v2418, %v2844
    %v2846 = vrot.slane %v1447, %v2845
    %v2847 = vsel %vm2423, %v2846, %v2842
    %v2848 = vlaneseq
    %v2849 = vshrl.u32 %v2848, 7
    %v2850 = vsub.s32 %v2425, %v2849
    %v2851 = vrot.slane %v1448, %v2850
    %v2852 = vsel %vm2430, %v2851, %v2847
    %v2853 = vlaneseq
    %v2854 = vshrl.u32 %v2853, 7
    %v2855 = vsub.s32 %v2432, %v2854
    %v2856 = vrot.slane %v1449, %v2855
    %v2857 = vsel %vm2437, %v2856, %v2852
    %v2858 = vlaneseq
    %v2859 = vshrl.u32 %v2858, 7
    %v2860 = vsub.s32 %v2439, %v2859
    %v2861 = vrot.slane %v1450, %v2860
    %v2862 = vsel %vm2444, %v2861, %v2857
    %v2863 = vlaneseq
    %v2864 = vshrl.u32 %v2863, 7
    %v2865 = vsub.s32 %v2446, %v2864
    %v2866 = vrot.slane %v1451, %v2865
    %v2867 = vsel %vm2451, %v2866, %v2862
    %v2868 = vlaneseq
    %v2869 = vshrl.u32 %v2868, 7
    %v2870 = vsub.s32 %v2453, %v2869
    %v2871 = vrot.slane %v1452, %v2870
    %v2872 = vsel %vm2458, %v2871, %v2867
    %v2873 = vlaneseq
    %v2874 = vshrl.u32 %v2873, 7
    %v2875 = vsub.s32 %v2460, %v2874
    %v2876 = vrot.slane %v1453, %v2875
    %v2877 = vsel %vm2465, %v2876, %v2872
    %v2878 = vlaneseq
    %v2879 = vshrl.u32 %v2878, 7
    %v2880 = vsub.s32 %v2467, %v2879
    %v2881 = vrot.slane %v1454, %v2880
    %v2882 = vsel %vm2472, %v2881, %v2877
    %v2883 = vlaneseq
    %v2884 = vshrl.u32 %v2883, 7
    %v2885 = vsub.s32 %v2474, %v2884
    %v2886 = vrot.slane %v1455, %v2885
    %v2887 = vsel %vm2479, %v2886, %v2882
    %v2888 = vlaneseq
    %v2889 = vshrl.u32 %v2888, 7
    %v2890 = vsub.s32 %v2481, %v2889
    %v2891 = vrot.slane %v1456, %v2890
    %v2892 = vsel %vm2486, %v2891, %v2887
    %v2893 = vlaneseq
    %v2894 = vshrl.u32 %v2893, 7
    %v2895 = vsub.s32 %v2488, %v2894
    %v2896 = vrot.slane %v1457, %v2895
    %v2897 = vsel %vm2493, %v2896, %v2892
    %v2898 = vlaneseq
    %v2899 = vshrl.u32 %v2898, 7
    %v2900 = vsub.s32 %v2495, %v2899
    %v2901 = vrot.slane %v1458, %v2900
    %v2902 = vsel %vm2500, %v2901, %v2897
    %v2903 = vlaneseq
    %v2904 = vshrl.u32 %v2903, 7
    %v2905 = vsub.s32 %v2502, %v2904
    %v2906 = vrot.slane %v1459, %v2905
    %v2907 = vsel %vm2507, %v2906, %v2902
    %v2908 = vlaneseq
    %v2909 = vshrl.u32 %v2908, 7
    %v2910 = vsub.s32 %v2509, %v2909
    %v2911 = vrot.slane %v1460, %v2910
    %v2912 = vsel %vm2514, %v2911, %v2907
    %v2913 = vlaneseq
    %v2914 = vshrl.u32 %v2913, 7
    %v2915 = vsub.s32 %v2516, %v2914
    %v2916 = vrot.slane %v1461, %v2915
    %v2917 = vsel %vm2521, %v2916, %v2912
    %v2918 = vlaneseq
    %v2919 = vshrl.u32 %v2918, 7
    %v2920 = vsub.s32 %v2413, %v2919
    %v2921 = vrot.slane %v1462, %v2920
    %v2922 = vlaneseq
    %v2923 = vshrl.u32 %v2922, 7
    %v2924 = vsub.s32 %v2418, %v2923
    %v2925 = vrot.slane %v1463, %v2924
    %v2926 = vsel %vm2423, %v2925, %v2921
    %v2927 = vlaneseq
    %v2928 = vshrl.u32 %v2927, 7
    %v2929 = vsub.s32 %v2425, %v2928
    %v2930 = vrot.slane %v1464, %v2929
    %v2931 = vsel %vm2430, %v2930, %v2926
    %v2932 = vlaneseq
    %v2933 = vshrl.u32 %v2932, 7
    %v2934 = vsub.s32 %v2432, %v2933
    %v2935 = vrot.slane %v1465, %v2934
    %v2936 = vsel %vm2437, %v2935, %v2931
    %v2937 = vlaneseq
    %v2938 = vshrl.u32 %v2937, 7
    %v2939 = vsub.s32 %v2439, %v2938
    %v2940 = vrot.slane %v1466, %v2939
    %v2941 = vsel %vm2444, %v2940, %v2936
    %v2942 = vlaneseq
    %v2943 = vshrl.u32 %v2942, 7
    %v2944 = vsub.s32 %v2446, %v2943
    %v2945 = vrot.slane %v1467, %v2944
    %v2946 = vsel %vm2451, %v2945, %v2941
    %v2947 = vlaneseq
    %v2948 = vshrl.u32 %v2947, 7
    %v2949 = vsub.s32 %v2453, %v2948
    %v2950 = vrot.slane %v1468, %v2949
    %v2951 = vsel %vm2458, %v2950, %v2946
    %v2952 = vlaneseq
    %v2953 = vshrl.u32 %v2952, 7
    %v2954 = vsub.s32 %v2460, %v2953
    %v2955 = vrot.slane %v1469, %v2954
    %v2956 = vsel %vm2465, %v2955, %v2951
    %v2957 = vlaneseq
    %v2958 = vshrl.u32 %v2957, 7
    %v2959 = vsub.s32 %v2467, %v2958
    %v2960 = vrot.slane %v1470, %v2959
    %v2961 = vsel %vm2472, %v2960, %v2956
    %v2962 = vlaneseq
    %v2963 = vshrl.u32 %v2962, 7
    %v2964 = vsub.s32 %v2474, %v2963
    %v2965 = vrot.slane %v1471, %v2964
    %v2966 = vsel %vm2479, %v2965, %v2961
    %v2967 = vlaneseq
    %v2968 = vshrl.u32 %v2967, 7
    %v2969 = vsub.s32 %v2481, %v2968
    %v2970 = vrot.slane %v1472, %v2969
    %v2971 = vsel %vm2486, %v2970, %v2966
    %v2972 = vlaneseq
    %v2973 = vshrl.u32 %v2972, 7
    %v2974 = vsub.s32 %v2488, %v2973
    %v2975 = vrot.slane %v1473, %v2974
    %v2976 = vsel %vm2493, %v2975, %v2971
    %v2977 = vlaneseq
    %v2978 = vshrl.u32 %v2977, 7
    %v2979 = vsub.s32 %v2495, %v2978
    %v2980 = vrot.slane %v1474, %v2979
    %v2981 = vsel %vm2500, %v2980, %v2976
    %v2982 = vlaneseq
    %v2983 = vshrl.u32 %v2982, 7
    %v2984 = vsub.s32 %v2502, %v2983
    %v2985 = vrot.slane %v1475, %v2984
    %v2986 = vsel %vm2507, %v2985, %v2981
    %v2987 = vlaneseq
    %v2988 = vshrl.u32 %v2987, 7
    %v2989 = vsub.s32 %v2509, %v2988
    %v2990 = vrot.slane %v1476, %v2989
    %v2991 = vsel %vm2514, %v2990, %v2986
    %v2992 = vlaneseq
    %v2993 = vshrl.u32 %v2992, 7
    %v2994 = vsub.s32 %v2516, %v2993
    %v2995 = vrot.slane %v1477, %v2994
    %v2996 = vsel %vm2521, %v2995, %v2991
    %v2997 = vlaneseq
    %v2998 = vshrl.u32 %v2997, 7
    %v2999 = vsub.s32 %v2413, %v2998
    %v3000 = vrot.slane %v1478, %v2999
    %v3001 = vlaneseq
    %v3002 = vshrl.u32 %v3001, 7
    %v3003 = vsub.s32 %v2418, %v3002
    %v3004 = vrot.slane %v1479, %v3003
    %v3005 = vsel %vm2423, %v3004, %v3000
    %v3006 = vlaneseq
    %v3007 = vshrl.u32 %v3006, 7
    %v3008 = vsub.s32 %v2425, %v3007
    %v3009 = vrot.slane %v1480, %v3008
    %v3010 = vsel %vm2430, %v3009, %v3005
    %v3011 = vlaneseq
    %v3012 = vshrl.u32 %v3011, 7
    %v3013 = vsub.s32 %v2432, %v3012
    %v3014 = vrot.slane %v1481, %v3013
    %v3015 = vsel %vm2437, %v3014, %v3010
    %v3016 = vlaneseq
    %v3017 = vshrl.u32 %v3016, 7
    %v3018 = vsub.s32 %v2439, %v3017
    %v3019 = vrot.slane %v1482, %v3018
    %v3020 = vsel %vm2444, %v3019, %v3015
    %v3021 = vlaneseq
    %v3022 = vshrl.u32 %v3021, 7
    %v3023 = vsub.s32 %v2446, %v3022
    %v3024 = vrot.slane %v1483, %v3023
    %v3025 = vsel %vm2451, %v3024, %v3020
    %v3026 = vlaneseq
    %v3027 = vshrl.u32 %v3026, 7
    %v3028 = vsub.s32 %v2453, %v3027
    %v3029 = vrot.slane %v1484, %v3028
    %v3030 = vsel %vm2458, %v3029, %v3025
    %v3031 = vlaneseq
    %v3032 = vshrl.u32 %v3031, 7
    %v3033 = vsub.s32 %v2460, %v3032
    %v3034 = vrot.slane %v1485, %v3033
    %v3035 = vsel %vm2465, %v3034, %v3030
    %v3036 = vlaneseq
    %v3037 = vshrl.u32 %v3036, 7
    %v3038 = vsub.s32 %v2467, %v3037
    %v3039 = vrot.slane %v1486, %v3038
    %v3040 = vsel %vm2472, %v3039, %v3035
    %v3041 = vlaneseq
    %v3042 = vshrl.u32 %v3041, 7
    %v3043 = vsub.s32 %v2474, %v3042
    %v3044 = vrot.slane %v1487, %v3043
    %v3045 = vsel %vm2479, %v3044, %v3040
    %v3046 = vlaneseq
    %v3047 = vshrl.u32 %v3046, 7
    %v3048 = vsub.s32 %v2481, %v3047
    %v3049 = vrot.slane %v1488, %v3048
    %v3050 = vsel %vm2486, %v3049, %v3045
    %v3051 = vlaneseq
    %v3052 = vshrl.u32 %v3051, 7
    %v3053 = vsub.s32 %v2488, %v3052
    %v3054 = vrot.slane %v1489, %v3053
    %v3055 = vsel %vm2493, %v3054, %v3050
    %v3056 = vlaneseq
    %v3057 = vshrl.u32 %v3056, 7
    %v3058 = vsub.s32 %v2495, %v3057
    %v3059 = vrot.slane %v1490, %v3058
    %v3060 = vsel %vm2500, %v3059, %v3055
    %v3061 = vlaneseq
    %v3062 = vshrl.u32 %v3061, 7
    %v3063 = vsub.s32 %v2502, %v3062
    %v3064 = vrot.slane %v1491, %v3063
    %v3065 = vsel %vm2507, %v3064, %v3060
    %v3066 = vlaneseq
    %v3067 = vshrl.u32 %v3066, 7
    %v3068 = vsub.s32 %v2509, %v3067
    %v3069 = vrot.slane %v1492, %v3068
    %v3070 = vsel %vm2514, %v3069, %v3065
    %v3071 = vlaneseq
    %v3072 = vshrl.u32 %v3071, 7
    %v3073 = vsub.s32 %v2516, %v3072
    %v3074 = vrot.slane %v1493, %v3073
    %v3075 = vsel %vm2521, %v3074, %v3070
    %v3076 = vlaneseq
    %v3077 = vshrl.u32 %v3076, 7
    %v3078 = vsub.s32 %v2413, %v3077
    %v3079 = vrot.slane %v1494, %v3078
    %v3080 = vlaneseq
    %v3081 = vshrl.u32 %v3080, 7
    %v3082 = vsub.s32 %v2418, %v3081
    %v3083 = vrot.slane %v1495, %v3082
    %v3084 = vsel %vm2423, %v3083, %v3079
    %v3085 = vlaneseq
    %v3086 = vshrl.u32 %v3085, 7
    %v3087 = vsub.s32 %v2425, %v3086
    %v3088 = vrot.slane %v1496, %v3087
    %v3089 = vsel %vm2430, %v3088, %v3084
    %v3090 = vlaneseq
    %v3091 = vshrl.u32 %v3090, 7
    %v3092 = vsub.s32 %v2432, %v3091
    %v3093 = vrot.slane %v1497, %v3092
    %v3094 = vsel %vm2437, %v3093, %v3089
    %v3095 = vlaneseq
    %v3096 = vshrl.u32 %v3095, 7
    %v3097 = vsub.s32 %v2439, %v3096
    %v3098 = vrot.slane %v1498, %v3097
    %v3099 = vsel %vm2444, %v3098, %v3094
    %v3100 = vlaneseq
    %v3101 = vshrl.u32 %v3100, 7
    %v3102 = vsub.s32 %v2446, %v3101
    %v3103 = vrot.slane %v1499, %v3102
    %v3104 = vsel %vm2451, %v3103, %v3099
    %v3105 = vlaneseq
    %v3106 = vshrl.u32 %v3105, 7
    %v3107 = vsub.s32 %v2453, %v3106
    %v3108 = vrot.slane %v1500, %v3107
    %v3109 = vsel %vm2458, %v3108, %v3104
    %v3110 = vlaneseq
    %v3111 = vshrl.u32 %v3110, 7
    %v3112 = vsub.s32 %v2460, %v3111
    %v3113 = vrot.slane %v1501, %v3112
    %v3114 = vsel %vm2465, %v3113, %v3109
    %v3115 = vlaneseq
    %v3116 = vshrl.u32 %v3115, 7
    %v3117 = vsub.s32 %v2467, %v3116
    %v3118 = vrot.slane %v1502, %v3117
    %v3119 = vsel %vm2472, %v3118, %v3114
    %v3120 = vlaneseq
    %v3121 = vshrl.u32 %v3120, 7
    %v3122 = vsub.s32 %v2474, %v3121
    %v3123 = vrot.slane %v1503, %v3122
    %v3124 = vsel %vm2479, %v3123, %v3119
    %v3125 = vlaneseq
    %v3126 = vshrl.u32 %v3125, 7
    %v3127 = vsub.s32 %v2481, %v3126
    %v3128 = vrot.slane %v1504, %v3127
    %v3129 = vsel %vm2486, %v3128, %v3124
    %v3130 = vlaneseq
    %v3131 = vshrl.u32 %v3130, 7
    %v3132 = vsub.s32 %v2488, %v3131
    %v3133 = vrot.slane %v1505, %v3132
    %v3134 = vsel %vm2493, %v3133, %v3129
    %v3135 = vlaneseq
    %v3136 = vshrl.u32 %v3135, 7
    %v3137 = vsub.s32 %v2495, %v3136
    %v3138 = vrot.slane %v1506, %v3137
    %v3139 = vsel %vm2500, %v3138, %v3134
    %v3140 = vlaneseq
    %v3141 = vshrl.u32 %v3140, 7
    %v3142 = vsub.s32 %v2502, %v3141
    %v3143 = vrot.slane %v1507, %v3142
    %v3144 = vsel %vm2507, %v3143, %v3139
    %v3145 = vlaneseq
    %v3146 = vshrl.u32 %v3145, 7
    %v3147 = vsub.s32 %v2509, %v3146
    %v3148 = vrot.slane %v1508, %v3147
    %v3149 = vsel %vm2514, %v3148, %v3144
    %v3150 = vlaneseq
    %v3151 = vshrl.u32 %v3150, 7
    %v3152 = vsub.s32 %v2516, %v3151
    %v3153 = vrot.slane %v1509, %v3152
    %v3154 = vsel %vm2521, %v3153, %v3149
    %v3155 = vlaneseq
    %v3156 = vshrl.u32 %v3155, 7
    %v3157 = vsub.s32 %v2413, %v3156
    %v3158 = vrot.slane %v1510, %v3157
    %v3159 = vlaneseq
    %v3160 = vshrl.u32 %v3159, 7
    %v3161 = vsub.s32 %v2418, %v3160
    %v3162 = vrot.slane %v1511, %v3161
    %v3163 = vsel %vm2423, %v3162, %v3158
    %v3164 = vlaneseq
    %v3165 = vshrl.u32 %v3164, 7
    %v3166 = vsub.s32 %v2425, %v3165
    %v3167 = vrot.slane %v1512, %v3166
    %v3168 = vsel %vm2430, %v3167, %v3163
    %v3169 = vlaneseq
    %v3170 = vshrl.u32 %v3169, 7
    %v3171 = vsub.s32 %v2432, %v3170
    %v3172 = vrot.slane %v1513, %v3171
    %v3173 = vsel %vm2437, %v3172, %v3168
    %v3174 = vlaneseq
    %v3175 = vshrl.u32 %v3174, 7
    %v3176 = vsub.s32 %v2439, %v3175
    %v3177 = vrot.slane %v1514, %v3176
    %v3178 = vsel %vm2444, %v3177, %v3173
    %v3179 = vlaneseq
    %v3180 = vshrl.u32 %v3179, 7
    %v3181 = vsub.s32 %v2446, %v3180
    %v3182 = vrot.slane %v1515, %v3181
    %v3183 = vsel %vm2451, %v3182, %v3178
    %v3184 = vlaneseq
    %v3185 = vshrl.u32 %v3184, 7
    %v3186 = vsub.s32 %v2453, %v3185
    %v3187 = vrot.slane %v1516, %v3186
    %v3188 = vsel %vm2458, %v3187, %v3183
    %v3189 = vlaneseq
    %v3190 = vshrl.u32 %v3189, 7
    %v3191 = vsub.s32 %v2460, %v3190
    %v3192 = vrot.slane %v1517, %v3191
    %v3193 = vsel %vm2465, %v3192, %v3188
    %v3194 = vlaneseq
    %v3195 = vshrl.u32 %v3194, 7
    %v3196 = vsub.s32 %v2467, %v3195
    %v3197 = vrot.slane %v1518, %v3196
    %v3198 = vsel %vm2472, %v3197, %v3193
    %v3199 = vlaneseq
    %v3200 = vshrl.u32 %v3199, 7
    %v3201 = vsub.s32 %v2474, %v3200
    %v3202 = vrot.slane %v1519, %v3201
    %v3203 = vsel %vm2479, %v3202, %v3198
    %v3204 = vlaneseq
    %v3205 = vshrl.u32 %v3204, 7
    %v3206 = vsub.s32 %v2481, %v3205
    %v3207 = vrot.slane %v1520, %v3206
    %v3208 = vsel %vm2486, %v3207, %v3203
    %v3209 = vlaneseq
    %v3210 = vshrl.u32 %v3209, 7
    %v3211 = vsub.s32 %v2488, %v3210
    %v3212 = vrot.slane %v1521, %v3211
    %v3213 = vsel %vm2493, %v3212, %v3208
    %v3214 = vlaneseq
    %v3215 = vshrl.u32 %v3214, 7
    %v3216 = vsub.s32 %v2495, %v3215
    %v3217 = vrot.slane %v1522, %v3216
    %v3218 = vsel %vm2500, %v3217, %v3213
    %v3219 = vlaneseq
    %v3220 = vshrl.u32 %v3219, 7
    %v3221 = vsub.s32 %v2502, %v3220
    %v3222 = vrot.slane %v1523, %v3221
    %v3223 = vsel %vm2507, %v3222, %v3218
    %v3224 = vlaneseq
    %v3225 = vshrl.u32 %v3224, 7
    %v3226 = vsub.s32 %v2509, %v3225
    %v3227 = vrot.slane %v1524, %v3226
    %v3228 = vsel %vm2514, %v3227, %v3223
    %v3229 = vlaneseq
    %v3230 = vshrl.u32 %v3229, 7
    %v3231 = vsub.s32 %v2516, %v3230
    %v3232 = vrot.slane %v1525, %v3231
    %v3233 = vsel %vm2521, %v3232, %v3228
    %v3234 = vlaneseq
    %v3235 = vshrl.u32 %v3234, 7
    %v3236 = vsub.s32 %v2413, %v3235
    %v3237 = vrot.slane %v1526, %v3236
    %v3238 = vlaneseq
    %v3239 = vshrl.u32 %v3238, 7
    %v3240 = vsub.s32 %v2418, %v3239
    %v3241 = vrot.slane %v1527, %v3240
    %v3242 = vsel %vm2423, %v3241, %v3237
    %v3243 = vlaneseq
    %v3244 = vshrl.u32 %v3243, 7
    %v3245 = vsub.s32 %v2425, %v3244
    %v3246 = vrot.slane %v1528, %v3245
    %v3247 = vsel %vm2430, %v3246, %v3242
    %v3248 = vlaneseq
    %v3249 = vshrl.u32 %v3248, 7
    %v3250 = vsub.s32 %v2432, %v3249
    %v3251 = vrot.slane %v1529, %v3250
    %v3252 = vsel %vm2437, %v3251, %v3247
    %v3253 = vlaneseq
    %v3254 = vshrl.u32 %v3253, 7
    %v3255 = vsub.s32 %v2439, %v3254
    %v3256 = vrot.slane %v1530, %v3255
    %v3257 = vsel %vm2444, %v3256, %v3252
    %v3258 = vlaneseq
    %v3259 = vshrl.u32 %v3258, 7
    %v3260 = vsub.s32 %v2446, %v3259
    %v3261 = vrot.slane %v1531, %v3260
    %v3262 = vsel %vm2451, %v3261, %v3257
    %v3263 = vlaneseq
    %v3264 = vshrl.u32 %v3263, 7
    %v3265 = vsub.s32 %v2453, %v3264
    %v3266 = vrot.slane %v1532, %v3265
    %v3267 = vsel %vm2458, %v3266, %v3262
    %v3268 = vlaneseq
    %v3269 = vshrl.u32 %v3268, 7
    %v3270 = vsub.s32 %v2460, %v3269
    %v3271 = vrot.slane %v1533, %v3270
    %v3272 = vsel %vm2465, %v3271, %v3267
    %v3273 = vlaneseq
    %v3274 = vshrl.u32 %v3273, 7
    %v3275 = vsub.s32 %v2467, %v3274
    %v3276 = vrot.slane %v1534, %v3275
    %v3277 = vsel %vm2472, %v3276, %v3272
    %v3278 = vlaneseq
    %v3279 = vshrl.u32 %v3278, 7
    %v3280 = vsub.s32 %v2474, %v3279
    %v3281 = vrot.slane %v1535, %v3280
    %v3282 = vsel %vm2479, %v3281, %v3277
    %v3283 = vlaneseq
    %v3284 = vshrl.u32 %v3283, 7
    %v3285 = vsub.s32 %v2481, %v3284
    %v3286 = vrot.slane %v1536, %v3285
    %v3287 = vsel %vm2486, %v3286, %v3282
    %v3288 = vlaneseq
    %v3289 = vshrl.u32 %v3288, 7
    %v3290 = vsub.s32 %v2488, %v3289
    %v3291 = vrot.slane %v1537, %v3290
    %v3292 = vsel %vm2493, %v3291, %v3287
    %v3293 = vlaneseq
    %v3294 = vshrl.u32 %v3293, 7
    %v3295 = vsub.s32 %v2495, %v3294
    %v3296 = vrot.slane %v1538, %v3295
    %v3297 = vsel %vm2500, %v3296, %v3292
    %v3298 = vlaneseq
    %v3299 = vshrl.u32 %v3298, 7
    %v3300 = vsub.s32 %v2502, %v3299
    %v3301 = vrot.slane %v1539, %v3300
    %v3302 = vsel %vm2507, %v3301, %v3297
    %v3303 = vlaneseq
    %v3304 = vshrl.u32 %v3303, 7
    %v3305 = vsub.s32 %v2509, %v3304
    %v3306 = vrot.slane %v1540, %v3305
    %v3307 = vsel %vm2514, %v3306, %v3302
    %v3308 = vlaneseq
    %v3309 = vshrl.u32 %v3308, 7
    %v3310 = vsub.s32 %v2516, %v3309
    %v3311 = vrot.slane %v1541, %v3310
    %v3312 = vsel %vm2521, %v3311, %v3307
    %v3313 = vlaneseq
    %v3314 = vshrl.u32 %v3313, 7
    %v3315 = vsub.s32 %v2413, %v3314
    %v3316 = vrot.slane %v1542, %v3315
    %v3317 = vlaneseq
    %v3318 = vshrl.u32 %v3317, 7
    %v3319 = vsub.s32 %v2418, %v3318
    %v3320 = vrot.slane %v1543, %v3319
    %v3321 = vsel %vm2423, %v3320, %v3316
    %v3322 = vlaneseq
    %v3323 = vshrl.u32 %v3322, 7
    %v3324 = vsub.s32 %v2425, %v3323
    %v3325 = vrot.slane %v1544, %v3324
    %v3326 = vsel %vm2430, %v3325, %v3321
    %v3327 = vlaneseq
    %v3328 = vshrl.u32 %v3327, 7
    %v3329 = vsub.s32 %v2432, %v3328
    %v3330 = vrot.slane %v1545, %v3329
    %v3331 = vsel %vm2437, %v3330, %v3326
    %v3332 = vlaneseq
    %v3333 = vshrl.u32 %v3332, 7
    %v3334 = vsub.s32 %v2439, %v3333
    %v3335 = vrot.slane %v1546, %v3334
    %v3336 = vsel %vm2444, %v3335, %v3331
    %v3337 = vlaneseq
    %v3338 = vshrl.u32 %v3337, 7
    %v3339 = vsub.s32 %v2446, %v3338
    %v3340 = vrot.slane %v1547, %v3339
    %v3341 = vsel %vm2451, %v3340, %v3336
    %v3342 = vlaneseq
    %v3343 = vshrl.u32 %v3342, 7
    %v3344 = vsub.s32 %v2453, %v3343
    %v3345 = vrot.slane %v1548, %v3344
    %v3346 = vsel %vm2458, %v3345, %v3341
    %v3347 = vlaneseq
    %v3348 = vshrl.u32 %v3347, 7
    %v3349 = vsub.s32 %v2460, %v3348
    %v3350 = vrot.slane %v1549, %v3349
    %v3351 = vsel %vm2465, %v3350, %v3346
    %v3352 = vlaneseq
    %v3353 = vshrl.u32 %v3352, 7
    %v3354 = vsub.s32 %v2467, %v3353
    %v3355 = vrot.slane %v1550, %v3354
    %v3356 = vsel %vm2472, %v3355, %v3351
    %v3357 = vlaneseq
    %v3358 = vshrl.u32 %v3357, 7
    %v3359 = vsub.s32 %v2474, %v3358
    %v3360 = vrot.slane %v1551, %v3359
    %v3361 = vsel %vm2479, %v3360, %v3356
    %v3362 = vlaneseq
    %v3363 = vshrl.u32 %v3362, 7
    %v3364 = vsub.s32 %v2481, %v3363
    %v3365 = vrot.slane %v1552, %v3364
    %v3366 = vsel %vm2486, %v3365, %v3361
    %v3367 = vlaneseq
    %v3368 = vshrl.u32 %v3367, 7
    %v3369 = vsub.s32 %v2488, %v3368
    %v3370 = vrot.slane %v1553, %v3369
    %v3371 = vsel %vm2493, %v3370, %v3366
    %v3372 = vlaneseq
    %v3373 = vshrl.u32 %v3372, 7
    %v3374 = vsub.s32 %v2495, %v3373
    %v3375 = vrot.slane %v1554, %v3374
    %v3376 = vsel %vm2500, %v3375, %v3371
    %v3377 = vlaneseq
    %v3378 = vshrl.u32 %v3377, 7
    %v3379 = vsub.s32 %v2502, %v3378
    %v3380 = vrot.slane %v1555, %v3379
    %v3381 = vsel %vm2507, %v3380, %v3376
    %v3382 = vlaneseq
    %v3383 = vshrl.u32 %v3382, 7
    %v3384 = vsub.s32 %v2509, %v3383
    %v3385 = vrot.slane %v1556, %v3384
    %v3386 = vsel %vm2514, %v3385, %v3381
    %v3387 = vlaneseq
    %v3388 = vshrl.u32 %v3387, 7
    %v3389 = vsub.s32 %v2516, %v3388
    %v3390 = vrot.slane %v1557, %v3389
    %v3391 = vsel %vm2521, %v3390, %v3386
    %v3392 = vlaneseq
    %v3393 = vshrl.u32 %v3392, 7
    %v3394 = vsub.s32 %v2413, %v3393
    %v3395 = vrot.slane %v1558, %v3394
    %v3396 = vlaneseq
    %v3397 = vshrl.u32 %v3396, 7
    %v3398 = vsub.s32 %v2418, %v3397
    %v3399 = vrot.slane %v1559, %v3398
    %v3400 = vsel %vm2423, %v3399, %v3395
    %v3401 = vlaneseq
    %v3402 = vshrl.u32 %v3401, 7
    %v3403 = vsub.s32 %v2425, %v3402
    %v3404 = vrot.slane %v1560, %v3403
    %v3405 = vsel %vm2430, %v3404, %v3400
    %v3406 = vlaneseq
    %v3407 = vshrl.u32 %v3406, 7
    %v3408 = vsub.s32 %v2432, %v3407
    %v3409 = vrot.slane %v1561, %v3408
    %v3410 = vsel %vm2437, %v3409, %v3405
    %v3411 = vlaneseq
    %v3412 = vshrl.u32 %v3411, 7
    %v3413 = vsub.s32 %v2439, %v3412
    %v3414 = vrot.slane %v1562, %v3413
    %v3415 = vsel %vm2444, %v3414, %v3410
    %v3416 = vlaneseq
    %v3417 = vshrl.u32 %v3416, 7
    %v3418 = vsub.s32 %v2446, %v3417
    %v3419 = vrot.slane %v1563, %v3418
    %v3420 = vsel %vm2451, %v3419, %v3415
    %v3421 = vlaneseq
    %v3422 = vshrl.u32 %v3421, 7
    %v3423 = vsub.s32 %v2453, %v3422
    %v3424 = vrot.slane %v1564, %v3423
    %v3425 = vsel %vm2458, %v3424, %v3420
    %v3426 = vlaneseq
    %v3427 = vshrl.u32 %v3426, 7
    %v3428 = vsub.s32 %v2460, %v3427
    %v3429 = vrot.slane %v1565, %v3428
    %v3430 = vsel %vm2465, %v3429, %v3425
    %v3431 = vlaneseq
    %v3432 = vshrl.u32 %v3431, 7
    %v3433 = vsub.s32 %v2467, %v3432
    %v3434 = vrot.slane %v1566, %v3433
    %v3435 = vsel %vm2472, %v3434, %v3430
    %v3436 = vlaneseq
    %v3437 = vshrl.u32 %v3436, 7
    %v3438 = vsub.s32 %v2474, %v3437
    %v3439 = vrot.slane %v1567, %v3438
    %v3440 = vsel %vm2479, %v3439, %v3435
    %v3441 = vlaneseq
    %v3442 = vshrl.u32 %v3441, 7
    %v3443 = vsub.s32 %v2481, %v3442
    %v3444 = vrot.slane %v1568, %v3443
    %v3445 = vsel %vm2486, %v3444, %v3440
    %v3446 = vlaneseq
    %v3447 = vshrl.u32 %v3446, 7
    %v3448 = vsub.s32 %v2488, %v3447
    %v3449 = vrot.slane %v1569, %v3448
    %v3450 = vsel %vm2493, %v3449, %v3445
    %v3451 = vlaneseq
    %v3452 = vshrl.u32 %v3451, 7
    %v3453 = vsub.s32 %v2495, %v3452
    %v3454 = vrot.slane %v1570, %v3453
    %v3455 = vsel %vm2500, %v3454, %v3450
    %v3456 = vlaneseq
    %v3457 = vshrl.u32 %v3456, 7
    %v3458 = vsub.s32 %v2502, %v3457
    %v3459 = vrot.slane %v1571, %v3458
    %v3460 = vsel %vm2507, %v3459, %v3455
    %v3461 = vlaneseq
    %v3462 = vshrl.u32 %v3461, 7
    %v3463 = vsub.s32 %v2509, %v3462
    %v3464 = vrot.slane %v1572, %v3463
    %v3465 = vsel %vm2514, %v3464, %v3460
    %v3466 = vlaneseq
    %v3467 = vshrl.u32 %v3466, 7
    %v3468 = vsub.s32 %v2516, %v3467
    %v3469 = vrot.slane %v1573, %v3468
    %v3470 = vsel %vm2521, %v3469, %v3465
    %v3471 = vlaneseq
    %v3472 = vshrl.u32 %v3471, 7
    %v3473 = vsub.s32 %v2413, %v3472
    %v3474 = vrot.slane %v1574, %v3473
    %v3475 = vlaneseq
    %v3476 = vshrl.u32 %v3475, 7
    %v3477 = vsub.s32 %v2418, %v3476
    %v3478 = vrot.slane %v1575, %v3477
    %v3479 = vsel %vm2423, %v3478, %v3474
    %v3480 = vlaneseq
    %v3481 = vshrl.u32 %v3480, 7
    %v3482 = vsub.s32 %v2425, %v3481
    %v3483 = vrot.slane %v1576, %v3482
    %v3484 = vsel %vm2430, %v3483, %v3479
    %v3485 = vlaneseq
    %v3486 = vshrl.u32 %v3485, 7
    %v3487 = vsub.s32 %v2432, %v3486
    %v3488 = vrot.slane %v1577, %v3487
    %v3489 = vsel %vm2437, %v3488, %v3484
    %v3490 = vlaneseq
    %v3491 = vshrl.u32 %v3490, 7
    %v3492 = vsub.s32 %v2439, %v3491
    %v3493 = vrot.slane %v1578, %v3492
    %v3494 = vsel %vm2444, %v3493, %v3489
    %v3495 = vlaneseq
    %v3496 = vshrl.u32 %v3495, 7
    %v3497 = vsub.s32 %v2446, %v3496
    %v3498 = vrot.slane %v1579, %v3497
    %v3499 = vsel %vm2451, %v3498, %v3494
    %v3500 = vlaneseq
    %v3501 = vshrl.u32 %v3500, 7
    %v3502 = vsub.s32 %v2453, %v3501
    %v3503 = vrot.slane %v1580, %v3502
    %v3504 = vsel %vm2458, %v3503, %v3499
    %v3505 = vlaneseq
    %v3506 = vshrl.u32 %v3505, 7
    %v3507 = vsub.s32 %v2460, %v3506
    %v3508 = vrot.slane %v1581, %v3507
    %v3509 = vsel %vm2465, %v3508, %v3504
    %v3510 = vlaneseq
    %v3511 = vshrl.u32 %v3510, 7
    %v3512 = vsub.s32 %v2467, %v3511
    %v3513 = vrot.slane %v1582, %v3512
    %v3514 = vsel %vm2472, %v3513, %v3509
    %v3515 = vlaneseq
    %v3516 = vshrl.u32 %v3515, 7
    %v3517 = vsub.s32 %v2474, %v3516
    %v3518 = vrot.slane %v1583, %v3517
    %v3519 = vsel %vm2479, %v3518, %v3514
    %v3520 = vlaneseq
    %v3521 = vshrl.u32 %v3520, 7
    %v3522 = vsub.s32 %v2481, %v3521
    %v3523 = vrot.slane %v1584, %v3522
    %v3524 = vsel %vm2486, %v3523, %v3519
    %v3525 = vlaneseq
    %v3526 = vshrl.u32 %v3525, 7
    %v3527 = vsub.s32 %v2488, %v3526
    %v3528 = vrot.slane %v1585, %v3527
    %v3529 = vsel %vm2493, %v3528, %v3524
    %v3530 = vlaneseq
    %v3531 = vshrl.u32 %v3530, 7
    %v3532 = vsub.s32 %v2495, %v3531
    %v3533 = vrot.slane %v1586, %v3532
    %v3534 = vsel %vm2500, %v3533, %v3529
    %v3535 = vlaneseq
    %v3536 = vshrl.u32 %v3535, 7
    %v3537 = vsub.s32 %v2502, %v3536
    %v3538 = vrot.slane %v1587, %v3537
    %v3539 = vsel %vm2507, %v3538, %v3534
    %v3540 = vlaneseq
    %v3541 = vshrl.u32 %v3540, 7
    %v3542 = vsub.s32 %v2509, %v3541
    %v3543 = vrot.slane %v1588, %v3542
    %v3544 = vsel %vm2514, %v3543, %v3539
    %v3545 = vlaneseq
    %v3546 = vshrl.u32 %v3545, 7
    %v3547 = vsub.s32 %v2516, %v3546
    %v3548 = vrot.slane %v1589, %v3547
    %v3549 = vsel %vm2521, %v3548, %v3544
    %v3550 = vlaneseq
    %v3551 = vshrl.u32 %v3550, 7
    %v3552 = vsub.s32 %v2413, %v3551
    %v3553 = vrot.slane %v1590, %v3552
    %v3554 = vlaneseq
    %v3555 = vshrl.u32 %v3554, 7
    %v3556 = vsub.s32 %v2418, %v3555
    %v3557 = vrot.slane %v1591, %v3556
    %v3558 = vsel %vm2423, %v3557, %v3553
    %v3559 = vlaneseq
    %v3560 = vshrl.u32 %v3559, 7
    %v3561 = vsub.s32 %v2425, %v3560
    %v3562 = vrot.slane %v1592, %v3561
    %v3563 = vsel %vm2430, %v3562, %v3558
    %v3564 = vlaneseq
    %v3565 = vshrl.u32 %v3564, 7
    %v3566 = vsub.s32 %v2432, %v3565
    %v3567 = vrot.slane %v1593, %v3566
    %v3568 = vsel %vm2437, %v3567, %v3563
    %v3569 = vlaneseq
    %v3570 = vshrl.u32 %v3569, 7
    %v3571 = vsub.s32 %v2439, %v3570
    %v3572 = vrot.slane %v1594, %v3571
    %v3573 = vsel %vm2444, %v3572, %v3568
    %v3574 = vlaneseq
    %v3575 = vshrl.u32 %v3574, 7
    %v3576 = vsub.s32 %v2446, %v3575
    %v3577 = vrot.slane %v1595, %v3576
    %v3578 = vsel %vm2451, %v3577, %v3573
    %v3579 = vlaneseq
    %v3580 = vshrl.u32 %v3579, 7
    %v3581 = vsub.s32 %v2453, %v3580
    %v3582 = vrot.slane %v1596, %v3581
    %v3583 = vsel %vm2458, %v3582, %v3578
    %v3584 = vlaneseq
    %v3585 = vshrl.u32 %v3584, 7
    %v3586 = vsub.s32 %v2460, %v3585
    %v3587 = vrot.slane %v1597, %v3586
    %v3588 = vsel %vm2465, %v3587, %v3583
    %v3589 = vlaneseq
    %v3590 = vshrl.u32 %v3589, 7
    %v3591 = vsub.s32 %v2467, %v3590
    %v3592 = vrot.slane %v1598, %v3591
    %v3593 = vsel %vm2472, %v3592, %v3588
    %v3594 = vlaneseq
    %v3595 = vshrl.u32 %v3594, 7
    %v3596 = vsub.s32 %v2474, %v3595
    %v3597 = vrot.slane %v1599, %v3596
    %v3598 = vsel %vm2479, %v3597, %v3593
    %v3599 = vlaneseq
    %v3600 = vshrl.u32 %v3599, 7
    %v3601 = vsub.s32 %v2481, %v3600
    %v3602 = vrot.slane %v1600, %v3601
    %v3603 = vsel %vm2486, %v3602, %v3598
    %v3604 = vlaneseq
    %v3605 = vshrl.u32 %v3604, 7
    %v3606 = vsub.s32 %v2488, %v3605
    %v3607 = vrot.slane %v1601, %v3606
    %v3608 = vsel %vm2493, %v3607, %v3603
    %v3609 = vlaneseq
    %v3610 = vshrl.u32 %v3609, 7
    %v3611 = vsub.s32 %v2495, %v3610
    %v3612 = vrot.slane %v1602, %v3611
    %v3613 = vsel %vm2500, %v3612, %v3608
    %v3614 = vlaneseq
    %v3615 = vshrl.u32 %v3614, 7
    %v3616 = vsub.s32 %v2502, %v3615
    %v3617 = vrot.slane %v1603, %v3616
    %v3618 = vsel %vm2507, %v3617, %v3613
    %v3619 = vlaneseq
    %v3620 = vshrl.u32 %v3619, 7
    %v3621 = vsub.s32 %v2509, %v3620
    %v3622 = vrot.slane %v1604, %v3621
    %v3623 = vsel %vm2514, %v3622, %v3618
    %v3624 = vlaneseq
    %v3625 = vshrl.u32 %v3624, 7
    %v3626 = vsub.s32 %v2516, %v3625
    %v3627 = vrot.slane %v1605, %v3626
    %v3628 = vsel %vm2521, %v3627, %v3623
    %v3629 = vlaneseq
    %v3630 = vshrl.u32 %v3629, 7
    %v3631 = vsub.s32 %v2413, %v3630
    %v3632 = vrot.slane %v1606, %v3631
    %v3633 = vlaneseq
    %v3634 = vshrl.u32 %v3633, 7
    %v3635 = vsub.s32 %v2418, %v3634
    %v3636 = vrot.slane %v1607, %v3635
    %v3637 = vsel %vm2423, %v3636, %v3632
    %v3638 = vlaneseq
    %v3639 = vshrl.u32 %v3638, 7
    %v3640 = vsub.s32 %v2425, %v3639
    %v3641 = vrot.slane %v1608, %v3640
    %v3642 = vsel %vm2430, %v3641, %v3637
    %v3643 = vlaneseq
    %v3644 = vshrl.u32 %v3643, 7
    %v3645 = vsub.s32 %v2432, %v3644
    %v3646 = vrot.slane %v1609, %v3645
    %v3647 = vsel %vm2437, %v3646, %v3642
    %v3648 = vlaneseq
    %v3649 = vshrl.u32 %v3648, 7
    %v3650 = vsub.s32 %v2439, %v3649
    %v3651 = vrot.slane %v1610, %v3650
    %v3652 = vsel %vm2444, %v3651, %v3647
    %v3653 = vlaneseq
    %v3654 = vshrl.u32 %v3653, 7
    %v3655 = vsub.s32 %v2446, %v3654
    %v3656 = vrot.slane %v1611, %v3655
    %v3657 = vsel %vm2451, %v3656, %v3652
    %v3658 = vlaneseq
    %v3659 = vshrl.u32 %v3658, 7
    %v3660 = vsub.s32 %v2453, %v3659
    %v3661 = vrot.slane %v1612, %v3660
    %v3662 = vsel %vm2458, %v3661, %v3657
    %v3663 = vlaneseq
    %v3664 = vshrl.u32 %v3663, 7
    %v3665 = vsub.s32 %v2460, %v3664
    %v3666 = vrot.slane %v1613, %v3665
    %v3667 = vsel %vm2465, %v3666, %v3662
    %v3668 = vlaneseq
    %v3669 = vshrl.u32 %v3668, 7
    %v3670 = vsub.s32 %v2467, %v3669
    %v3671 = vrot.slane %v1614, %v3670
    %v3672 = vsel %vm2472, %v3671, %v3667
    %v3673 = vlaneseq
    %v3674 = vshrl.u32 %v3673, 7
    %v3675 = vsub.s32 %v2474, %v3674
    %v3676 = vrot.slane %v1615, %v3675
    %v3677 = vsel %vm2479, %v3676, %v3672
    %v3678 = vlaneseq
    %v3679 = vshrl.u32 %v3678, 7
    %v3680 = vsub.s32 %v2481, %v3679
    %v3681 = vrot.slane %v1616, %v3680
    %v3682 = vsel %vm2486, %v3681, %v3677
    %v3683 = vlaneseq
    %v3684 = vshrl.u32 %v3683, 7
    %v3685 = vsub.s32 %v2488, %v3684
    %v3686 = vrot.slane %v1617, %v3685
    %v3687 = vsel %vm2493, %v3686, %v3682
    %v3688 = vlaneseq
    %v3689 = vshrl.u32 %v3688, 7
    %v3690 = vsub.s32 %v2495, %v3689
    %v3691 = vrot.slane %v1618, %v3690
    %v3692 = vsel %vm2500, %v3691, %v3687
    %v3693 = vlaneseq
    %v3694 = vshrl.u32 %v3693, 7
    %v3695 = vsub.s32 %v2502, %v3694
    %v3696 = vrot.slane %v1619, %v3695
    %v3697 = vsel %vm2507, %v3696, %v3692
    %v3698 = vlaneseq
    %v3699 = vshrl.u32 %v3698, 7
    %v3700 = vsub.s32 %v2509, %v3699
    %v3701 = vrot.slane %v1620, %v3700
    %v3702 = vsel %vm2514, %v3701, %v3697
    %v3703 = vlaneseq
    %v3704 = vshrl.u32 %v3703, 7
    %v3705 = vsub.s32 %v2516, %v3704
    %v3706 = vrot.slane %v1621, %v3705
    %v3707 = vsel %vm2521, %v3706, %v3702
    %vm3708 = vcmask 1041409
    %v3709 = vsel %vm3708, %v3154, %v2522
    %v3710 = vsel %vm3708, %v3233, %v2601
    %v3711 = vsel %vm3708, %v3312, %v2680
    %v3712 = vsel %vm3708, %v3391, %v2759
    %v3713 = vsel %vm3708, %v3470, %v2838
    %v3714 = vsel %vm3708, %v3549, %v2917
    %v3715 = vsel %vm3708, %v3628, %v2996
    %v3716 = vsel %vm3708, %v3707, %v3075
    %3725 = vmatprep.subr.mxu0 %v1623
    %3726 = vmatpush1.msra.mxu0 %v1622
    %3727 = vmatprep.subr.mxu0 %v1627
    %3728 = vmatpush1.msra.mxu0 %v1626
    %3729 = vmatprep.subr.mxu0 %v1631
    %3730 = vmatpush1.msra.mxu0 %v1630
    %3731 = vmatprep.subr.mxu0 %v1635
    %3732 = vmatpush1.msra.mxu0 %v1634
    %3733 = vmatprep.subr.mxu0 %v1639
    %3734 = vmatpush1.msra.mxu0 %v1638
    %3735 = vmatprep.subr.mxu0 %v1643
    %3736 = vmatpush1.msra.mxu0 %v1642
    %3737 = vmatprep.subr.mxu0 %v1647
    %3738 = vmatpush1.msra.mxu0 %v1646
    %3739 = vmatprep.subr.mxu0 %v1651
    %3740 = vmatpush1.msra.mxu0 %v1650
    %3741 = vmatprep.subr.mxu0 %v1655
    %3742 = vmatpush1.msra.mxu0 %v1654
    %3743 = vmatprep.subr.mxu0 %v1659
    %3744 = vmatpush1.msra.mxu0 %v1658
    %3745 = vmatprep.subr.mxu0 %v1663
    %3746 = vmatpush1.msra.mxu0 %v1662
    %3747 = vmatprep.subr.mxu0 %v1667
    %3748 = vmatpush1.msra.mxu0 %v1666
    %3749 = vmatprep.subr.mxu0 %v1671
    %3750 = vmatpush1.msra.mxu0 %v1670
    %3751 = vmatprep.subr.mxu0 %v1675
    %3752 = vmatpush1.msra.mxu0 %v1674
    %3753 = vmatprep.subr.mxu0 %v1679
    %3754 = vmatpush1.msra.mxu0 %v1678
    %3755 = vmatprep.subr.mxu0 %v1683
    %3756 = vmatpush1.msra.mxu0 %v1682
    %3757 = vmatprep.subr.mxu0 %v1687
    %3758 = vmatpush1.msra.mxu0 %v1686
    %3759 = vmatprep.subr.mxu0 %v1691
    %3760 = vmatpush1.msra.mxu0 %v1690
    %3761 = vmatprep.subr.mxu0 %v1695
    %3762 = vmatpush1.msra.mxu0 %v1694
    %3763 = vmatprep.subr.mxu0 %v1699
    %3764 = vmatpush1.msra.mxu0 %v1698
    %3765 = vmatprep.subr.mxu0 %v1703
    %3766 = vmatpush1.msra.mxu0 %v1702
    %3767 = vmatprep.subr.mxu0 %v1707
    %3768 = vmatpush1.msra.mxu0 %v1706
    %3769 = vmatprep.subr.mxu0 %v1711
    %3770 = vmatpush1.msra.mxu0 %v1710
    %3771 = vmatprep.subr.mxu0 %v1715
    %3772 = vmatpush1.msra.mxu0 %v1714
    %3773 = vmatprep.subr.mxu0 %v1719
    %3774 = vmatpush1.msra.mxu0 %v1718
    %3775 = vmatprep.subr.mxu0 %v1723
    %3776 = vmatpush1.msra.mxu0 %v1722
    %3777 = vmatprep.subr.mxu0 %v1727
    %3778 = vmatpush1.msra.mxu0 %v1726
    %3779 = vmatprep.subr.mxu0 %v1731
    %3780 = vmatpush1.msra.mxu0 %v1730
    %3781 = vmatprep.subr.mxu0 %v1735
    %3782 = vmatpush1.msra.mxu0 %v1734
    %3783 = vmatprep.subr.mxu0 %v1739
    %3784 = vmatpush1.msra.mxu0 %v1738
    %3785 = vmatprep.subr.mxu0 %v1743
    %3786 = vmatpush1.msra.mxu0 %v1742
    %3787 = vmatprep.subr.mxu0 %v1747
    %3788 = vmatpush1.msra.mxu0 %v1746
    %3789 = vmatprep.mubr.f32.mxu0 %v3710
    %3790 = vmatmul.mubr.f32.gmra.mrb[0].mxu0 %v3709
    %v3791 = vpop.f32.mrb[0].mxu0
    %v3792 = vadd.f32 %v2139, %v3791
    %v3793 = vpop.f32.mrb[0].mxu0
    %v3794 = vadd.f32 %v2143, %v3793
    %3795 = vdwg.mxu0
    %3796 = vmatprep.subr.mxu0 %v1751
    %3797 = vmatpush1.msra.mxu0 %v1750
    %3798 = vmatprep.subr.mxu0 %v1755
    %3799 = vmatpush1.msra.mxu0 %v1754
    %3800 = vmatprep.subr.mxu0 %v1759
    %3801 = vmatpush1.msra.mxu0 %v1758
    %3802 = vmatprep.subr.mxu0 %v1763
    %3803 = vmatpush1.msra.mxu0 %v1762
    %3804 = vmatprep.subr.mxu0 %v1767
    %3805 = vmatpush1.msra.mxu0 %v1766
    %3806 = vmatprep.subr.mxu0 %v1771
    %3807 = vmatpush1.msra.mxu0 %v1770
    %3808 = vmatprep.subr.mxu0 %v1775
    %3809 = vmatpush1.msra.mxu0 %v1774
    %3810 = vmatprep.subr.mxu0 %v1779
    %3811 = vmatpush1.msra.mxu0 %v1778
    %3812 = vmatprep.subr.mxu0 %v1783
    %3813 = vmatpush1.msra.mxu0 %v1782
    %3814 = vmatprep.subr.mxu0 %v1787
    %3815 = vmatpush1.msra.mxu0 %v1786
    %3816 = vmatprep.subr.mxu0 %v1791
    %3817 = vmatpush1.msra.mxu0 %v1790
    %3818 = vmatprep.subr.mxu0 %v1795
    %3819 = vmatpush1.msra.mxu0 %v1794
    %3820 = vmatprep.subr.mxu0 %v1799
    %3821 = vmatpush1.msra.mxu0 %v1798
    %3822 = vmatprep.subr.mxu0 %v1803
    %3823 = vmatpush1.msra.mxu0 %v1802
    %3824 = vmatprep.subr.mxu0 %v1807
    %3825 = vmatpush1.msra.mxu0 %v1806
    %3826 = vmatprep.subr.mxu0 %v1811
    %3827 = vmatpush1.msra.mxu0 %v1810
    %3828 = vmatprep.subr.mxu0 %v1815
    %3829 = vmatpush1.msra.mxu0 %v1814
    %3830 = vmatprep.subr.mxu0 %v1819
    %3831 = vmatpush1.msra.mxu0 %v1818
    %3832 = vmatprep.subr.mxu0 %v1823
    %3833 = vmatpush1.msra.mxu0 %v1822
    %3834 = vmatprep.subr.mxu0 %v1827
    %3835 = vmatpush1.msra.mxu0 %v1826
    %3836 = vmatprep.subr.mxu0 %v1831
    %3837 = vmatpush1.msra.mxu0 %v1830
    %3838 = vmatprep.subr.mxu0 %v1835
    %3839 = vmatpush1.msra.mxu0 %v1834
    %3840 = vmatprep.subr.mxu0 %v1839
    %3841 = vmatpush1.msra.mxu0 %v1838
    %3842 = vmatprep.subr.mxu0 %v1843
    %3843 = vmatpush1.msra.mxu0 %v1842
    %3844 = vmatprep.subr.mxu0 %v1847
    %3845 = vmatpush1.msra.mxu0 %v1846
    %3846 = vmatprep.subr.mxu0 %v1851
    %3847 = vmatpush1.msra.mxu0 %v1850
    %3848 = vmatprep.subr.mxu0 %v1855
    %3849 = vmatpush1.msra.mxu0 %v1854
    %3850 = vmatprep.subr.mxu0 %v1859
    %3851 = vmatpush1.msra.mxu0 %v1858
    %3852 = vmatprep.subr.mxu0 %v1863
    %3853 = vmatpush1.msra.mxu0 %v1862
    %3854 = vmatprep.subr.mxu0 %v1867
    %3855 = vmatpush1.msra.mxu0 %v1866
    %3856 = vmatprep.subr.mxu0 %v1871
    %3857 = vmatpush1.msra.mxu0 %v1870
    %3858 = vmatprep.subr.mxu0 %v1875
    %3859 = vmatpush1.msra.mxu0 %v1874
    %3860 = vmatprep.mubr.f32.mxu0 %v3712
    %3861 = vmatmul.mubr.f32.gmra.mrb[0].mxu0 %v3711
    %v3862 = vpop.f32.mrb[0].mxu0
    %v3863 = vadd.f32 %v3792, %v3862
    %v3864 = vpop.f32.mrb[0].mxu0
    %v3865 = vadd.f32 %v3794, %v3864
    %3866 = vdwg.mxu0
    %3867 = vmatprep.subr.mxu0 %v1879
    %3868 = vmatpush1.msra.mxu0 %v1878
    %3869 = vmatprep.subr.mxu0 %v1883
    %3870 = vmatpush1.msra.mxu0 %v1882
    %3871 = vmatprep.subr.mxu0 %v1887
    %3872 = vmatpush1.msra.mxu0 %v1886
    %3873 = vmatprep.subr.mxu0 %v1891
    %3874 = vmatpush1.msra.mxu0 %v1890
    %3875 = vmatprep.subr.mxu0 %v1895
    %3876 = vmatpush1.msra.mxu0 %v1894
    %3877 = vmatprep.subr.mxu0 %v1899
    %3878 = vmatpush1.msra.mxu0 %v1898
    %3879 = vmatprep.subr.mxu0 %v1903
    %3880 = vmatpush1.msra.mxu0 %v1902
    %3881 = vmatprep.subr.mxu0 %v1907
    %3882 = vmatpush1.msra.mxu0 %v1906
    %3883 = vmatprep.subr.mxu0 %v1911
    %3884 = vmatpush1.msra.mxu0 %v1910
    %3885 = vmatprep.subr.mxu0 %v1915
    %3886 = vmatpush1.msra.mxu0 %v1914
    %3887 = vmatprep.subr.mxu0 %v1919
    %3888 = vmatpush1.msra.mxu0 %v1918
    %3889 = vmatprep.subr.mxu0 %v1923
    %3890 = vmatpush1.msra.mxu0 %v1922
    %3891 = vmatprep.subr.mxu0 %v1927
    %3892 = vmatpush1.msra.mxu0 %v1926
    %3893 = vmatprep.subr.mxu0 %v1931
    %3894 = vmatpush1.msra.mxu0 %v1930
    %3895 = vmatprep.subr.mxu0 %v1935
    %3896 = vmatpush1.msra.mxu0 %v1934
    %3897 = vmatprep.subr.mxu0 %v1939
    %3898 = vmatpush1.msra.mxu0 %v1938
    %3899 = vmatprep.subr.mxu0 %v1943
    %3900 = vmatpush1.msra.mxu0 %v1942
    %3901 = vmatprep.subr.mxu0 %v1947
    %3902 = vmatpush1.msra.mxu0 %v1946
    %3903 = vmatprep.subr.mxu0 %v1951
    %3904 = vmatpush1.msra.mxu0 %v1950
    %3905 = vmatprep.subr.mxu0 %v1955
    %3906 = vmatpush1.msra.mxu0 %v1954
    %3907 = vmatprep.subr.mxu0 %v1959
    %3908 = vmatpush1.msra.mxu0 %v1958
    %3909 = vmatprep.subr.mxu0 %v1963
    %3910 = vmatpush1.msra.mxu0 %v1962
    %3911 = vmatprep.subr.mxu0 %v1967
    %3912 = vmatpush1.msra.mxu0 %v1966
    %3913 = vmatprep.subr.mxu0 %v1971
    %3914 = vmatpush1.msra.mxu0 %v1970
    %3915 = vmatprep.subr.mxu0 %v1975
    %3916 = vmatpush1.msra.mxu0 %v1974
    %3917 = vmatprep.subr.mxu0 %v1979
    %3918 = vmatpush1.msra.mxu0 %v1978
    %3919 = vmatprep.subr.mxu0 %v1983
    %3920 = vmatpush1.msra.mxu0 %v1982
    %3921 = vmatprep.subr.mxu0 %v1987
    %3922 = vmatpush1.msra.mxu0 %v1986
    %3923 = vmatprep.subr.mxu0 %v1991
    %3924 = vmatpush1.msra.mxu0 %v1990
    %3925 = vmatprep.subr.mxu0 %v1995
    %3926 = vmatpush1.msra.mxu0 %v1994
    %3927 = vmatprep.subr.mxu0 %v1999
    %3928 = vmatpush1.msra.mxu0 %v1998
    %3929 = vmatprep.subr.mxu0 %v2003
    %3930 = vmatpush1.msra.mxu0 %v2002
    %3931 = vmatprep.mubr.f32.mxu0 %v3714
    %3932 = vmatmul.mubr.f32.gmra.mrb[0].mxu0 %v3713
    %v3933 = vpop.f32.mrb[0].mxu0
    %v3934 = vadd.f32 %v3863, %v3933
    %v3935 = vpop.f32.mrb[0].mxu0
    %v3936 = vadd.f32 %v3865, %v3935
    %3937 = vdwg.mxu0
    %3938 = vmatprep.subr.mxu0 %v2007
    %3939 = vmatpush1.msra.mxu0 %v2006
    %3940 = vmatprep.subr.mxu0 %v2011
    %3941 = vmatpush1.msra.mxu0 %v2010
    %3942 = vmatprep.subr.mxu0 %v2015
    %3943 = vmatpush1.msra.mxu0 %v2014
    %3944 = vmatprep.subr.mxu0 %v2019
    %3945 = vmatpush1.msra.mxu0 %v2018
    %3946 = vmatprep.subr.mxu0 %v2023
    %3947 = vmatpush1.msra.mxu0 %v2022
    %3948 = vmatprep.subr.mxu0 %v2027
    %3949 = vmatpush1.msra.mxu0 %v2026
    %3950 = vmatprep.subr.mxu0 %v2031
    %3951 = vmatpush1.msra.mxu0 %v2030
    %3952 = vmatprep.subr.mxu0 %v2035
    %3953 = vmatpush1.msra.mxu0 %v2034
    %3954 = vmatprep.subr.mxu0 %v2039
    %3955 = vmatpush1.msra.mxu0 %v2038
    %3956 = vmatprep.subr.mxu0 %v2043
    %3957 = vmatpush1.msra.mxu0 %v2042
    %3958 = vmatprep.subr.mxu0 %v2047
    %3959 = vmatpush1.msra.mxu0 %v2046
    %3960 = vmatprep.subr.mxu0 %v2051
    %3961 = vmatpush1.msra.mxu0 %v2050
    %3962 = vmatprep.subr.mxu0 %v2055
    %3963 = vmatpush1.msra.mxu0 %v2054
    %3964 = vmatprep.subr.mxu0 %v2059
    %3965 = vmatpush1.msra.mxu0 %v2058
    %3966 = vmatprep.subr.mxu0 %v2063
    %3967 = vmatpush1.msra.mxu0 %v2062
    %3968 = vmatprep.subr.mxu0 %v2067
    %3969 = vmatpush1.msra.mxu0 %v2066
    %3970 = vmatprep.subr.mxu0 %v2071
    %3971 = vmatpush1.msra.mxu0 %v2070
    %3972 = vmatprep.subr.mxu0 %v2075
    %3973 = vmatpush1.msra.mxu0 %v2074
    %3974 = vmatprep.subr.mxu0 %v2079
    %3975 = vmatpush1.msra.mxu0 %v2078
    %3976 = vmatprep.subr.mxu0 %v2083
    %3977 = vmatpush1.msra.mxu0 %v2082
    %3978 = vmatprep.subr.mxu0 %v2087
    %3979 = vmatpush1.msra.mxu0 %v2086
    %3980 = vmatprep.subr.mxu0 %v2091
    %3981 = vmatpush1.msra.mxu0 %v2090
    %3982 = vmatprep.subr.mxu0 %v2095
    %3983 = vmatpush1.msra.mxu0 %v2094
    %3984 = vmatprep.subr.mxu0 %v2099
    %3985 = vmatpush1.msra.mxu0 %v2098
    %3986 = vmatprep.subr.mxu0 %v2103
    %3987 = vmatpush1.msra.mxu0 %v2102
    %3988 = vmatprep.subr.mxu0 %v2107
    %3989 = vmatpush1.msra.mxu0 %v2106
    %3990 = vmatprep.subr.mxu0 %v2111
    %3991 = vmatpush1.msra.mxu0 %v2110
    %3992 = vmatprep.subr.mxu0 %v2115
    %3993 = vmatpush1.msra.mxu0 %v2114
    %3994 = vmatprep.subr.mxu0 %v2119
    %3995 = vmatpush1.msra.mxu0 %v2118
    %3996 = vmatprep.subr.mxu0 %v2123
    %3997 = vmatpush1.msra.mxu0 %v2122
    %3998 = vmatprep.subr.mxu0 %v2127
    %3999 = vmatpush1.msra.mxu0 %v2126
    %4000 = vmatprep.subr.mxu0 %v2131
    %4001 = vmatpush1.msra.mxu0 %v2130
    %4002 = vmatprep.mubr.f32.mxu0 %v3716
    %4003 = vmatmul.mubr.f32.gmra.mrb[0].mxu0 %v3715
    %v4004 = vpop.f32.mrb[0].mxu0
    %v4005 = vadd.f32 %v3934, %v4004
    %v4006 = vpop.f32.mrb[0].mxu0
    %v4007 = vadd.f32 %v3936, %v4006
    %4008 = vdwg.mxu0
    %4009 = vmatprep.subr.mxu0 %v1625
    %4010 = vmatpush1.msra.mxu0 %v1624
    %4011 = vmatprep.subr.mxu0 %v1629
    %4012 = vmatpush1.msra.mxu0 %v1628
    %4013 = vmatprep.subr.mxu0 %v1633
    %4014 = vmatpush1.msra.mxu0 %v1632
    %4015 = vmatprep.subr.mxu0 %v1637
    %4016 = vmatpush1.msra.mxu0 %v1636
    %4017 = vmatprep.subr.mxu0 %v1641
    %4018 = vmatpush1.msra.mxu0 %v1640
    %4019 = vmatprep.subr.mxu0 %v1645
    %4020 = vmatpush1.msra.mxu0 %v1644
    %4021 = vmatprep.subr.mxu0 %v1649
    %4022 = vmatpush1.msra.mxu0 %v1648
    %4023 = vmatprep.subr.mxu0 %v1653
    %4024 = vmatpush1.msra.mxu0 %v1652
    %4025 = vmatprep.subr.mxu0 %v1657
    %4026 = vmatpush1.msra.mxu0 %v1656
    %4027 = vmatprep.subr.mxu0 %v1661
    %4028 = vmatpush1.msra.mxu0 %v1660
    %4029 = vmatprep.subr.mxu0 %v1665
    %4030 = vmatpush1.msra.mxu0 %v1664
    %4031 = vmatprep.subr.mxu0 %v1669
    %4032 = vmatpush1.msra.mxu0 %v1668
    %4033 = vmatprep.subr.mxu0 %v1673
    %4034 = vmatpush1.msra.mxu0 %v1672
    %4035 = vmatprep.subr.mxu0 %v1677
    %4036 = vmatpush1.msra.mxu0 %v1676
    %4037 = vmatprep.subr.mxu0 %v1681
    %4038 = vmatpush1.msra.mxu0 %v1680
    %4039 = vmatprep.subr.mxu0 %v1685
    %4040 = vmatpush1.msra.mxu0 %v1684
    %4041 = vmatprep.subr.mxu0 %v1689
    %4042 = vmatpush1.msra.mxu0 %v1688
    %4043 = vmatprep.subr.mxu0 %v1693
    %4044 = vmatpush1.msra.mxu0 %v1692
    %4045 = vmatprep.subr.mxu0 %v1697
    %4046 = vmatpush1.msra.mxu0 %v1696
    %4047 = vmatprep.subr.mxu0 %v1701
    %4048 = vmatpush1.msra.mxu0 %v1700
    %4049 = vmatprep.subr.mxu0 %v1705
    %4050 = vmatpush1.msra.mxu0 %v1704
    %4051 = vmatprep.subr.mxu0 %v1709
    %4052 = vmatpush1.msra.mxu0 %v1708
    %4053 = vmatprep.subr.mxu0 %v1713
    %4054 = vmatpush1.msra.mxu0 %v1712
    %4055 = vmatprep.subr.mxu0 %v1717
    %4056 = vmatpush1.msra.mxu0 %v1716
    %4057 = vmatprep.subr.mxu0 %v1721
    %4058 = vmatpush1.msra.mxu0 %v1720
    %4059 = vmatprep.subr.mxu0 %v1725
    %4060 = vmatpush1.msra.mxu0 %v1724
    %4061 = vmatprep.subr.mxu0 %v1729
    %4062 = vmatpush1.msra.mxu0 %v1728
    %4063 = vmatprep.subr.mxu0 %v1733
    %4064 = vmatpush1.msra.mxu0 %v1732
    %4065 = vmatprep.subr.mxu0 %v1737
    %4066 = vmatpush1.msra.mxu0 %v1736
    %4067 = vmatprep.subr.mxu0 %v1741
    %4068 = vmatpush1.msra.mxu0 %v1740
    %4069 = vmatprep.subr.mxu0 %v1745
    %4070 = vmatpush1.msra.mxu0 %v1744
    %4071 = vmatprep.subr.mxu0 %v1749
    %4072 = vmatpush1.msra.mxu0 %v1748
    %4073 = vmatprep.mubr.f32.mxu0 %v3710
    %4074 = vmatmul.mubr.f32.gmra.mrb[0].mxu0 %v3709
    %v4075 = vpop.f32.mrb[0].mxu0
    %v4076 = vadd.f32 %v2147, %v4075
    %v4077 = vpop.f32.mrb[0].mxu0
    %v4078 = vadd.f32 %v2151, %v4077
    %4079 = vdwg.mxu0
    %4080 = vmatprep.subr.mxu0 %v1753
    %4081 = vmatpush1.msra.mxu0 %v1752
    %4082 = vmatprep.subr.mxu0 %v1757
    %4083 = vmatpush1.msra.mxu0 %v1756
    %4084 = vmatprep.subr.mxu0 %v1761
    %4085 = vmatpush1.msra.mxu0 %v1760
    %4086 = vmatprep.subr.mxu0 %v1765
    %4087 = vmatpush1.msra.mxu0 %v1764
    %4088 = vmatprep.subr.mxu0 %v1769
    %4089 = vmatpush1.msra.mxu0 %v1768
    %4090 = vmatprep.subr.mxu0 %v1773
    %4091 = vmatpush1.msra.mxu0 %v1772
    %4092 = vmatprep.subr.mxu0 %v1777
    %4093 = vmatpush1.msra.mxu0 %v1776
    %4094 = vmatprep.subr.mxu0 %v1781
    %4095 = vmatpush1.msra.mxu0 %v1780
    %4096 = vmatprep.subr.mxu0 %v1785
    %4097 = vmatpush1.msra.mxu0 %v1784
    %4098 = vmatprep.subr.mxu0 %v1789
    %4099 = vmatpush1.msra.mxu0 %v1788
    %4100 = vmatprep.subr.mxu0 %v1793
    %4101 = vmatpush1.msra.mxu0 %v1792
    %4102 = vmatprep.subr.mxu0 %v1797
    %4103 = vmatpush1.msra.mxu0 %v1796
    %4104 = vmatprep.subr.mxu0 %v1801
    %4105 = vmatpush1.msra.mxu0 %v1800
    %4106 = vmatprep.subr.mxu0 %v1805
    %4107 = vmatpush1.msra.mxu0 %v1804
    %4108 = vmatprep.subr.mxu0 %v1809
    %4109 = vmatpush1.msra.mxu0 %v1808
    %4110 = vmatprep.subr.mxu0 %v1813
    %4111 = vmatpush1.msra.mxu0 %v1812
    %4112 = vmatprep.subr.mxu0 %v1817
    %4113 = vmatpush1.msra.mxu0 %v1816
    %4114 = vmatprep.subr.mxu0 %v1821
    %4115 = vmatpush1.msra.mxu0 %v1820
    %4116 = vmatprep.subr.mxu0 %v1825
    %4117 = vmatpush1.msra.mxu0 %v1824
    %4118 = vmatprep.subr.mxu0 %v1829
    %4119 = vmatpush1.msra.mxu0 %v1828
    %4120 = vmatprep.subr.mxu0 %v1833
    %4121 = vmatpush1.msra.mxu0 %v1832
    %4122 = vmatprep.subr.mxu0 %v1837
    %4123 = vmatpush1.msra.mxu0 %v1836
    %4124 = vmatprep.subr.mxu0 %v1841
    %4125 = vmatpush1.msra.mxu0 %v1840
    %4126 = vmatprep.subr.mxu0 %v1845
    %4127 = vmatpush1.msra.mxu0 %v1844
    %4128 = vmatprep.subr.mxu0 %v1849
    %4129 = vmatpush1.msra.mxu0 %v1848
    %4130 = vmatprep.subr.mxu0 %v1853
    %4131 = vmatpush1.msra.mxu0 %v1852
    %4132 = vmatprep.subr.mxu0 %v1857
    %4133 = vmatpush1.msra.mxu0 %v1856
    %4134 = vmatprep.subr.mxu0 %v1861
    %4135 = vmatpush1.msra.mxu0 %v1860
    %4136 = vmatprep.subr.mxu0 %v1865
    %4137 = vmatpush1.msra.mxu0 %v1864
    %4138 = vmatprep.subr.mxu0 %v1869
    %4139 = vmatpush1.msra.mxu0 %v1868
    %4140 = vmatprep.subr.mxu0 %v1873
    %4141 = vmatpush1.msra.mxu0 %v1872
    %4142 = vmatprep.subr.mxu0 %v1877
    %4143 = vmatpush1.msra.mxu0 %v1876
    %4144 = vmatprep.mubr.f32.mxu0 %v3712
    %4145 = vmatmul.mubr.f32.gmra.mrb[0].mxu0 %v3711
    %v4146 = vpop.f32.mrb[0].mxu0
    %v4147 = vadd.f32 %v4076, %v4146
    %v4148 = vpop.f32.mrb[0].mxu0
    %v4149 = vadd.f32 %v4078, %v4148
    %4150 = vdwg.mxu0
    %4151 = vmatprep.subr.mxu0 %v1881
    %4152 = vmatpush1.msra.mxu0 %v1880
    %4153 = vmatprep.subr.mxu0 %v1885
    %4154 = vmatpush1.msra.mxu0 %v1884
    %4155 = vmatprep.subr.mxu0 %v1889
    %4156 = vmatpush1.msra.mxu0 %v1888
    %4157 = vmatprep.subr.mxu0 %v1893
    %4158 = vmatpush1.msra.mxu0 %v1892
    %4159 = vmatprep.subr.mxu0 %v1897
    %4160 = vmatpush1.msra.mxu0 %v1896
    %4161 = vmatprep.subr.mxu0 %v1901
    %4162 = vmatpush1.msra.mxu0 %v1900
    %4163 = vmatprep.subr.mxu0 %v1905
    %4164 = vmatpush1.msra.mxu0 %v1904
    %4165 = vmatprep.subr.mxu0 %v1909
    %4166 = vmatpush1.msra.mxu0 %v1908
    %4167 = vmatprep.subr.mxu0 %v1913
    %4168 = vmatpush1.msra.mxu0 %v1912
    %4169 = vmatprep.subr.mxu0 %v1917
    %4170 = vmatpush1.msra.mxu0 %v1916
    %4171 = vmatprep.subr.mxu0 %v1921
    %4172 = vmatpush1.msra.mxu0 %v1920
    %4173 = vmatprep.subr.mxu0 %v1925
    %4174 = vmatpush1.msra.mxu0 %v1924
    %4175 = vmatprep.subr.mxu0 %v1929
    %4176 = vmatpush1.msra.mxu0 %v1928
    %4177 = vmatprep.subr.mxu0 %v1933
    %4178 = vmatpush1.msra.mxu0 %v1932
    %4179 = vmatprep.subr.mxu0 %v1937
    %4180 = vmatpush1.msra.mxu0 %v1936
    %4181 = vmatprep.subr.mxu0 %v1941
    %4182 = vmatpush1.msra.mxu0 %v1940
    %4183 = vmatprep.subr.mxu0 %v1945
    %4184 = vmatpush1.msra.mxu0 %v1944
    %4185 = vmatprep.subr.mxu0 %v1949
    %4186 = vmatpush1.msra.mxu0 %v1948
    %4187 = vmatprep.subr.mxu0 %v1953
    %4188 = vmatpush1.msra.mxu0 %v1952
    %4189 = vmatprep.subr.mxu0 %v1957
    %4190 = vmatpush1.msra.mxu0 %v1956
    %4191 = vmatprep.subr.mxu0 %v1961
    %4192 = vmatpush1.msra.mxu0 %v1960
    %4193 = vmatprep.subr.mxu0 %v1965
    %4194 = vmatpush1.msra.mxu0 %v1964
    %4195 = vmatprep.subr.mxu0 %v1969
    %4196 = vmatpush1.msra.mxu0 %v1968
    %4197 = vmatprep.subr.mxu0 %v1973
    %4198 = vmatpush1.msra.mxu0 %v1972
    %4199 = vmatprep.subr.mxu0 %v1977
    %4200 = vmatpush1.msra.mxu0 %v1976
    %4201 = vmatprep.subr.mxu0 %v1981
    %4202 = vmatpush1.msra.mxu0 %v1980
    %4203 = vmatprep.subr.mxu0 %v1985
    %4204 = vmatpush1.msra.mxu0 %v1984
    %4205 = vmatprep.subr.mxu0 %v1989
    %4206 = vmatpush1.msra.mxu0 %v1988
    %4207 = vmatprep.subr.mxu0 %v1993
    %4208 = vmatpush1.msra.mxu0 %v1992
    %4209 = vmatprep.subr.mxu0 %v1997
    %4210 = vmatpush1.msra.mxu0 %v1996
    %4211 = vmatprep.subr.mxu0 %v2001
    %4212 = vmatpush1.msra.mxu0 %v2000
    %4213 = vmatprep.subr.mxu0 %v2005
    %4214 = vmatpush1.msra.mxu0 %v2004
    %4215 = vmatprep.mubr.f32.mxu0 %v3714
    %4216 = vmatmul.mubr.f32.gmra.mrb[0].mxu0 %v3713
    %v4217 = vpop.f32.mrb[0].mxu0
    %v4218 = vadd.f32 %v4147, %v4217
    %v4219 = vpop.f32.mrb[0].mxu0
    %v4220 = vadd.f32 %v4149, %v4219
    %4221 = vdwg.mxu0
    %4222 = vmatprep.subr.mxu0 %v2009
    %4223 = vmatpush1.msra.mxu0 %v2008
    %4224 = vmatprep.subr.mxu0 %v2013
    %4225 = vmatpush1.msra.mxu0 %v2012
    %4226 = vmatprep.subr.mxu0 %v2017
    %4227 = vmatpush1.msra.mxu0 %v2016
    %4228 = vmatprep.subr.mxu0 %v2021
    %4229 = vmatpush1.msra.mxu0 %v2020
    %4230 = vmatprep.subr.mxu0 %v2025
    %4231 = vmatpush1.msra.mxu0 %v2024
    %4232 = vmatprep.subr.mxu0 %v2029
    %4233 = vmatpush1.msra.mxu0 %v2028
    %4234 = vmatprep.subr.mxu0 %v2033
    %4235 = vmatpush1.msra.mxu0 %v2032
    %4236 = vmatprep.subr.mxu0 %v2037
    %4237 = vmatpush1.msra.mxu0 %v2036
    %4238 = vmatprep.subr.mxu0 %v2041
    %4239 = vmatpush1.msra.mxu0 %v2040
    %4240 = vmatprep.subr.mxu0 %v2045
    %4241 = vmatpush1.msra.mxu0 %v2044
    %4242 = vmatprep.subr.mxu0 %v2049
    %4243 = vmatpush1.msra.mxu0 %v2048
    %4244 = vmatprep.subr.mxu0 %v2053
    %4245 = vmatpush1.msra.mxu0 %v2052
    %4246 = vmatprep.subr.mxu0 %v2057
    %4247 = vmatpush1.msra.mxu0 %v2056
    %4248 = vmatprep.subr.mxu0 %v2061
    %4249 = vmatpush1.msra.mxu0 %v2060
    %4250 = vmatprep.subr.mxu0 %v2065
    %4251 = vmatpush1.msra.mxu0 %v2064
    %4252 = vmatprep.subr.mxu0 %v2069
    %4253 = vmatpush1.msra.mxu0 %v2068
    %4254 = vmatprep.subr.mxu0 %v2073
    %4255 = vmatpush1.msra.mxu0 %v2072
    %4256 = vmatprep.subr.mxu0 %v2077
    %4257 = vmatpush1.msra.mxu0 %v2076
    %4258 = vmatprep.subr.mxu0 %v2081
    %4259 = vmatpush1.msra.mxu0 %v2080
    %4260 = vmatprep.subr.mxu0 %v2085
    %4261 = vmatpush1.msra.mxu0 %v2084
    %4262 = vmatprep.subr.mxu0 %v2089
    %4263 = vmatpush1.msra.mxu0 %v2088
    %4264 = vmatprep.subr.mxu0 %v2093
    %4265 = vmatpush1.msra.mxu0 %v2092
    %4266 = vmatprep.subr.mxu0 %v2097
    %4267 = vmatpush1.msra.mxu0 %v2096
    %4268 = vmatprep.subr.mxu0 %v2101
    %4269 = vmatpush1.msra.mxu0 %v2100
    %4270 = vmatprep.subr.mxu0 %v2105
    %4271 = vmatpush1.msra.mxu0 %v2104
    %4272 = vmatprep.subr.mxu0 %v2109
    %4273 = vmatpush1.msra.mxu0 %v2108
    %4274 = vmatprep.subr.mxu0 %v2113
    %4275 = vmatpush1.msra.mxu0 %v2112
    %4276 = vmatprep.subr.mxu0 %v2117
    %4277 = vmatpush1.msra.mxu0 %v2116
    %4278 = vmatprep.subr.mxu0 %v2121
    %4279 = vmatpush1.msra.mxu0 %v2120
    %4280 = vmatprep.subr.mxu0 %v2125
    %4281 = vmatpush1.msra.mxu0 %v2124
    %4282 = vmatprep.subr.mxu0 %v2129
    %4283 = vmatpush1.msra.mxu0 %v2128
    %4284 = vmatprep.subr.mxu0 %v2133
    %4285 = vmatpush1.msra.mxu0 %v2132
    %4286 = vmatprep.mubr.f32.mxu0 %v3716
    %4287 = vmatmul.mubr.f32.gmra.mrb[0].mxu0 %v3715
    %v4288 = vpop.f32.mrb[0].mxu0
    %v4289 = vadd.f32 %v4218, %v4288
    %v4290 = vpop.f32.mrb[0].mxu0
    %v4291 = vadd.f32 %v4220, %v4290
    %4292 = vdwg.mxu0
    %v4293 = vmax.f32 %v4005, 0.0
    %v4294 = vmax.f32 %v4007, 0.0
    %v4295 = vmax.f32 %v4289, 0.0
    %v4296 = vmax.f32 %v4291, 0.0
    %v4297 = vld [vmem:[#allocation8] sm:$0xff]
    %v4298 = vld [vmem:[#allocation8 + $0x8] sm:$0xff]
    %v4299 = vld [vmem:[#allocation8 + $0x10] sm:$0xff]
    %v4300 = vld [vmem:[#allocation8 + $0x18] sm:$0xff]
    %v4301 = vld [vmem:[#allocation8 + $0x20] sm:$0xff]
    %v4302 = vld [vmem:[#allocation8 + $0x28] sm:$0xff]
    %v4303 = vld [vmem:[#allocation8 + $0x30] sm:$0xff]
    %v4304 = vld [vmem:[#allocation8 + $0x38] sm:$0xff]
    %v4305 = vld [vmem:[#allocation8 + $0x40] sm:$0xff]
    %v4306 = vld [vmem:[#allocation8 + $0x48] sm:$0xff]
    %v4307 = vld [vmem:[#allocation8 + $0x50] sm:$0xff]
    %v4308 = vld [vmem:[#allocation8 + $0x58] sm:$0xff]
    %v4309 = vld [vmem:[#allocation8 + $0x60] sm:$0xff]
    %v4310 = vld [vmem:[#allocation8 + $0x68] sm:$0xff]
    %v4311 = vld [vmem:[#allocation8 + $0x70] sm:$0xff]
    %v4312 = vld [vmem:[#allocation8 + $0x78] sm:$0xff]
    %v4313 = vld [vmem:[#allocation8 + $0x80] sm:$0xff]
    %v4314 = vld [vmem:[#allocation8 + $0x88] sm:$0xff]
    %v4315 = vld [vmem:[#allocation8 + $0x90] sm:$0xff]
    %v4316 = vld [vmem:[#allocation8 + $0x98] sm:$0xff]
    %v4317 = vld [vmem:[#allocation8 + $0xa0] sm:$0xff]
    %v4318 = vld [vmem:[#allocation8 + $0xa8] sm:$0xff]
    %v4319 = vld [vmem:[#allocation8 + $0xb0] sm:$0xff]
    %v4320 = vld [vmem:[#allocation8 + $0xb8] sm:$0xff]
    %v4321 = vld [vmem:[#allocation8 + $0xc0] sm:$0xff]
    %v4322 = vld [vmem:[#allocation8 + $0xc8] sm:$0xff]
    %v4323 = vld [vmem:[#allocation8 + $0xd0] sm:$0xff]
    %v4324 = vld [vmem:[#allocation8 + $0xd8] sm:$0xff]
    %v4325 = vld [vmem:[#allocation8 + $0xe0] sm:$0xff]
    %v4326 = vld [vmem:[#allocation8 + $0xe8] sm:$0xff]
    %v4327 = vld [vmem:[#allocation8 + $0xf0] sm:$0xff]
    %v4328 = vld [vmem:[#allocation8 + $0xf8] sm:$0xff]
    %v4329 = vld [vmem:[#allocation8 + $0x100] sm:$0xff]
    %v4330 = vld [vmem:[#allocation8 + $0x108] sm:$0xff]
    %v4331 = vld [vmem:[#allocation8 + $0x110] sm:$0xff]
    %v4332 = vld [vmem:[#allocation8 + $0x118] sm:$0xff]
    %v4333 = vld [vmem:[#allocation8 + $0x120] sm:$0xff]
    %v4334 = vld [vmem:[#allocation8 + $0x128] sm:$0xff]
    %v4335 = vld [vmem:[#allocation8 + $0x130] sm:$0xff]
    %v4336 = vld [vmem:[#allocation8 + $0x138] sm:$0xff]
    %v4337 = vld [vmem:[#allocation8 + $0x140] sm:$0xff]
    %v4338 = vld [vmem:[#allocation8 + $0x148] sm:$0xff]
    %v4339 = vld [vmem:[#allocation8 + $0x150] sm:$0xff]
    %v4340 = vld [vmem:[#allocation8 + $0x158] sm:$0xff]
    %v4341 = vld [vmem:[#allocation8 + $0x160] sm:$0xff]
    %v4342 = vld [vmem:[#allocation8 + $0x168] sm:$0xff]
    %v4343 = vld [vmem:[#allocation8 + $0x170] sm:$0xff]
    %v4344 = vld [vmem:[#allocation8 + $0x178] sm:$0xff]
    %v4345 = vld [vmem:[#allocation8 + $0x180] sm:$0xff]
    %v4346 = vld [vmem:[#allocation8 + $0x188] sm:$0xff]
    %v4347 = vld [vmem:[#allocation8 + $0x190] sm:$0xff]
    %v4348 = vld [vmem:[#allocation8 + $0x198] sm:$0xff]
    %v4349 = vld [vmem:[#allocation8 + $0x1a0] sm:$0xff]
    %v4350 = vld [vmem:[#allocation8 + $0x1a8] sm:$0xff]
    %v4351 = vld [vmem:[#allocation8 + $0x1b0] sm:$0xff]
    %v4352 = vld [vmem:[#allocation8 + $0x1b8] sm:$0xff]
    %v4353 = vld [vmem:[#allocation8 + $0x1c0] sm:$0xff]
    %v4354 = vld [vmem:[#allocation8 + $0x1c8] sm:$0xff]
    %v4355 = vld [vmem:[#allocation8 + $0x1d0] sm:$0xff]
    %v4356 = vld [vmem:[#allocation8 + $0x1d8] sm:$0xff]
    %v4357 = vld [vmem:[#allocation8 + $0x1e0] sm:$0xff]
    %v4358 = vld [vmem:[#allocation8 + $0x1e8] sm:$0xff]
    %v4359 = vld [vmem:[#allocation8 + $0x1f0] sm:$0xff]
    %v4360 = vld [vmem:[#allocation8 + $0x1f8] sm:$0xff]
    %v4361 = vld [vmem:[#allocation10] sm:$0x1]
    %v4363 = vlaneseq
    %v4364 = vshrl.u32 %v4363, 7
    %v4365 = vsub.s32 0, %v4364
    %v4366 = vrot.slane %v4361, %v4365
    %4368 = vmatprep.subr.mxu0 0.0
    %4369 = vmatpush1.msra.mxu0 %v4297
    %4370 = vmatprep.subr.mxu0 0.0
    %4371 = vmatpush1.msra.mxu0 %v4298
    %4372 = vmatprep.subr.mxu0 0.0
    %4373 = vmatpush1.msra.mxu0 %v4299
    %4374 = vmatprep.subr.mxu0 0.0
    %4375 = vmatpush1.msra.mxu0 %v4300
    %4376 = vmatprep.subr.mxu0 0.0
    %4377 = vmatpush1.msra.mxu0 %v4301
    %4378 = vmatprep.subr.mxu0 0.0
    %4379 = vmatpush1.msra.mxu0 %v4302
    %4380 = vmatprep.subr.mxu0 0.0
    %4381 = vmatpush1.msra.mxu0 %v4303
    %4382 = vmatprep.subr.mxu0 0.0
    %4383 = vmatpush1.msra.mxu0 %v4304
    %4384 = vmatprep.subr.mxu0 0.0
    %4385 = vmatpush1.msra.mxu0 %v4305
    %4386 = vmatprep.subr.mxu0 0.0
    %4387 = vmatpush1.msra.mxu0 %v4306
    %4388 = vmatprep.subr.mxu0 0.0
    %4389 = vmatpush1.msra.mxu0 %v4307
    %4390 = vmatprep.subr.mxu0 0.0
    %4391 = vmatpush1.msra.mxu0 %v4308
    %4392 = vmatprep.subr.mxu0 0.0
    %4393 = vmatpush1.msra.mxu0 %v4309
    %4394 = vmatprep.subr.mxu0 0.0
    %4395 = vmatpush1.msra.mxu0 %v4310
    %4396 = vmatprep.subr.mxu0 0.0
    %4397 = vmatpush1.msra.mxu0 %v4311
    %4398 = vmatprep.subr.mxu0 0.0
    %4399 = vmatpush1.msra.mxu0 %v4312
    %4400 = vmatprep.subr.mxu0 0.0
    %4401 = vmatpush1.msra.mxu0 %v4313
    %4402 = vmatprep.subr.mxu0 0.0
    %4403 = vmatpush1.msra.mxu0 %v4314
    %4404 = vmatprep.subr.mxu0 0.0
    %4405 = vmatpush1.msra.mxu0 %v4315
    %4406 = vmatprep.subr.mxu0 0.0
    %4407 = vmatpush1.msra.mxu0 %v4316
    %4408 = vmatprep.subr.mxu0 0.0
    %4409 = vmatpush1.msra.mxu0 %v4317
    %4410 = vmatprep.subr.mxu0 0.0
    %4411 = vmatpush1.msra.mxu0 %v4318
    %4412 = vmatprep.subr.mxu0 0.0
    %4413 = vmatpush1.msra.mxu0 %v4319
    %4414 = vmatprep.subr.mxu0 0.0
    %4415 = vmatpush1.msra.mxu0 %v4320
    %4416 = vmatprep.subr.mxu0 0.0
    %4417 = vmatpush1.msra.mxu0 %v4321
    %4418 = vmatprep.subr.mxu0 0.0
    %4419 = vmatpush1.msra.mxu0 %v4322
    %4420 = vmatprep.subr.mxu0 0.0
    %4421 = vmatpush1.msra.mxu0 %v4323
    %4422 = vmatprep.subr.mxu0 0.0
    %4423 = vmatpush1.msra.mxu0 %v4324
    %4424 = vmatprep.subr.mxu0 0.0
    %4425 = vmatpush1.msra.mxu0 %v4325
    %4426 = vmatprep.subr.mxu0 0.0
    %4427 = vmatpush1.msra.mxu0 %v4326
    %4428 = vmatprep.subr.mxu0 0.0
    %4429 = vmatpush1.msra.mxu0 %v4327
    %4430 = vmatprep.subr.mxu0 0.0
    %4431 = vmatpush1.msra.mxu0 %v4328
    %4432 = vmatprep.mubr.f32.mxu0 %v4294
    %4433 = vmatmul.mubr.f32.gmra.mrb[0].mxu0 %v4293
    %v4434 = vpop.f32.mrb[0].mxu0
    %v4435 = vadd.f32 %v4366, %v4434
    %v4436 = vpop.f32.mrb[0].mxu0
    %4437 = vdwg.mxu0
    %4438 = vmatprep.subr.mxu0 0.0
    %4439 = vmatpush1.msra.mxu0 %v4329
    %4440 = vmatprep.subr.mxu0 0.0
    %4441 = vmatpush1.msra.mxu0 %v4330
    %4442 = vmatprep.subr.mxu0 0.0
    %4443 = vmatpush1.msra.mxu0 %v4331
    %4444 = vmatprep.subr.mxu0 0.0
    %4445 = vmatpush1.msra.mxu0 %v4332
    %4446 = vmatprep.subr.mxu0 0.0
    %4447 = vmatpush1.msra.mxu0 %v4333
    %4448 = vmatprep.subr.mxu0 0.0
    %4449 = vmatpush1.msra.mxu0 %v4334
    %4450 = vmatprep.subr.mxu0 0.0
    %4451 = vmatpush1.msra.mxu0 %v4335
    %4452 = vmatprep.subr.mxu0 0.0
    %4453 = vmatpush1.msra.mxu0 %v4336
    %4454 = vmatprep.subr.mxu0 0.0
    %4455 = vmatpush1.msra.mxu0 %v4337
    %4456 = vmatprep.subr.mxu0 0.0
    %4457 = vmatpush1.msra.mxu0 %v4338
    %4458 = vmatprep.subr.mxu0 0.0
    %4459 = vmatpush1.msra.mxu0 %v4339
    %4460 = vmatprep.subr.mxu0 0.0
    %4461 = vmatpush1.msra.mxu0 %v4340
    %4462 = vmatprep.subr.mxu0 0.0
    %4463 = vmatpush1.msra.mxu0 %v4341
    %4464 = vmatprep.subr.mxu0 0.0
    %4465 = vmatpush1.msra.mxu0 %v4342
    %4466 = vmatprep.subr.mxu0 0.0
    %4467 = vmatpush1.msra.mxu0 %v4343
    %4468 = vmatprep.subr.mxu0 0.0
    %4469 = vmatpush1.msra.mxu0 %v4344
    %4470 = vmatprep.subr.mxu0 0.0
    %4471 = vmatpush1.msra.mxu0 %v4345
    %4472 = vmatprep.subr.mxu0 0.0
    %4473 = vmatpush1.msra.mxu0 %v4346
    %4474 = vmatprep.subr.mxu0 0.0
    %4475 = vmatpush1.msra.mxu0 %v4347
    %4476 = vmatprep.subr.mxu0 0.0
    %4477 = vmatpush1.msra.mxu0 %v4348
    %4478 = vmatprep.subr.mxu0 0.0
    %4479 = vmatpush1.msra.mxu0 %v4349
    %4480 = vmatprep.subr.mxu0 0.0
    %4481 = vmatpush1.msra.mxu0 %v4350
    %4482 = vmatprep.subr.mxu0 0.0
    %4483 = vmatpush1.msra.mxu0 %v4351
    %4484 = vmatprep.subr.mxu0 0.0
    %4485 = vmatpush1.msra.mxu0 %v4352
    %4486 = vmatprep.subr.mxu0 0.0
    %4487 = vmatpush1.msra.mxu0 %v4353
    %4488 = vmatprep.subr.mxu0 0.0
    %4489 = vmatpush1.msra.mxu0 %v4354
    %4490 = vmatprep.subr.mxu0 0.0
    %4491 = vmatpush1.msra.mxu0 %v4355
    %4492 = vmatprep.subr.mxu0 0.0
    %4493 = vmatpush1.msra.mxu0 %v4356
    %4494 = vmatprep.subr.mxu0 0.0
    %4495 = vmatpush1.msra.mxu0 %v4357
    %4496 = vmatprep.subr.mxu0 0.0
    %4497 = vmatpush1.msra.mxu0 %v4358
    %4498 = vmatprep.subr.mxu0 0.0
    %4499 = vmatpush1.msra.mxu0 %v4359
    %4500 = vmatprep.subr.mxu0 0.0
    %4501 = vmatpush1.msra.mxu0 %v4360
    %4502 = vmatprep.mubr.f32.mxu0 %v4296
    %4503 = vmatmul.mubr.f32.gmra.mrb[0].mxu0 %v4295
    %v4504 = vpop.f32.mrb[0].mxu0
    %v4505 = vadd.f32 %v4435, %v4504
    %v4506 = vpop.f32.mrb[0].mxu0
    %4507 = vdwg.mxu0
    %vm4508 = vcmask 1041408
    %v4509 = vsel %vm4508, %v4505, -inf
    %4510 = vmax.xlane.f32.xlu0 %v4509
    %v4511 = vpop.xlane.xlu0 %4510
    %v4512 = vsub.f32 %v4505, %v4511
    %v4513 = vmul.f32 %v4512, 1.442695
    %v4514 = vpow.pop %v4513
    %v4515 = vsel %vm4508, %v4514, 0.0
    %4516 = vadd.xlane.f32.xlu0 %v4515
    %v4517 = vpop.xlane.xlu0 %4516
    %v4518 = vrcp.pop %v4517
    %v4519 = vmul.f32 %v4514, %v4518
    %4520 = vst [vmem:[#allocation11] sm:$0x3] %v4519
    // Predicated region
    $region42: #{tpu_custom_call.1} parent=1 // pred_check
      _
    $region43: #{tpu_custom_call.1} parent=1 // pred_check_branch
      %4522 = sbr.rel (0) target = $region45
    $region44: #{tpu_custom_call.1} parent=1 // pred_region
      %s4524 = ssub.s32 32, 32
      %4525 = vsyncadd [#allocation4], %s4524
      %s4527 = sshll.u32 [#allocation11], 4
      %s4528 = int_to_ptr.vmem [resolvable:$true] %s4527
      %4530 = dma.vmem_to_hbm [thread:$0]  %s4528, 32, %s5, [#allocation4]
    $region45: #{tpu_custom_call.1} parent=1 // pred_fallthru
      _
    // Predicated region
    $region46: #{tpu_custom_call.1} parent=1 // pred_check
      _
    $region47: #{tpu_custom_call.1} parent=1 // pred_check_branch
      %4532 = sbr.rel (0) target = $region49
    $region48: #{tpu_custom_call.1} parent=1 // pred_region
      %4533 = dma.done [#allocation4], 32
    $region49: #{tpu_custom_call.1} parent=1 // pred_fallthru
      _
    %4534 = vsyncpa [#allocation3], 1
    %4535 = vsyncpa [#allocation6], 1
    %4536 = vsyncpa [#allocation9], 1
    %4537 = vsyncpa [#allocation4], 1

</llo_original>
